<compile_context>
chip_gen: v5e
topology: v5e:2x2
jax: 0.10.0
libtpu: 0.0.40
codegen_flags: <defaults>
</compile_context>

<pallas_src>
import functools

import jax
import jax.numpy as jnp
from jax.experimental import pallas as pl
from jax.experimental.pallas import tpu as pltpu


# ---------------------------------------------------------------------------
# Helpers
# ---------------------------------------------------------------------------
def _m_tiling(M):
    """Tile the lane (M) axis so v7x's two TensorCores can split the grid."""
    if M % 256 == 0:
        tm = 256
    elif M % 128 == 0:
        tm = 128
    else:
        tm = M
    return tm, M // tm


def _bn_scale_bias(bn, eps=1e-5):
    gamma, beta, mean, var = bn
    scale = gamma / jnp.sqrt(var + eps)
    bias = beta - mean * scale
    return scale, bias


def _fold_1x1(w_oi, bn):
    """Fold BN scale into a 1x1 conv weight (Cout, Cin); return bf16 W and f32 bias."""
    s, b = _bn_scale_bias(bn)
    return (w_oi * s[:, None]).astype(jnp.bfloat16), b[:, None].astype(jnp.float32)


def _im2col_3x3(xc):
    """xc: (C, N, H, W) -> (9*C, N*H*W); rows ordered tap-major, channel-minor."""
    C, N, H, W = xc.shape
    xp = jnp.pad(xc, ((0, 0), (0, 0), (1, 1), (1, 1)))
    taps = [xp[:, :, dh:dh + H, dw:dw + W].reshape(C, N * H * W)
            for dh in range(3) for dw in range(3)]
    return jnp.concatenate(taps, axis=0)


def _pack_ffc_weights(p):
    """Pack convl2l/convg2l/convl2g (OIHW) into one (Cout_l+Cout_g, 9*Cin) matrix with
    the BN scales folded in, plus the BN-folded SpectralTransform conv2 weight."""
    out_cl, in_cl = p['w_l2l'].shape[:2]
    out_cg, in_cg = p['w_l2g'].shape[0], p['w_g2l'].shape[1]
    sl, bl = _bn_scale_bias(p['bn_l'])
    sg, bg = _bn_scale_bias(p['bn_g'])
    top = jnp.concatenate([p['w_l2l'], p['w_g2l']], axis=1)            # (out_cl, Cin, 3,3)
    bot = jnp.concatenate(
        [p['w_l2g'], jnp.zeros((out_cg, in_cg, 3, 3), p['w_l2g'].dtype)], axis=1)
    w = jnp.concatenate([top * sl[:, None, None, None],
                         bot * sg[:, None, None, None]], axis=0)       # (Cout, Cin, 3,3)
    # Column order = tap*(Cin) + ci, matching _im2col_3x3 row order.
    wp = jnp.transpose(w, (0, 2, 3, 1)).reshape(out_cl + out_cg, 9 * (in_cl + in_cg))
    w2 = p['st']['conv2_w'] * sg[:, None]                              # bn_g folded
    return (wp.astype(jnp.bfloat16), w2.astype(jnp.bfloat16),
            bl[:, None].astype(jnp.float32), bg[:, None].astype(jnp.float32))


# ---------------------------------------------------------------------------
# Pallas kernels
# ---------------------------------------------------------------------------
def _conv1x1_bn_act_kernel(x_ref, w_ref, b_ref, o_ref, *, relu):
    # Single MXU matmul (Cout, Cin) @ (Cin, tm); BN scale pre-folded, bias in epilogue.
    y = jnp.dot(w_ref[...], x_ref[...], preferred_element_type=jnp.float32)
    y = y + b_ref[...]
    if relu:
        y = jnp.maximum(y, 0.0)
    o_ref[...] = y


def _ffc_fused_kernel(*refs, cl, add_residual):
    if add_residual:
        (patches_ref, wp_ref, xs_ref, fu_ref, lfu_ref, w2_ref,
         bl_ref, bg_ref, idl_ref, idg_ref, outl_ref, outg_ref) = refs
    else:
        (patches_ref, wp_ref, xs_ref, fu_ref, lfu_ref, w2_ref,
         bl_ref, bg_ref, outl_ref, outg_ref) = refs
        idl_ref = idg_ref = None
    # One K=9*Cin MXU matmul covers convl2l(x_l)+convg2l(x_g) (rows :cl) and
    # convl2g(x_l) (rows cl:), with BN scales already folded into wp.
    y = jnp.dot(wp_ref[...], patches_ref[...], preferred_element_type=jnp.float32)
    # SpectralTransform conv2, fused: the 3-way branch sum is free VPU work under MXU.
    s = xs_ref[...] + fu_ref[...] + lfu_ref[...]
    st = jnp.dot(w2_ref[...], s.astype(jnp.bfloat16),
                 preferred_element_type=jnp.float32)
    yl = y[:cl, :] + bl_ref[...]
    yg = y[cl:, :] + st + bg_ref[...]
    if add_residual:                       # BasicBlock residual fused into the epilogue
        yl = yl + idl_ref[...]
        yg = yg + idg_ref[...]
    outl_ref[...] = jnp.maximum(yl, 0.0)
    outg_ref[...] = jnp.maximum(yg, 0.0)


# ---------------------------------------------------------------------------
# Kernel wrappers
# ---------------------------------------------------------------------------
def conv1x1_bn_act(x_cm, w, b, relu=True):
    """x_cm: (Cin, M) bf16; w: (Cout, Cin) bf16 (BN folded); b: (Cout, 1) f32."""
    Cin, M = x_cm.shape
    Cout = w.shape[0]
    tm, gm = _m_tiling(M)
    return pl.pallas_call(
        functools.partial(_conv1x1_bn_act_kernel, relu=relu),
        out_shape=jax.ShapeDtypeStruct((Cout, M), jnp.float32),
        grid=(gm,),
        in_specs=[pl.BlockSpec((Cin, tm), lambda i: (0, i)),
                  pl.BlockSpec((Cout, Cin), lambda i: (0, 0)),
                  pl.BlockSpec((Cout, 1), lambda i: (0, 0))],
        out_specs=pl.BlockSpec((Cout, tm), lambda i: (0, i)),
        compiler_params=pltpu.CompilerParams(dimension_semantics=("parallel",)),
    )(x_cm, w, b)


def fourier_unit(x, w_folded, b):
    """FourierUnit: rfft -> cat(re, im) -> 1x1 conv+BN+ReLU (Pallas) -> irfft."""
    C, N, H, W = x.shape
    # TODO(synk): FFT has no Pallas primitive; rfftn/irfftn stay as XLA jnp.fft ops.
    ff = jnp.fft.rfftn(x, s=(H, W), axes=(2, 3), norm='ortho')        # (C,N,H,Wr) c64
    Wr = ff.shape[-1]
    ff = jnp.concatenate([jnp.real(ff), jnp.imag(ff)], axis=0)        # (2C,N,H,Wr)
    y = conv1x1_bn_act(ff.reshape(2 * C, -1).astype(jnp.bfloat16), w_folded, b)
    y = y.reshape(2 * C, N, H, Wr)
    re, im = jnp.split(y, 2, axis=0)
    out = jnp.fft.irfftn(re + 1j * im, s=(H, W), axes=(2, 3), norm='ortho')
    return out.astype(jnp.float32)                                    # (C,N,H,W)


def spectral_branches(x_g, p):
    """SpectralTransform up to (but not including) conv2: returns x, fu(x), tiled lfu."""
    Cg, N, H, W = x_g.shape
    M = N * H * W
    w1, b1 = _fold_1x1(p['conv1_w'], p['conv1_bn'])
    x_s = conv1x1_bn_act(x_g.reshape(Cg, M).astype(jnp.bfloat16), w1, b1)
    c = x_s.shape[0]
    x_s = x_s.reshape(c, N, H, W)

    wf, bf = _fold_1x1(p['fu_w'], p['fu_bn'])
    fu_out = fourier_unit(x_s, wf, bf)

    # Local Fourier unit: split spatially, stack on channels, FU, tile back.
    xl = x_s[:c // 4]
    xl = jnp.concatenate(jnp.split(xl, 2, axis=2), axis=0)            # split along H
    xl = jnp.concatenate(jnp.split(xl, 2, axis=3), axis=0)            # split along W
    wl, bl = _fold_1x1(p['lfu_w'], p['lfu_bn'])
    lfu_out = jnp.tile(fourier_unit(xl, wl, bl), (1, 1, 2, 2))
    return x_s, fu_out, lfu_out


def ffc_bn_act_fused(x_l, x_g, p, res_l=None, res_g=None):
    """One FFC_BN_ACT (+ optional fused residual-add + final ReLU of BasicBlock)."""
    Cl, N, H, W = x_l.shape
    Cg = x_g.shape[0]
    M = N * H * W
    out_cl = p['w_l2l'].shape[0]
    out_cg = p['w_l2g'].shape[0]

    # Spectral branches depend only on x_g; computed first, conv2 fused below.
    x_s, fu_out, lfu_out = spectral_branches(x_g, p['st'])

    # BN folded / packed weights (constants under jit -> folded at compile time).
    wp, w2, bl, bg = _pack_ffc_weights(p)

    # Single (9*Cin, M) bf16 patch tensor feeding one large-K MXU matmul.
    xc = jnp.concatenate([x_l, x_g], axis=0).astype(jnp.bfloat16)
    patches = _im2col_3x3(xc)

    add_res = res_l is not None
    tm, gm = _m_tiling(M)

    def mspec(c):
        return pl.BlockSpec((c, tm), lambda i: (0, i))

    def fspec(a):
        return pl.BlockSpec(a.shape, lambda i: (0, 0))

    args = [patches, wp,
            x_s.reshape(x_s.shape[0], M),
            fu_out.reshape(fu_out.shape[0], M),
            lfu_out.reshape(lfu_out.shape[0], M),
            w2, bl, bg]
    in_specs = [mspec(patches.shape[0]), fspec(wp),
                mspec(x_s.shape[0]), mspec(fu_out.shape[0]), mspec(lfu_out.shape[0]),
                fspec(w2), fspec(bl), fspec(bg)]
    if add_res:
        args += [res_l.reshape(out_cl, M), res_g.reshape(out_cg, M)]
        in_specs += [mspec(out_cl), mspec(out_cg)]

    out_l, out_g = pl.pallas_call(
        functools.partial(_ffc_fused_kernel, cl=out_cl, add_residual=add_res),
        out_shape=(jax.ShapeDtypeStruct((out_cl, M), jnp.float32),
                   jax.ShapeDtypeStruct((out_cg, M), jnp.float32)),
        grid=(gm,),
        in_specs=in_specs,
        out_specs=(mspec(out_cl), mspec(out_cg)),
        compiler_params=pltpu.CompilerParams(dimension_semantics=("parallel",)),
    )(*args)
    return out_l.reshape(out_cl, N, H, W), out_g.reshape(out_cg, N, H, W)


# ---------------------------------------------------------------------------
# BasicBlock forward (downsample=None, stride=1, use_se=False, lfu=True)
# ---------------------------------------------------------------------------
def basic_block_forward(x_l_nchw, x_g_nchw, params):
    # NCHW -> channel-major (C, N, H, W) exactly once at entry (and once at exit).
    x_l = jnp.transpose(x_l_nchw, (1, 0, 2, 3)).astype(jnp.float32)
    x_g = jnp.transpose(x_g_nchw, (1, 0, 2, 3)).astype(jnp.float32)
    id_l, id_g = x_l, x_g                                   # downsample is None
    # conv1: FFC_BN_ACT with ReLU activation.
    x_l, x_g = ffc_bn_act_fused(x_l, x_g, params['conv1'])
    # conv2: FFC_BN_ACT with Identity act; residual add + final ReLU fused in-kernel.
    out_l, out_g = ffc_bn_act_fused(x_l, x_g, params['conv2'], res_l=id_l, res_g=id_g)
    return (jnp.transpose(out_l, (1, 0, 2, 3)),
            jnp.transpose(out_g, (1, 0, 2, 3)))


# ---------------------------------------------------------------------------
# Deterministic parameter init (shapes follow the PyTorch module, OIHW / (Cout, Cin))
# ---------------------------------------------------------------------------
def init_params(key, inplanes=16, planes=16, ratio=0.5):
    in_cg = int(inplanes * ratio)
    in_cl = inplanes - in_cg
    out_cg = int(planes * ratio)
    out_cl = planes - out_cg
    keys = iter(jax.random.split(key, 64))

    def w3(co, ci):
        return 0.1 * jax.random.normal(next(keys), (co, ci, 3, 3), jnp.float32)

    def w1(co, ci):
        return 0.1 * jax.random.normal(next(keys), (co, ci), jnp.float32)

    def bn(c):  # (gamma, beta, running_mean, running_var)
        return (1.0 + 0.1 * jax.random.normal(next(keys), (c,), jnp.float32),
                0.1 * jax.random.normal(next(keys), (c,), jnp.float32),
                0.1 * jax.random.normal(next(keys), (c,), jnp.float32),
                1.0 + 0.1 * jnp.abs(jax.random.normal(next(keys), (c,), jnp.float32)))

    def st(ci, co):  # SpectralTransform(ci, co, stride=1, groups=1, lfu=True)
        c = co // 2
        return dict(conv1_w=w1(c, ci), conv1_bn=bn(c),
                    fu_w=w1(2 * c, 2 * c), fu_bn=bn(2 * c),
                    lfu_w=w1(2 * c, 2 * c), lfu_bn=bn(2 * c),
                    conv2_w=w1(co, c))

    def ffc(icl, icg, ocl, ocg):
        return dict(w_l2l=w3(ocl, icl), w_l2g=w3(ocg, icl),
                    w_g2l=w3(ocl, icg), st=st(icg, ocg),
                    bn_l=bn(ocl), bn_g=bn(ocg))

    return dict(conv1=ffc(in_cl, in_cg, out_cl, out_cg),
                conv2=ffc(out_cl, out_cg, out_cl, out_cg))


if __name__ == "__main__":
    key = jax.random.PRNGKey(0)
    kx, kg, kp = jax.random.split(key, 3)

    N, C, H, W = 2, 16, 16, 16          # inplanes = planes = 16, ratio = 0.5
    C_half = C // 2
    # Input is the (x_l, x_g) tuple expected by the FFC BasicBlock (NCHW halves).
    x_l = jax.random.normal(kx, (N, C_half, H, W), jnp.float32)
    x_g = jax.random.normal(kg, (N, C_half, H, W), jnp.float32)

    params = init_params(kp, inplanes=C, planes=C, ratio=0.5)

    fwd = jax.jit(lambda a, b: basic_block_forward(a, b, params))
    out_l, out_g = fwd(x_l, x_g)
    jax.block_until_ready((out_l, out_g))

    assert out_l.shape == (N, C_half, H, W)
    assert out_g.shape == (N, C_half, H, W)
    assert bool(jnp.all(jnp.isfinite(out_l))) and bool(jnp.all(jnp.isfinite(out_g)))
    print("KERNEL_OK")
</pallas_src>

<mosaic_0001>
module attributes {stable_mosaic.version = 11 : i64} {
  func.func @_conv1x1_bn_act_kernel(%arg0: i32, %arg1: memref<8x256xbf16, #tpu.memory_space<vmem>>, %arg2: memref<4x8xbf16, #tpu.memory_space<vmem>>, %arg3: memref<4x1xf32, #tpu.memory_space<vmem>>, %arg4: memref<4x256xf32, #tpu.memory_space<vmem>>) attributes {dimension_semantics = [#tpu.dimension_semantics<parallel>], iteration_bounds = array<i64: 2>, scalar_prefetch = 0 : i64, scratch_operands = 0 : i64, tpu.core_type = #tpu.core_type<tc>, window_params = [{transform_indices = @transform_0, window_bounds = array<i64: 8, 256>}, {pipeline_mode = #tpu.pipeline_mode<synchronous>, transform_indices = @transform_1, window_bounds = array<i64: 4, 8>}, {pipeline_mode = #tpu.pipeline_mode<synchronous>, transform_indices = @transform_2, window_bounds = array<i64: 4, 1>}, {transform_indices = @transform_3, window_bounds = array<i64: 4, 256>}]} {
    %c0 = arith.constant 0 : index
    %c0_0 = arith.constant 0 : index
    %0 = vector.load %arg2[%c0, %c0_0] : memref<4x8xbf16, #tpu.memory_space<vmem>>, vector<4x8xbf16>
    %c0_1 = arith.constant 0 : index
    %c0_2 = arith.constant 0 : index
    %1 = vector.load %arg1[%c0_1, %c0_2] : memref<8x256xbf16, #tpu.memory_space<vmem>>, vector<8x256xbf16>
    %cst = arith.constant dense<0.000000e+00> : vector<4x256xf32>
    %2 = tpu.matmul %0, %1, %cst {dimension_numbers = #tpu.dot_dimension_numbers<[1], [0], [0], [1], [0, 0, 1, 1], [], []>} : vector<4x8xbf16>, vector<8x256xbf16>, vector<4x256xf32> -> vector<4x256xf32>
    %c0_3 = arith.constant 0 : index
    %c0_4 = arith.constant 0 : index
    %3 = vector.load %arg3[%c0_3, %c0_4] : memref<4x1xf32, #tpu.memory_space<vmem>>, vector<4x1xf32>
    %4 = vector.broadcast %3 : vector<4x1xf32> to vector<4x256xf32>
    %5 = arith.addf %2, %4 : vector<4x256xf32>
    %cst_5 = arith.constant 0.000000e+00 : f32
    %6 = vector.broadcast %cst_5 : f32 to vector<4x256xf32>
    %7 = arith.maximumf %5, %6 : vector<4x256xf32>
    %c0_6 = arith.constant 0 : index
    %c0_7 = arith.constant 0 : index
    %8 = vector.load %arg4[%c0_6, %c0_7] : memref<4x256xf32, #tpu.memory_space<vmem>>, vector<4x256xf32>
    tpu.vector_store %arg4[%c0_6, %c0_7], %7 {strides = array<i32>} : memref<4x256xf32, #tpu.memory_space<vmem>>, vector<4x256xf32>,
    return
  }
  func.func @transform_0(%arg0: i32) -> (i32, i32) {
    %c0_i32 = arith.constant 0 : i32
    %c0_i32_0 = arith.constant 0 : i32
    return %c0_i32, %arg0 : i32, i32
  }
  func.func @transform_1(%arg0: i32) -> (i32, i32) {
    %c0_i32 = arith.constant 0 : i32
    %c0_i32_0 = arith.constant 0 : i32
    %c0_i32_1 = arith.constant 0 : i32
    return %c0_i32, %c0_i32_0 : i32, i32
  }
  func.func @transform_2(%arg0: i32) -> (i32, i32) {
    %c0_i32 = arith.constant 0 : i32
    %c0_i32_0 = arith.constant 0 : i32
    %c0_i32_1 = arith.constant 0 : i32
    return %c0_i32, %c0_i32_0 : i32, i32
  }
  func.func @transform_3(%arg0: i32) -> (i32, i32) {
    %c0_i32 = arith.constant 0 : i32
    %c0_i32_0 = arith.constant 0 : i32
    return %c0_i32, %arg0 : i32, i32
  }
}

module attributes {stable_mosaic.version = 11 : i64} {
  func.func @_conv1x1_bn_act_kernel(%arg0: i32, %arg1: memref<8x80xbf16, #tpu.memory_space<vmem>>, %arg2: memref<8x8xbf16, #tpu.memory_space<vmem>>, %arg3: memref<8x1xf32, #tpu.memory_space<vmem>>, %arg4: memref<8x80xf32, #tpu.memory_space<vmem>>) attributes {dimension_semantics = [#tpu.dimension_semantics<parallel>], iteration_bounds = array<i64: 1>, scalar_prefetch = 0 : i64, scratch_operands = 0 : i64, tpu.core_type = #tpu.core_type<tc>, window_params = [{transform_indices = @transform_0, window_bounds = array<i64: 8, 80>}, {pipeline_mode = #tpu.pipeline_mode<synchronous>, transform_indices = @transform_1, window_bounds = array<i64: 8, 8>}, {pipeline_mode = #tpu.pipeline_mode<synchronous>, transform_indices = @transform_2, window_bounds = array<i64: 8, 1>}, {transform_indices = @transform_3, window_bounds = array<i64: 8, 80>}]} {
    %c0 = arith.constant 0 : index
    %c0_0 = arith.constant 0 : index
    %0 = vector.load %arg2[%c0, %c0_0] : memref<8x8xbf16, #tpu.memory_space<vmem>>, vector<8x8xbf16>
    %c0_1 = arith.constant 0 : index
    %c0_2 = arith.constant 0 : index
    %1 = vector.load %arg1[%c0_1, %c0_2] : memref<8x80xbf16, #tpu.memory_space<vmem>>, vector<8x80xbf16>
    %cst = arith.constant dense<0.000000e+00> : vector<8x80xf32>
    %2 = tpu.matmul %0, %1, %cst {dimension_numbers = #tpu.dot_dimension_numbers<[1], [0], [0], [1], [0, 0, 1, 1], [], []>} : vector<8x8xbf16>, vector<8x80xbf16>, vector<8x80xf32> -> vector<8x80xf32>
    %c0_3 = arith.constant 0 : index
    %c0_4 = arith.constant 0 : index
    %3 = vector.load %arg3[%c0_3, %c0_4] : memref<8x1xf32, #tpu.memory_space<vmem>>, vector<8x1xf32>
    %4 = vector.broadcast %3 : vector<8x1xf32> to vector<8x80xf32>
    %5 = arith.addf %2, %4 : vector<8x80xf32>
    %cst_5 = arith.constant 0.000000e+00 : f32
    %6 = vector.broadcast %cst_5 : f32 to vector<8x80xf32>
    %7 = arith.maximumf %5, %6 : vector<8x80xf32>
    %c0_6 = arith.constant 0 : index
    %c0_7 = arith.constant 0 : index
    %8 = vector.load %arg4[%c0_6, %c0_7] : memref<8x80xf32, #tpu.memory_space<vmem>>, vector<8x80xf32>
    tpu.vector_store %arg4[%c0_6, %c0_7], %7 {strides = array<i32>} : memref<8x80xf32, #tpu.memory_space<vmem>>, vector<8x80xf32>,
    return
  }
  func.func @transform_0(%arg0: i32) -> (i32, i32) {
    %c0_i32 = arith.constant 0 : i32
    %c0_i32_0 = arith.constant 0 : i32
    return %c0_i32, %arg0 : i32, i32
  }
  func.func @transform_1(%arg0: i32) -> (i32, i32) {
    %c0_i32 = arith.constant 0 : i32
    %c0_i32_0 = arith.constant 0 : i32
    %c0_i32_1 = arith.constant 0 : i32
    return %c0_i32, %c0_i32_0 : i32, i32
  }
  func.func @transform_2(%arg0: i32) -> (i32, i32) {
    %c0_i32 = arith.constant 0 : i32
    %c0_i32_0 = arith.constant 0 : i32
    %c0_i32_1 = arith.constant 0 : i32
    return %c0_i32, %c0_i32_0 : i32, i32
  }
  func.func @transform_3(%arg0: i32) -> (i32, i32) {
    %c0_i32 = arith.constant 0 : i32
    %c0_i32_0 = arith.constant 0 : i32
    return %c0_i32, %arg0 : i32, i32
  }
}

module attributes {stable_mosaic.version = 11 : i64} {
  func.func @_conv1x1_bn_act_kernel(%arg0: i32, %arg1: memref<8x288xbf16, #tpu.memory_space<vmem>>, %arg2: memref<8x8xbf16, #tpu.memory_space<vmem>>, %arg3: memref<8x1xf32, #tpu.memory_space<vmem>>, %arg4: memref<8x288xf32, #tpu.memory_space<vmem>>) attributes {dimension_semantics = [#tpu.dimension_semantics<parallel>], iteration_bounds = array<i64: 1>, scalar_prefetch = 0 : i64, scratch_operands = 0 : i64, tpu.core_type = #tpu.core_type<tc>, window_params = [{transform_indices = @transform_0, window_bounds = array<i64: 8, 288>}, {pipeline_mode = #tpu.pipeline_mode<synchronous>, transform_indices = @transform_1, window_bounds = array<i64: 8, 8>}, {pipeline_mode = #tpu.pipeline_mode<synchronous>, transform_indices = @transform_2, window_bounds = array<i64: 8, 1>}, {transform_indices = @transform_3, window_bounds = array<i64: 8, 288>}]} {
    %c0 = arith.constant 0 : index
    %c0_0 = arith.constant 0 : index
    %0 = vector.load %arg2[%c0, %c0_0] : memref<8x8xbf16, #tpu.memory_space<vmem>>, vector<8x8xbf16>
    %c0_1 = arith.constant 0 : index
    %c0_2 = arith.constant 0 : index
    %1 = vector.load %arg1[%c0_1, %c0_2] : memref<8x288xbf16, #tpu.memory_space<vmem>>, vector<8x288xbf16>
    %cst = arith.constant dense<0.000000e+00> : vector<8x288xf32>
    %2 = tpu.matmul %0, %1, %cst {dimension_numbers = #tpu.dot_dimension_numbers<[1], [0], [0], [1], [0, 0, 1, 1], [], []>} : vector<8x8xbf16>, vector<8x288xbf16>, vector<8x288xf32> -> vector<8x288xf32>
    %c0_3 = arith.constant 0 : index
    %c0_4 = arith.constant 0 : index
    %3 = vector.load %arg3[%c0_3, %c0_4] : memref<8x1xf32, #tpu.memory_space<vmem>>, vector<8x1xf32>
    %4 = vector.broadcast %3 : vector<8x1xf32> to vector<8x288xf32>
    %5 = arith.addf %2, %4 : vector<8x288xf32>
    %cst_5 = arith.constant 0.000000e+00 : f32
    %6 = vector.broadcast %cst_5 : f32 to vector<8x288xf32>
    %7 = arith.maximumf %5, %6 : vector<8x288xf32>
    %c0_6 = arith.constant 0 : index
    %c0_7 = arith.constant 0 : index
    %8 = vector.load %arg4[%c0_6, %c0_7] : memref<8x288xf32, #tpu.memory_space<vmem>>, vector<8x288xf32>
    tpu.vector_store %arg4[%c0_6, %c0_7], %7 {strides = array<i32>} : memref<8x288xf32, #tpu.memory_space<vmem>>, vector<8x288xf32>,
    return
  }
  func.func @transform_0(%arg0: i32) -> (i32, i32) {
    %c0_i32 = arith.constant 0 : i32
    %c0_i32_0 = arith.constant 0 : i32
    return %c0_i32, %arg0 : i32, i32
  }
  func.func @transform_1(%arg0: i32) -> (i32, i32) {
    %c0_i32 = arith.constant 0 : i32
    %c0_i32_0 = arith.constant 0 : i32
    %c0_i32_1 = arith.constant 0 : i32
    return %c0_i32, %c0_i32_0 : i32, i32
  }
  func.func @transform_2(%arg0: i32) -> (i32, i32) {
    %c0_i32 = arith.constant 0 : i32
    %c0_i32_0 = arith.constant 0 : i32
    %c0_i32_1 = arith.constant 0 : i32
    return %c0_i32, %c0_i32_0 : i32, i32
  }
  func.func @transform_3(%arg0: i32) -> (i32, i32) {
    %c0_i32 = arith.constant 0 : i32
    %c0_i32_0 = arith.constant 0 : i32
    return %c0_i32, %arg0 : i32, i32
  }
}

module attributes {stable_mosaic.version = 11 : i64} {
  func.func @_ffc_fused_kernel(%arg0: i32, %arg1: memref<144x256xbf16, #tpu.memory_space<vmem>>, %arg2: memref<16x144xbf16, #tpu.memory_space<vmem>>, %arg3: memref<4x256xf32, #tpu.memory_space<vmem>>, %arg4: memref<4x256xf32, #tpu.memory_space<vmem>>, %arg5: memref<4x256xf32, #tpu.memory_space<vmem>>, %arg6: memref<8x4xbf16, #tpu.memory_space<vmem>>, %arg7: memref<8x1xf32, #tpu.memory_space<vmem>>, %arg8: memref<8x1xf32, #tpu.memory_space<vmem>>, %arg9: memref<8x256xf32, #tpu.memory_space<vmem>>, %arg10: memref<8x256xf32, #tpu.memory_space<vmem>>) attributes {dimension_semantics = [#tpu.dimension_semantics<parallel>], iteration_bounds = array<i64: 2>, scalar_prefetch = 0 : i64, scratch_operands = 0 : i64, tpu.core_type = #tpu.core_type<tc>, window_params = [{transform_indices = @transform_0, window_bounds = array<i64: 144, 256>}, {pipeline_mode = #tpu.pipeline_mode<synchronous>, transform_indices = @transform_1, window_bounds = array<i64: 16, 144>}, {transform_indices = @transform_2, window_bounds = array<i64: 4, 256>}, {transform_indices = @transform_3, window_bounds = array<i64: 4, 256>}, {transform_indices = @transform_4, window_bounds = array<i64: 4, 256>}, {pipeline_mode = #tpu.pipeline_mode<synchronous>, transform_indices = @transform_5, window_bounds = array<i64: 8, 4>}, {pipeline_mode = #tpu.pipeline_mode<synchronous>, transform_indices = @transform_6, window_bounds = array<i64: 8, 1>}, {pipeline_mode = #tpu.pipeline_mode<synchronous>, transform_indices = @transform_7, window_bounds = array<i64: 8, 1>}, {transform_indices = @transform_8, window_bounds = array<i64: 8, 256>}, {transform_indices = @transform_9, window_bounds = array<i64: 8, 256>}]} {
    %c0 = arith.constant 0 : index
    %c0_0 = arith.constant 0 : index
    %0 = vector.load %arg2[%c0, %c0_0] : memref<16x144xbf16, #tpu.memory_space<vmem>>, vector<16x144xbf16>
    %c0_1 = arith.constant 0 : index
    %c0_2 = arith.constant 0 : index
    %1 = vector.load %arg1[%c0_1, %c0_2] : memref<144x256xbf16, #tpu.memory_space<vmem>>, vector<144x256xbf16>
    %cst = arith.constant dense<0.000000e+00> : vector<16x256xf32>
    %2 = tpu.matmul %0, %1, %cst {dimension_numbers = #tpu.dot_dimension_numbers<[1], [0], [0], [1], [0, 0, 1, 1], [], []>} : vector<16x144xbf16>, vector<144x256xbf16>, vector<16x256xf32> -> vector<16x256xf32>
    %c0_3 = arith.constant 0 : index
    %c0_4 = arith.constant 0 : index
    %3 = vector.load %arg3[%c0_3, %c0_4] : memref<4x256xf32, #tpu.memory_space<vmem>>, vector<4x256xf32>
    %c0_5 = arith.constant 0 : index
    %c0_6 = arith.constant 0 : index
    %4 = vector.load %arg4[%c0_5, %c0_6] : memref<4x256xf32, #tpu.memory_space<vmem>>, vector<4x256xf32>
    %5 = arith.addf %3, %4 : vector<4x256xf32>
    %c0_7 = arith.constant 0 : index
    %c0_8 = arith.constant 0 : index
    %6 = vector.load %arg5[%c0_7, %c0_8] : memref<4x256xf32, #tpu.memory_space<vmem>>, vector<4x256xf32>
    %7 = arith.addf %5, %6 : vector<4x256xf32>
    %c0_9 = arith.constant 0 : index
    %c0_10 = arith.constant 0 : index
    %8 = vector.load %arg6[%c0_9, %c0_10] : memref<8x4xbf16, #tpu.memory_space<vmem>>, vector<8x4xbf16>
    %9 = arith.truncf %7 : vector<4x256xf32> to vector<4x256xbf16>
    %cst_11 = arith.constant dense<0.000000e+00> : vector<8x256xf32>
    %10 = tpu.matmul %8, %9, %cst_11 {dimension_numbers = #tpu.dot_dimension_numbers<[1], [0], [0], [1], [0, 0, 1, 1], [], []>} : vector<8x4xbf16>, vector<4x256xbf16>, vector<8x256xf32> -> vector<8x256xf32>
    %11 = vector.extract_strided_slice %2 {offsets = [0, 0], sizes = [8, 256], strides = [1, 1]} : vector<16x256xf32> to vector<8x256xf32>
    %c0_12 = arith.constant 0 : index
    %c0_13 = arith.constant 0 : index
    %12 = vector.load %arg7[%c0_12, %c0_13] : memref<8x1xf32, #tpu.memory_space<vmem>>, vector<8x1xf32>
    %13 = vector.broadcast %12 : vector<8x1xf32> to vector<8x256xf32>
    %14 = arith.addf %11, %13 : vector<8x256xf32>
    %15 = vector.extract_strided_slice %2 {offsets = [8, 0], sizes = [8, 256], strides = [1, 1]} : vector<16x256xf32> to vector<8x256xf32>
    %16 = arith.addf %15, %10 : vector<8x256xf32>
    %c0_14 = arith.constant 0 : index
    %c0_15 = arith.constant 0 : index
    %17 = vector.load %arg8[%c0_14, %c0_15] : memref<8x1xf32, #tpu.memory_space<vmem>>, vector<8x1xf32>
    %18 = vector.broadcast %17 : vector<8x1xf32> to vector<8x256xf32>
    %19 = arith.addf %16, %18 : vector<8x256xf32>
    %cst_16 = arith.constant 0.000000e+00 : f32
    %20 = vector.broadcast %cst_16 : f32 to vector<8x256xf32>
    %21 = arith.maximumf %14, %20 : vector<8x256xf32>
    %c0_17 = arith.constant 0 : index
    %c0_18 = arith.constant 0 : index
    %22 = vector.load %arg9[%c0_17, %c0_18] : memref<8x256xf32, #tpu.memory_space<vmem>>, vector<8x256xf32>
    tpu.vector_store %arg9[%c0_17, %c0_18], %21 {strides = array<i32>} : memref<8x256xf32, #tpu.memory_space<vmem>>, vector<8x256xf32>,
    %cst_19 = arith.constant 0.000000e+00 : f32
    %23 = vector.broadcast %cst_19 : f32 to vector<8x256xf32>
    %24 = arith.maximumf %19, %23 : vector<8x256xf32>
    %c0_20 = arith.constant 0 : index
    %c0_21 = arith.constant 0 : index
    %25 = vector.load %arg10[%c0_20, %c0_21] : memref<8x256xf32, #tpu.memory_space<vmem>>, vector<8x256xf32>
    tpu.vector_store %arg10[%c0_20, %c0_21], %24 {strides = array<i32>} : memref<8x256xf32, #tpu.memory_space<vmem>>, vector<8x256xf32>,
    return
  }
  func.func @transform_0(%arg0: i32) -> (i32, i32) {
    %c0_i32 = arith.constant 0 : i32
    %c0_i32_0 = arith.constant 0 : i32
    return %c0_i32, %arg0 : i32, i32
  }
  func.func @transform_1(%arg0: i32) -> (i32, i32) {
    %c0_i32 = arith.constant 0 : i32
    %c0_i32_0 = arith.constant 0 : i32
    %c0_i32_1 = arith.constant 0 : i32
    return %c0_i32, %c0_i32_0 : i32, i32
  }
  func.func @transform_2(%arg0: i32) -> (i32, i32) {
    %c0_i32 = arith.constant 0 : i32
    %c0_i32_0 = arith.constant 0 : i32
    return %c0_i32, %arg0 : i32, i32
  }
  func.func @transform_3(%arg0: i32) -> (i32, i32) {
    %c0_i32 = arith.constant 0 : i32
    %c0_i32_0 = arith.constant 0 : i32
    return %c0_i32, %arg0 : i32, i32
  }
  func.func @transform_4(%arg0: i32) -> (i32, i32) {
    %c0_i32 = arith.constant 0 : i32
    %c0_i32_0 = arith.constant 0 : i32
    return %c0_i32, %arg0 : i32, i32
  }
  func.func @transform_5(%arg0: i32) -> (i32, i32) {
    %c0_i32 = arith.constant 0 : i32
    %c0_i32_0 = arith.constant 0 : i32
    %c0_i32_1 = arith.constant 0 : i32
    return %c0_i32, %c0_i32_0 : i32, i32
  }
  func.func @transform_6(%arg0: i32) -> (i32, i32) {
    %c0_i32 = arith.constant 0 : i32
    %c0_i32_0 = arith.constant 0 : i32
    %c0_i32_1 = arith.constant 0 : i32
    return %c0_i32, %c0_i32_0 : i32, i32
  }
  func.func @transform_7(%arg0: i32) -> (i32, i32) {
    %c0_i32 = arith.constant 0 : i32
    %c0_i32_0 = arith.constant 0 : i32
    %c0_i32_1 = arith.constant 0 : i32
    return %c0_i32, %c0_i32_0 : i32, i32
  }
  func.func @transform_8(%arg0: i32) -> (i32, i32) {
    %c0_i32 = arith.constant 0 : i32
    %c0_i32_0 = arith.constant 0 : i32
    return %c0_i32, %arg0 : i32, i32
  }
  func.func @transform_9(%arg0: i32) -> (i32, i32) {
    %c0_i32 = arith.constant 0 : i32
    %c0_i32_0 = arith.constant 0 : i32
    return %c0_i32, %arg0 : i32, i32
  }
}

module attributes {stable_mosaic.version = 11 : i64} {
  func.func @_ffc_fused_kernel(%arg0: i32, %arg1: memref<144x256xbf16, #tpu.memory_space<vmem>>, %arg2: memref<16x144xbf16, #tpu.memory_space<vmem>>, %arg3: memref<4x256xf32, #tpu.memory_space<vmem>>, %arg4: memref<4x256xf32, #tpu.memory_space<vmem>>, %arg5: memref<4x256xf32, #tpu.memory_space<vmem>>, %arg6: memref<8x4xbf16, #tpu.memory_space<vmem>>, %arg7: memref<8x1xf32, #tpu.memory_space<vmem>>, %arg8: memref<8x1xf32, #tpu.memory_space<vmem>>, %arg9: memref<8x256xf32, #tpu.memory_space<vmem>>, %arg10: memref<8x256xf32, #tpu.memory_space<vmem>>, %arg11: memref<8x256xf32, #tpu.memory_space<vmem>>, %arg12: memref<8x256xf32, #tpu.memory_space<vmem>>) attributes {dimension_semantics = [#tpu.dimension_semantics<parallel>], iteration_bounds = array<i64: 2>, scalar_prefetch = 0 : i64, scratch_operands = 0 : i64, tpu.core_type = #tpu.core_type<tc>, window_params = [{transform_indices = @transform_0, window_bounds = array<i64: 144, 256>}, {pipeline_mode = #tpu.pipeline_mode<synchronous>, transform_indices = @transform_1, window_bounds = array<i64: 16, 144>}, {transform_indices = @transform_2, window_bounds = array<i64: 4, 256>}, {transform_indices = @transform_3, window_bounds = array<i64: 4, 256>}, {transform_indices = @transform_4, window_bounds = array<i64: 4, 256>}, {pipeline_mode = #tpu.pipeline_mode<synchronous>, transform_indices = @transform_5, window_bounds = array<i64: 8, 4>}, {pipeline_mode = #tpu.pipeline_mode<synchronous>, transform_indices = @transform_6, window_bounds = array<i64: 8, 1>}, {pipeline_mode = #tpu.pipeline_mode<synchronous>, transform_indices = @transform_7, window_bounds = array<i64: 8, 1>}, {transform_indices = @transform_8, window_bounds = array<i64: 8, 256>}, {transform_indices = @transform_9, window_bounds = array<i64: 8, 256>}, {transform_indices = @transform_10, window_bounds = array<i64: 8, 256>}, {transform_indices = @transform_11, window_bounds = array<i64: 8, 256>}]} {
    %c0 = arith.constant 0 : index
    %c0_0 = arith.constant 0 : index
    %0 = vector.load %arg2[%c0, %c0_0] : memref<16x144xbf16, #tpu.memory_space<vmem>>, vector<16x144xbf16>
    %c0_1 = arith.constant 0 : index
    %c0_2 = arith.constant 0 : index
    %1 = vector.load %arg1[%c0_1, %c0_2] : memref<144x256xbf16, #tpu.memory_space<vmem>>, vector<144x256xbf16>
    %cst = arith.constant dense<0.000000e+00> : vector<16x256xf32>
    %2 = tpu.matmul %0, %1, %cst {dimension_numbers = #tpu.dot_dimension_numbers<[1], [0], [0], [1], [0, 0, 1, 1], [], []>} : vector<16x144xbf16>, vector<144x256xbf16>, vector<16x256xf32> -> vector<16x256xf32>
    %c0_3 = arith.constant 0 : index
    %c0_4 = arith.constant 0 : index
    %3 = vector.load %arg3[%c0_3, %c0_4] : memref<4x256xf32, #tpu.memory_space<vmem>>, vector<4x256xf32>
    %c0_5 = arith.constant 0 : index
    %c0_6 = arith.constant 0 : index
    %4 = vector.load %arg4[%c0_5, %c0_6] : memref<4x256xf32, #tpu.memory_space<vmem>>, vector<4x256xf32>
    %5 = arith.addf %3, %4 : vector<4x256xf32>
    %c0_7 = arith.constant 0 : index
    %c0_8 = arith.constant 0 : index
    %6 = vector.load %arg5[%c0_7, %c0_8] : memref<4x256xf32, #tpu.memory_space<vmem>>, vector<4x256xf32>
    %7 = arith.addf %5, %6 : vector<4x256xf32>
    %c0_9 = arith.constant 0 : index
    %c0_10 = arith.constant 0 : index
    %8 = vector.load %arg6[%c0_9, %c0_10] : memref<8x4xbf16, #tpu.memory_space<vmem>>, vector<8x4xbf16>
    %9 = arith.truncf %7 : vector<4x256xf32> to vector<4x256xbf16>
    %cst_11 = arith.constant dense<0.000000e+00> : vector<8x256xf32>
    %10 = tpu.matmul %8, %9, %cst_11 {dimension_numbers = #tpu.dot_dimension_numbers<[1], [0], [0], [1], [0, 0, 1, 1], [], []>} : vector<8x4xbf16>, vector<4x256xbf16>, vector<8x256xf32> -> vector<8x256xf32>
    %11 = vector.extract_strided_slice %2 {offsets = [0, 0], sizes = [8, 256], strides = [1, 1]} : vector<16x256xf32> to vector<8x256xf32>
    %c0_12 = arith.constant 0 : index
    %c0_13 = arith.constant 0 : index
    %12 = vector.load %arg7[%c0_12, %c0_13] : memref<8x1xf32, #tpu.memory_space<vmem>>, vector<8x1xf32>
    %13 = vector.broadcast %12 : vector<8x1xf32> to vector<8x256xf32>
    %14 = arith.addf %11, %13 : vector<8x256xf32>
    %15 = vector.extract_strided_slice %2 {offsets = [8, 0], sizes = [8, 256], strides = [1, 1]} : vector<16x256xf32> to vector<8x256xf32>
    %16 = arith.addf %15, %10 : vector<8x256xf32>
    %c0_14 = arith.constant 0 : index
    %c0_15 = arith.constant 0 : index
    %17 = vector.load %arg8[%c0_14, %c0_15] : memref<8x1xf32, #tpu.memory_space<vmem>>, vector<8x1xf32>
    %18 = vector.broadcast %17 : vector<8x1xf32> to vector<8x256xf32>
    %19 = arith.addf %16, %18 : vector<8x256xf32>
    %c0_16 = arith.constant 0 : index
    %c0_17 = arith.constant 0 : index
    %20 = vector.load %arg9[%c0_16, %c0_17] : memref<8x256xf32, #tpu.memory_space<vmem>>, vector<8x256xf32>
    %21 = arith.addf %14, %20 : vector<8x256xf32>
    %c0_18 = arith.constant 0 : index
    %c0_19 = arith.constant 0 : index
    %22 = vector.load %arg10[%c0_18, %c0_19] : memref<8x256xf32, #tpu.memory_space<vmem>>, vector<8x256xf32>
    %23 = arith.addf %19, %22 : vector<8x256xf32>
    %cst_20 = arith.constant 0.000000e+00 : f32
    %24 = vector.broadcast %cst_20 : f32 to vector<8x256xf32>
    %25 = arith.maximumf %21, %24 : vector<8x256xf32>
    %c0_21 = arith.constant 0 : index
    %c0_22 = arith.constant 0 : index
    %26 = vector.load %arg11[%c0_21, %c0_22] : memref<8x256xf32, #tpu.memory_space<vmem>>, vector<8x256xf32>
    tpu.vector_store %arg11[%c0_21, %c0_22], %25 {strides = array<i32>} : memref<8x256xf32, #tpu.memory_space<vmem>>, vector<8x256xf32>,
    %cst_23 = arith.constant 0.000000e+00 : f32
    %27 = vector.broadcast %cst_23 : f32 to vector<8x256xf32>
    %28 = arith.maximumf %23, %27 : vector<8x256xf32>
    %c0_24 = arith.constant 0 : index
    %c0_25 = arith.constant 0 : index
    %29 = vector.load %arg12[%c0_24, %c0_25] : memref<8x256xf32, #tpu.memory_space<vmem>>, vector<8x256xf32>
    tpu.vector_store %arg12[%c0_24, %c0_25], %28 {strides = array<i32>} : memref<8x256xf32, #tpu.memory_space<vmem>>, vector<8x256xf32>,
    return
  }
  func.func @transform_0(%arg0: i32) -> (i32, i32) {
    %c0_i32 = arith.constant 0 : i32
    %c0_i32_0 = arith.constant 0 : i32
    return %c0_i32, %arg0 : i32, i32
  }
  func.func @transform_1(%arg0: i32) -> (i32, i32) {
    %c0_i32 = arith.constant 0 : i32
    %c0_i32_0 = arith.constant 0 : i32
    %c0_i32_1 = arith.constant 0 : i32
    return %c0_i32, %c0_i32_0 : i32, i32
  }
  func.func @transform_2(%arg0: i32) -> (i32, i32) {
    %c0_i32 = arith.constant 0 : i32
    %c0_i32_0 = arith.constant 0 : i32
    return %c0_i32, %arg0 : i32, i32
  }
  func.func @transform_3(%arg0: i32) -> (i32, i32) {
    %c0_i32 = arith.constant 0 : i32
    %c0_i32_0 = arith.constant 0 : i32
    return %c0_i32, %arg0 : i32, i32
  }
  func.func @transform_4(%arg0: i32) -> (i32, i32) {
    %c0_i32 = arith.constant 0 : i32
    %c0_i32_0 = arith.constant 0 : i32
    return %c0_i32, %arg0 : i32, i32
  }
  func.func @transform_5(%arg0: i32) -> (i32, i32) {
    %c0_i32 = arith.constant 0 : i32
    %c0_i32_0 = arith.constant 0 : i32
    %c0_i32_1 = arith.constant 0 : i32
    return %c0_i32, %c0_i32_0 : i32, i32
  }
  func.func @transform_6(%arg0: i32) -> (i32, i32) {
    %c0_i32 = arith.constant 0 : i32
    %c0_i32_0 = arith.constant 0 : i32
    %c0_i32_1 = arith.constant 0 : i32
    return %c0_i32, %c0_i32_0 : i32, i32
  }
  func.func @transform_7(%arg0: i32) -> (i32, i32) {
    %c0_i32 = arith.constant 0 : i32
    %c0_i32_0 = arith.constant 0 : i32
    %c0_i32_1 = arith.constant 0 : i32
    return %c0_i32, %c0_i32_0 : i32, i32
  }
  func.func @transform_8(%arg0: i32) -> (i32, i32) {
    %c0_i32 = arith.constant 0 : i32
    %c0_i32_0 = arith.constant 0 : i32
    return %c0_i32, %arg0 : i32, i32
  }
  func.func @transform_9(%arg0: i32) -> (i32, i32) {
    %c0_i32 = arith.constant 0 : i32
    %c0_i32_0 = arith.constant 0 : i32
    return %c0_i32, %arg0 : i32, i32
  }
  func.func @transform_10(%arg0: i32) -> (i32, i32) {
    %c0_i32 = arith.constant 0 : i32
    %c0_i32_0 = arith.constant 0 : i32
    return %c0_i32, %arg0 : i32, i32
  }
  func.func @transform_11(%arg0: i32) -> (i32, i32) {
    %c0_i32 = arith.constant 0 : i32
    %c0_i32_0 = arith.constant 0 : i32
    return %c0_i32, %arg0 : i32, i32
  }
}

</mosaic_0001>

<llo_original>
// kernel: _lambda_.8
$region0: #{_lambda_.8}
  #allocation0 [shape = 'u32[]', space=smem, size = 0x4, offset = 0x4, fixed_abs, tag = 'smem constant byte address 0x4 - core index']
  #allocation1 [shape = 'u32[72,128]{1,0:T(1,128)}', space=vmem, size = 0x9000, scoped, tag = 'internal scratch']
  %s0 = inlined_call_operand.vmem [shape: bf16[8,512], index: 0, kind: input, shape index: {}]
  %s1 = inlined_call_operand.vmem [shape: bf16[4,8], index: 1, kind: input, shape index: {}]
  %s2 = inlined_call_operand.vmem [shape: f32[4,1], index: 2, kind: input, shape index: {}]
  %s3 = inlined_call_operand.vmem [shape: f32[4,512], index: 3, kind: output, shape index: {}]
  %s4 = sld [smem:[#allocation0]]
  $region45: #{_lambda_.8} parent=0
    _
  %s6 = ssub.s32 1, %s4
  %s7 = scalar_select 0, %s6, %s4
  loop: start=0, step=1, limit=4
  $region2: #{_lambda_.8} parent=0 // loop_pre_header
    _
  $region3: #{_lambda_.8} parent=0 // loop_header
    %s9 = sphi 0, %s13
    %p10 = scmp.ge.s32.totalorder %s9, 4
    %s19 = sphi 0, %s21
    %s22 = sphi 0, %s19
    %s23 = sphi 0, %s22
    %s39 = sphi 0, %s23
    %s43 = sphi 0, %s43
    %s45 = sphi 0, %s43
    %s46 = sphi 0, %s45
    %s60 = sphi 0, %s46
    %s64 = sphi 0, %s64
    %s66 = sphi 0, %s64
    %s67 = sphi 0, %s66
    %s81 = sphi 0, %s67
    %s87 = sphi 0, %s89
    %s90 = sphi 0, %s87
    %s91 = sphi 0, %s90
    %s107 = sphi 0, %s91
  $region4: #{_lambda_.8} parent=0 // loop_header_branch
    %12 = sbr.rel (%p10) target = $region8
  $region5: #{_lambda_.8} parent=0 // loop_body
    %s14 = ssub.s32 %s9, 1
    %s15 = ssub.s32 %s9, 2
    %s16 = sadd.s32 %s9, 1
    %s17 = ssub.s32 %s9, %s16
    %p18 = scmp.eq.s32.totalorder %s17, 0
    %s20 = sadd.s32 %s19, 1
    %s21 = scalar_select %p18, %s19, %s20
    %p24 = pneg %p18
    %p25 = scmp.eq.s32.totalorder %s9, 1
    %p26 = por %p24, %p25
    %p27 = scmp.ne.s32.totalorder %s19, %s22
    %p28 = scmp.eq.s32.totalorder %s9, 0
    %p29 = por %p27, %p28
    %p30 = scmp.ne.s32.totalorder %s19, %s22
    %p31 = scmp.eq.s32.totalorder %s14, 1
    %p32 = por %p30, %p31
    %p33 = scmp.ne.s32.totalorder %s22, %s23
    %p34 = scmp.eq.s32.totalorder %s14, 0
    %p35 = por %p33, %p34
    %p36 = scmp.ne.s32.totalorder %s22, %s23
    %p37 = scmp.eq.s32.totalorder %s15, 1
    %p38 = por %p36, %p37
    %p40 = scmp.ne.s32.totalorder %s23, %s39
    %p41 = scmp.eq.s32.totalorder %s15, 0
    %p42 = por %p40, %p41
    %s44 = sadd.s32 %s43, 1
    %p47 = scmp.eq.s32.totalorder %s9, 1
    %p48 = scmp.ne.s32.totalorder %s43, %s45
    %p49 = scmp.eq.s32.totalorder %s9, 0
    %p50 = por %p48, %p49
    %p51 = scmp.ne.s32.totalorder %s43, %s45
    %p52 = scmp.eq.s32.totalorder %s14, 1
    %p53 = por %p51, %p52
    %p54 = scmp.ne.s32.totalorder %s45, %s46
    %p55 = scmp.eq.s32.totalorder %s14, 0
    %p56 = por %p54, %p55
    %p57 = scmp.ne.s32.totalorder %s45, %s46
    %p58 = scmp.eq.s32.totalorder %s15, 1
    %p59 = por %p57, %p58
    %p61 = scmp.ne.s32.totalorder %s46, %s60
    %p62 = scmp.eq.s32.totalorder %s15, 0
    %p63 = por %p61, %p62
    %s65 = sadd.s32 %s64, 1
    %p68 = scmp.eq.s32.totalorder %s9, 1
    %p69 = scmp.ne.s32.totalorder %s64, %s66
    %p70 = scmp.eq.s32.totalorder %s9, 0
    %p71 = por %p69, %p70
    %p72 = scmp.ne.s32.totalorder %s64, %s66
    %p73 = scmp.eq.s32.totalorder %s14, 1
    %p74 = por %p72, %p73
    %p75 = scmp.ne.s32.totalorder %s66, %s67
    %p76 = scmp.eq.s32.totalorder %s14, 0
    %p77 = por %p75, %p76
    %p78 = scmp.ne.s32.totalorder %s66, %s67
    %p79 = scmp.eq.s32.totalorder %s15, 1
    %p80 = por %p78, %p79
    %p82 = scmp.ne.s32.totalorder %s67, %s81
    %p83 = scmp.eq.s32.totalorder %s15, 0
    %p84 = por %p82, %p83
    %s85 = ssub.s32 %s9, %s16
    %p86 = scmp.eq.s32.totalorder %s85, 0
    %s88 = sadd.s32 %s87, 1
    %s89 = scalar_select %p86, %s87, %s88
    %p92 = pneg %p86
    %p93 = scmp.eq.s32.totalorder %s9, 1
    %p94 = por %p92, %p93
    %p95 = scmp.ne.s32.totalorder %s87, %s90
    %p96 = scmp.eq.s32.totalorder %s9, 0
    %p97 = por %p95, %p96
    %p98 = scmp.ne.s32.totalorder %s87, %s90
    %p99 = scmp.eq.s32.totalorder %s14, 1
    %p100 = por %p98, %p99
    %p101 = scmp.ne.s32.totalorder %s90, %s91
    %p102 = scmp.eq.s32.totalorder %s14, 0
    %p103 = por %p101, %p102
    %p104 = scmp.ne.s32.totalorder %s90, %s91
    %p105 = scmp.eq.s32.totalorder %s15, 1
    %p106 = por %p104, %p105
    %p108 = scmp.ne.s32.totalorder %s91, %s107
    %p109 = scmp.eq.s32.totalorder %s15, 0
    %p110 = por %p108, %p109
    %p111 = scmp.le.s32.totalorder 1, %s9
    %p112 = scmp.lt.s32.totalorder %s9, 3
    %p113 = pnand %p111, %p112
    %p114 = pneg %p113
    // Predicated region
    $region9: #{_lambda_.8} parent=5 // pred_check
      _
    $region10: #{_lambda_.8} parent=5 // pred_check_branch
      %116 = sbr.rel (%p113) target = $region12
    $region11: #{_lambda_.8} parent=5 // pred_region
      %s117 = ssub.s32 %s9, 1
      // Predicated region
      $region13: #{_lambda_.8} parent=11 // pred_check
        %p118 = pneg %p56
      $region14: #{_lambda_.8} parent=11 // pred_check_branch
        %120 = sbr.rel (%p118) target = $region16
      $region15: #{_lambda_.8} parent=11 // pred_region
        _
      $region16: #{_lambda_.8} parent=11 // pred_fallthru
        _
      // Predicated region
      $region17: #{_lambda_.8} parent=11 // pred_check
        %p121 = pneg %p77
      $region18: #{_lambda_.8} parent=11 // pred_check_branch
        %123 = sbr.rel (%p121) target = $region20
      $region19: #{_lambda_.8} parent=11 // pred_region
        _
      $region20: #{_lambda_.8} parent=11 // pred_fallthru
        _
    $region12: #{_lambda_.8} parent=5 // pred_fallthru
      _
    %p124 = scmp.lt.s32.totalorder %s9, 2
    // Predicated region
    $region21: #{_lambda_.8} parent=5 // pred_check
      %p125 = pneg %p124
    $region22: #{_lambda_.8} parent=5 // pred_check_branch
      %127 = sbr.rel (%p125) target = $region24
    $region23: #{_lambda_.8} parent=5 // pred_region
      // Predicated region
      $region25: #{_lambda_.8} parent=23 // pred_check
        %p128 = pneg %p29
      $region26: #{_lambda_.8} parent=23 // pred_check_branch
        %130 = sbr.rel (%p128) target = $region28
      $region27: #{_lambda_.8} parent=23 // pred_region
        %s131 = smul.u32 2, %s9
        %p132 = scmp.lt.s32.totalorder %s131, 3
        %s133 = scalar_select %p132, %s131, 3
        %s134 = smul.addr %s133, 4
        %s135 = scalar_lea.vmem %s0, %s134
        %s136 = smul.u32 2, %s9
      $region28: #{_lambda_.8} parent=23 // pred_fallthru
        _
    $region24: #{_lambda_.8} parent=5 // pred_fallthru
      _
    %p137 = scmp.le.s32.totalorder 1, %s9
    %p138 = scmp.lt.s32.totalorder %s9, 3
    %p139 = pnand %p137, %p138
    %p140 = pneg %p139
    // Predicated region
    $region29: #{_lambda_.8} parent=5 // pred_check
      _
    $region30: #{_lambda_.8} parent=5 // pred_check_branch
      %142 = sbr.rel (%p139) target = $region32
    $region31: #{_lambda_.8} parent=5 // pred_region
      %s143 = ssub.s32 %s9, 1
      %s144 = smul.u32 2, %s14
      %p145 = scmp.lt.s32.totalorder %s144, 3
      %s146 = scalar_select %p145, %s144, 3
      %s147 = smul.addr %s146, 4
      %s148 = scalar_lea.vmem %s0, %s147
      %p149 = pneg %p35
      %p150 = pneg %p32
      %p151 = pneg %p56
      %p152 = pneg %p53
      %p153 = pneg %p77
      %p154 = pneg %p74
      %p155 = pneg %p103
      %p156 = pneg %p100
      %s157 = smul.u32 2, %s14
      %p158 = scmp.lt.s32.totalorder %s157, 3
      %s159 = scalar_select %p158, %s157, 3
      %s160 = smul.addr %s159, 4
      %s161 = scalar_lea.vmem %s3, %s160
      %s162 = smul.u32 2, %s14
      %p163 = scmp.lt.s32.totalorder %s162, 3
      %s164 = scalar_select %p163, %s162, 3
      %s165 = smul.addr %s164, 4
      %s166 = scalar_lea.vmem %s0, %s165
      %s167 = smul.u32 2, %s14
      %s168 = smul.u32 2, %s14
      %p169 = scmp.lt.s32.totalorder %s168, 3
      %s170 = scalar_select %p169, %s168, 3
      %s171 = smul.addr %s170, 4
      %s172 = scalar_lea.vmem %s3, %s171
      %s173 = smul.u32 2, %s14
      %v175 = vld [vmem:[%s1] sm:$0x3]
      %v176 = vld [vmem:[%s166] sm:$0xff]
      %v177 = vld [vmem:[%s2] sm:$0xf]
      %179 = vset.pattern.permute.xlu0 0
      %180 = vperm.xlu0 %179, %v177
      %v181 = vpop.permute.xlu0 %180
      %v184 = vunpack.c.l.b16 %v176
      %v185 = vunpack.c.h.b16 %v176
      %v186 = vpack.c.b16 %v184, %v184
      %v187 = vpack.c.b16 %v185, %v185
      %vm188 = vcmask 64512
      %v190 = vsel %vm188, %v175, 0
      %vm192 = vcmask 1043456
      %v194 = vsel %vm192, %v186, 0
      %v197 = vsel %vm192, %v187, 0
      %199 = vmatpush.bf16.msra.mxu0 0
      %200 = vmatpush.bf16.msra.mxu0 0
      %201 = vmatpush.bf16.msra.mxu0 0
      %202 = vmatpush.bf16.msra.mxu0 0
      %203 = vmatpush.bf16.msra.mxu0 0
      %204 = vmatpush.bf16.msra.mxu0 0
      %205 = vmatpush.bf16.msra.mxu0 0
      %206 = vmatpush.bf16.msra.mxu0 %v194
      %207 = vmatmul.bf16.gmra.mxu0 %v190
      %v208 = vpop.f32.mrf.mxu0
      %v209 = vadd.f32 %v181, %v208
      %v210 = vpop.f32.mrf.mxu0
      %211 = vdwg.mxu0
      %212 = vmatpush.bf16.msra.mxu0 0
      %213 = vmatpush.bf16.msra.mxu0 0
      %214 = vmatpush.bf16.msra.mxu0 0
      %215 = vmatpush.bf16.msra.mxu0 0
      %216 = vmatpush.bf16.msra.mxu0 0
      %217 = vmatpush.bf16.msra.mxu0 0
      %218 = vmatpush.bf16.msra.mxu0 0
      %219 = vmatpush.bf16.msra.mxu0 %v197
      %220 = vmatmul.bf16.gmra.mxu0 %v190
      %v221 = vpop.f32.mrf.mxu0
      %v222 = vadd.f32 %v181, %v221
      %v223 = vpop.f32.mrf.mxu0
      %224 = vdwg.mxu0
      %v225 = vmax.f32 %v209, 0.0
      %v226 = vmax.f32 %v222, 0.0
      %v229 = vrot.slane %v226, 4
      %v230 = vsel %vm192, %v225, %v229
      %232 = vst [vmem:[%s172] sm:$0xff] %v230
      %s233 = smul.u32 2, %s14
      %p234 = scmp.lt.s32.totalorder %s233, 3
      %s235 = scalar_select %p234, %s233, 3
      %s236 = smul.addr %s235, 4
      %s237 = scalar_lea.vmem %s3, %s236
      // Predicated region
      $region33: #{_lambda_.8} parent=31 // pred_check
        %p238 = pneg %p100
      $region34: #{_lambda_.8} parent=31 // pred_check_branch
        %240 = sbr.rel (%p238) target = $region36
      $region35: #{_lambda_.8} parent=31 // pred_region
        %s241 = smul.u32 2, %s14
      $region36: #{_lambda_.8} parent=31 // pred_fallthru
        _
    $region32: #{_lambda_.8} parent=5 // pred_fallthru
      _
    %p242 = scmp.le.s32.totalorder 2, %s9
    // Predicated region
    $region37: #{_lambda_.8} parent=5 // pred_check
      %p243 = pneg %p242
    $region38: #{_lambda_.8} parent=5 // pred_check_branch
      %245 = sbr.rel (%p243) target = $region40
    $region39: #{_lambda_.8} parent=5 // pred_region
      %s246 = ssub.s32 %s9, 2
      // Predicated region
      $region41: #{_lambda_.8} parent=39 // pred_check
        %p247 = pneg %p106
      $region42: #{_lambda_.8} parent=39 // pred_check_branch
        %249 = sbr.rel (%p247) target = $region44
      $region43: #{_lambda_.8} parent=39 // pred_region
        %s250 = smul.u32 2, %s15
        %p251 = scmp.lt.s32.totalorder %s250, 3
        %s252 = scalar_select %p251, %s250, 3
        %s253 = smul.addr %s252, 4
        %s254 = scalar_lea.vmem %s3, %s253
      $region44: #{_lambda_.8} parent=39 // pred_fallthru
        _
    $region40: #{_lambda_.8} parent=5 // pred_fallthru
      _
  $region6: #{_lambda_.8} parent=0 // loop_footer
    %s13 = sadd.s32 1, %s9
  $region7: #{_lambda_.8} parent=0 // loop_footer_branch
    %8 = sbr.rel target = $region3
  $region8: #{_lambda_.8} parent=0 // loop_exit
    _

// kernel: split.5
$region0: #{split.5}
  #allocation0 [shape = 'u32[2048]{0}', space=vmem, size = 0x2000, scoped, tag = 'scoped memory for split.5']
  #allocation1 [shape = 'u32[2048]{0}', space=vmem, size = 0x2000, scoped, tag = 'scoped memory for split.5']
  #allocation2 [shape = 'u32[2048]{0}', space=vmem, size = 0x2000, scoped, tag = 'scoped memory for split.5']
  #allocation3 [shape = 'u32[2048]{0}', space=vmem, size = 0x2000, scoped, tag = 'scoped memory for split.5']
  #allocation4 [shape = 'u32[2048]{0}', space=vmem, size = 0x2000, scoped, tag = 'scoped memory for split.5']
  #allocation5 [shape = 's32[1]{0}', space=sflag, size = 0x4, scoped, tag = 'scoped memory for split.5']
  %s0 = inlined_call_operand.vmem [shape: f32[8,2,8,5], index: 0, kind: input, shape index: {}]
  %s1 = inlined_call_operand.vmem [shape: f32[4,2,8,5], index: 1, kind: output, shape index: {}]
  %s2 = scalar_lea.vmem %s0, 64
  %s3 = scalar_lea.vmem %s0, 64
  %s4 = scalar_lea.vmem %s0, 64
  %v5 = vld [vmem:[%s4] sm:$0xff]
  %6 = vst [vmem:[%s1] sm:$0xff] %v5
  %s7 = scalar_lea.vmem %s4, 16
  %v8 = vld [vmem:[%s7] sm:$0xff]
  %s9 = scalar_lea.vmem %s1, 16
  %10 = vst [vmem:[%s9] sm:$0xff] %v8
  %s11 = scalar_lea.vmem %s4, 32
  %v12 = vld [vmem:[%s11] sm:$0xff]
  %s13 = scalar_lea.vmem %s1, 32
  %14 = vst [vmem:[%s13] sm:$0xff] %v12
  %s15 = scalar_lea.vmem %s4, 48
  %v16 = vld [vmem:[%s15] sm:$0xff]
  %s17 = scalar_lea.vmem %s1, 48
  %18 = vst [vmem:[%s17] sm:$0xff] %v16
  %s19 = scalar_lea.vmem %s4, 8
  %v20 = vld [vmem:[%s19] sm:$0xff]
  %s21 = scalar_lea.vmem %s1, 8
  %22 = vst [vmem:[%s21] sm:$0xff] %v20
  %s23 = scalar_lea.vmem %s4, 24
  %v24 = vld [vmem:[%s23] sm:$0xff]
  %s25 = scalar_lea.vmem %s1, 24
  %26 = vst [vmem:[%s25] sm:$0xff] %v24
  %s27 = scalar_lea.vmem %s4, 40
  %v28 = vld [vmem:[%s27] sm:$0xff]
  %s29 = scalar_lea.vmem %s1, 40
  %30 = vst [vmem:[%s29] sm:$0xff] %v28
  %s31 = scalar_lea.vmem %s4, 56
  %v32 = vld [vmem:[%s31] sm:$0xff]
  %s33 = scalar_lea.vmem %s1, 56
  %34 = vst [vmem:[%s33] sm:$0xff] %v32

// kernel: _lambda_.10
$region0: #{_lambda_.10}
  #allocation0 [shape = 'u32[]', space=smem, size = 0x4, offset = 0x4, fixed_abs, tag = 'smem constant byte address 0x4 - core index']
  #allocation1 [shape = 'u32[72,128]{1,0:T(1,128)}', space=vmem, size = 0x9000, scoped, tag = 'internal scratch']
  %s0 = inlined_call_operand.vmem [shape: bf16[8,80], index: 0, kind: input, shape index: {}]
  %s1 = inlined_call_operand.vmem [shape: bf16[8,8], index: 1, kind: input, shape index: {}]
  %s2 = inlined_call_operand.vmem [shape: f32[8,1], index: 2, kind: input, shape index: {}]
  %s3 = inlined_call_operand.vmem [shape: f32[8,80], index: 3, kind: output, shape index: {}]
  %s4 = sld [smem:[#allocation0]]
  $region22: #{_lambda_.10} parent=0
    _
  %s6 = ssub.s32 1, %s4
  %s7 = scalar_select 0, %s6, %s4
  // Predicated region
  $region2: #{_lambda_.10} parent=0 // pred_check
    _
  $region3: #{_lambda_.10} parent=0 // pred_check_branch
    %9 = sbr.rel (0) target = $region5
  $region4: #{_lambda_.10} parent=0 // pred_region
    _
  $region5: #{_lambda_.10} parent=0 // pred_fallthru
    _
  // Predicated region
  $region6: #{_lambda_.10} parent=0 // pred_check
    _
  $region7: #{_lambda_.10} parent=0 // pred_check_branch
    %11 = sbr.rel (0) target = $region9
  $region8: #{_lambda_.10} parent=0 // pred_region
    _
  $region9: #{_lambda_.10} parent=0 // pred_fallthru
    _
  // Predicated region
  $region10: #{_lambda_.10} parent=0 // pred_check
    _
  $region11: #{_lambda_.10} parent=0 // pred_check_branch
    %13 = sbr.rel (0) target = $region13
  $region12: #{_lambda_.10} parent=0 // pred_region
    _
  $region13: #{_lambda_.10} parent=0 // pred_fallthru
    _
  %v15 = vld [vmem:[%s1] sm:$0xf]
  %v16 = vld [vmem:[%s0] sm:$0xf]
  %v17 = vld [vmem:[%s2] sm:$0xff]
  %19 = vset.pattern.permute.xlu0 0
  %20 = vperm.xlu0 %19, %v17
  %v21 = vpop.permute.xlu0 %20
  %vm23 = vcmask 64512
  %v25 = vsel %vm23, %v15, 0
  %vm27 = vcmask 1043456
  %v29 = vsel %vm27, %v16, 0
  %31 = vmatpush.bf16.msra.mxu0 0
  %32 = vmatpush.bf16.msra.mxu0 0
  %33 = vmatpush.bf16.msra.mxu0 0
  %34 = vmatpush.bf16.msra.mxu0 0
  %35 = vmatpush.bf16.msra.mxu0 0
  %36 = vmatpush.bf16.msra.mxu0 0
  %37 = vmatpush.bf16.msra.mxu0 0
  %38 = vmatpush.bf16.msra.mxu0 %v29
  %39 = vmatmul.bf16.gmra.mxu0 %v25
  %v40 = vpop.f32.mrf.mxu0
  %v41 = vadd.f32 %v21, %v40
  %v42 = vpop.f32.mrf.mxu0
  %43 = vdwg.mxu0
  %v44 = vmax.f32 %v41, 0.0
  %vm45 = vcmask 654336
  %46 = vst.msk [vmem:[%s3] sm:$0xff] %vm45, %v44
  // Predicated region
  $region14: #{_lambda_.10} parent=0 // pred_check
    _
  $region15: #{_lambda_.10} parent=0 // pred_check_branch
    %48 = sbr.rel (0) target = $region17
  $region16: #{_lambda_.10} parent=0 // pred_region
    _
  $region17: #{_lambda_.10} parent=0 // pred_fallthru
    _
  // Predicated region
  $region18: #{_lambda_.10} parent=0 // pred_check
    _
  $region19: #{_lambda_.10} parent=0 // pred_check_branch
    %50 = sbr.rel (0) target = $region21
  $region20: #{_lambda_.10} parent=0 // pred_region
    _
  $region21: #{_lambda_.10} parent=0 // pred_fallthru
    _

// kernel: reverse.11
$region0: #{reverse.11}
  %s0 = inlined_call_operand.vmem [shape: f32[4,2,8,3], index: 0, kind: input, shape index: {}]
  %s1 = inlined_call_operand.vmem [shape: f32[4,2,8,3], index: 1, kind: output, shape index: {}]
  $region1: #{reverse.11} parent=0
    #allocation0 [shape = 'u8[65536]{0}', space=vmem, size = 0x10000, scoped, tag = 'operand span for operand 0']
    #allocation1 [shape = 'u8[32768]{0}', space=vmem, size = 0x8000, scoped, tag = 'packed  for operand 0']
    #allocation2 [shape = 'u8[32768]{0}', space=vmem, size = 0x8000, scoped, tag = 'operand span for operand 1']
    #allocation3 [shape = 'u8[16384]{0}', space=vmem, size = 0x4000, scoped, tag = 'packed  for operand 1']
    %s2 = scalar_lea.vmem [#allocation1], 4
    // Predicated region
    $region2: #{reverse.11} parent=1 // pred_check
      _
    $region3: #{reverse.11} parent=1 // pred_check_branch
      %4 = sbr.rel (0) target = $region5
    $region4: #{reverse.11} parent=1 // pred_region
      // Predicated region
      $region6: #{reverse.11} parent=4 // pred_check
        _
      $region7: #{reverse.11} parent=4 // pred_check_branch
        %6 = sbr.rel target = $region9
      $region8: #{reverse.11} parent=4 // pred_region
        // Predicated region
        $region21: #{reverse.11} parent=8 // pred_check
          _
        $region22: #{reverse.11} parent=8 // pred_check_branch
          %36 = sbr.rel (0) target = $region24
        $region23: #{reverse.11} parent=8 // pred_region
          loop: start=0, step=1, limit=1
          $region25: #{reverse.11} parent=23 // loop_pre_header
            _
          $region26: #{reverse.11} parent=23 // loop_header
            %s38 = sphi 0, %s42
            %p39 = scmp.ge.s32.totalorder %s38, 1
            %s43 = sphi %s0, %s0
            %s44 = sphi %s2, %s2
          $region27: #{reverse.11} parent=23 // loop_header_branch
            %41 = sbr.rel (%p39) target = $region31
          $region28: #{reverse.11} parent=23 // loop_body
            _
          $region29: #{reverse.11} parent=23 // loop_footer
            %s42 = sadd.s32 1, %s38
          $region30: #{reverse.11} parent=23 // loop_footer_branch
            %37 = sbr.rel target = $region26
          $region31: #{reverse.11} parent=23 // loop_exit
            _
          %s46 = ssub.s32 16, 1
          loop: start=0, step=1, limit=1
          $region32: #{reverse.11} parent=23 // loop_pre_header
            _
          $region33: #{reverse.11} parent=23 // loop_header
            %s48 = sphi 0, %s52
            %p49 = scmp.ge.s32.totalorder %s48, 1
            %s53 = sphi %s0, %s0
            %s54 = sphi %s2, %s2
          $region34: #{reverse.11} parent=23 // loop_header_branch
            %51 = sbr.rel (%p49) target = $region38
          $region35: #{reverse.11} parent=23 // loop_body
            %v55 = vld [vmem:[%s53] sm:%s46]
            %56 = vst [vmem:[%s54] sm:%s46] %v55
            %v57 = vld [vmem:[%s53 + $0x4] sm:%s46]
            %58 = vst [vmem:[%s54 + $0x8] sm:%s46] %v57
            %v59 = vld [vmem:[%s53 + $0x8] sm:%s46]
            %60 = vst [vmem:[%s54 + $0x10] sm:%s46] %v59
            %v61 = vld [vmem:[%s53 + $0xc] sm:%s46]
            %62 = vst [vmem:[%s54 + $0x18] sm:%s46] %v61
            %v63 = vld [vmem:[%s53 + $0x10] sm:%s46]
            %64 = vst [vmem:[%s54 + $0x20] sm:%s46] %v63
            %v65 = vld [vmem:[%s53 + $0x14] sm:%s46]
            %66 = vst [vmem:[%s54 + $0x28] sm:%s46] %v65
            %v67 = vld [vmem:[%s53 + $0x18] sm:%s46]
            %68 = vst [vmem:[%s54 + $0x30] sm:%s46] %v67
            %v69 = vld [vmem:[%s53 + $0x1c] sm:%s46]
            %70 = vst [vmem:[%s54 + $0x38] sm:%s46] %v69
          $region36: #{reverse.11} parent=23 // loop_footer
            %s52 = sadd.s32 1, %s48
          $region37: #{reverse.11} parent=23 // loop_footer_branch
            %47 = sbr.rel target = $region33
          $region38: #{reverse.11} parent=23 // loop_exit
            _
        $region24: #{reverse.11} parent=8 // pred_fallthru
          _
      $region9: #{reverse.11} parent=4 // pred_fallthru
        _
      // Predicated region
      $region10: #{reverse.11} parent=4 // pred_check
        _
      $region11: #{reverse.11} parent=4 // pred_check_branch
        %8 = sbr.rel (0) target = $region13
      $region12: #{reverse.11} parent=4 // pred_region
        %s10 = ssub.s32 16, 1
        loop: start=0, step=1, limit=1
        $region14: #{reverse.11} parent=12 // loop_pre_header
          _
        $region15: #{reverse.11} parent=12 // loop_header
          %s12 = sphi 0, %s16
          %p13 = scmp.ge.s32.totalorder %s12, 1
          %s17 = sphi %s0, %s0
          %s18 = sphi %s2, %s2
        $region16: #{reverse.11} parent=12 // loop_header_branch
          %15 = sbr.rel (%p13) target = $region20
        $region17: #{reverse.11} parent=12 // loop_body
          %v19 = vld [vmem:[%s17] sm:%s10]
          %20 = vst [vmem:[%s18] sm:%s10] %v19
          %v21 = vld [vmem:[%s17 + $0x4] sm:%s10]
          %22 = vst [vmem:[%s18 + $0x8] sm:%s10] %v21
          %v23 = vld [vmem:[%s17 + $0x8] sm:%s10]
          %24 = vst [vmem:[%s18 + $0x10] sm:%s10] %v23
          %v25 = vld [vmem:[%s17 + $0xc] sm:%s10]
          %26 = vst [vmem:[%s18 + $0x18] sm:%s10] %v25
          %v27 = vld [vmem:[%s17 + $0x10] sm:%s10]
          %28 = vst [vmem:[%s18 + $0x20] sm:%s10] %v27
          %v29 = vld [vmem:[%s17 + $0x14] sm:%s10]
          %30 = vst [vmem:[%s18 + $0x28] sm:%s10] %v29
          %v31 = vld [vmem:[%s17 + $0x18] sm:%s10]
          %32 = vst [vmem:[%s18 + $0x30] sm:%s10] %v31
          %v33 = vld [vmem:[%s17 + $0x1c] sm:%s10]
          %34 = vst [vmem:[%s18 + $0x38] sm:%s10] %v33
        $region18: #{reverse.11} parent=12 // loop_footer
          %s16 = sadd.s32 1, %s12
        $region19: #{reverse.11} parent=12 // loop_footer_branch
          %11 = sbr.rel target = $region15
        $region20: #{reverse.11} parent=12 // loop_exit
          _
      $region13: #{reverse.11} parent=4 // pred_fallthru
        _
    $region5: #{reverse.11} parent=1 // pred_fallthru
      _
    %71 = vnop
    %s73 = ssub.s32 16, 1
    %s74 = scalar_lea.vmem [#allocation1], 60
    %v75 = vld [vmem:[%s74] sm:%s73]
    %s76 = scalar_lea.vmem [#allocation0], 120
    %77 = vst [vmem:[%s76] sm:%s73] %v75
    %s78 = scalar_lea.vmem [#allocation1], 56
    %v79 = vld [vmem:[%s78] sm:%s73]
    %s80 = scalar_lea.vmem [#allocation0], 112
    %81 = vst [vmem:[%s80] sm:%s73] %v79
    %s82 = scalar_lea.vmem [#allocation1], 52
    %v83 = vld [vmem:[%s82] sm:%s73]
    %s84 = scalar_lea.vmem [#allocation0], 104
    %85 = vst [vmem:[%s84] sm:%s73] %v83
    %s86 = scalar_lea.vmem [#allocation1], 48
    %v87 = vld [vmem:[%s86] sm:%s73]
    %s88 = scalar_lea.vmem [#allocation0], 96
    %89 = vst [vmem:[%s88] sm:%s73] %v87
    %s90 = scalar_lea.vmem [#allocation1], 44
    %v91 = vld [vmem:[%s90] sm:%s73]
    %s92 = scalar_lea.vmem [#allocation0], 88
    %93 = vst [vmem:[%s92] sm:%s73] %v91
    %s94 = scalar_lea.vmem [#allocation1], 40
    %v95 = vld [vmem:[%s94] sm:%s73]
    %s96 = scalar_lea.vmem [#allocation0], 80
    %97 = vst [vmem:[%s96] sm:%s73] %v95
    %s98 = scalar_lea.vmem [#allocation1], 36
    %v99 = vld [vmem:[%s98] sm:%s73]
    %s100 = scalar_lea.vmem [#allocation0], 72
    %101 = vst [vmem:[%s100] sm:%s73] %v99
    %s102 = scalar_lea.vmem [#allocation1], 32
    %v103 = vld [vmem:[%s102] sm:%s73]
    %s104 = scalar_lea.vmem [#allocation0], 64
    %105 = vst [vmem:[%s104] sm:%s73] %v103
    %s106 = scalar_lea.vmem [#allocation1], 28
    %v107 = vld [vmem:[%s106] sm:%s73]
    %s108 = scalar_lea.vmem [#allocation0], 56
    %109 = vst [vmem:[%s108] sm:%s73] %v107
    %s110 = scalar_lea.vmem [#allocation1], 24
    %v111 = vld [vmem:[%s110] sm:%s73]
    %s112 = scalar_lea.vmem [#allocation0], 48
    %113 = vst [vmem:[%s112] sm:%s73] %v111
    %s114 = scalar_lea.vmem [#allocation1], 20
    %v115 = vld [vmem:[%s114] sm:%s73]
    %s116 = scalar_lea.vmem [#allocation0], 40
    %117 = vst [vmem:[%s116] sm:%s73] %v115
    %s118 = scalar_lea.vmem [#allocation1], 16
    %v119 = vld [vmem:[%s118] sm:%s73]
    %s120 = scalar_lea.vmem [#allocation0], 32
    %121 = vst [vmem:[%s120] sm:%s73] %v119
    %s122 = scalar_lea.vmem [#allocation1], 12
    %v123 = vld [vmem:[%s122] sm:%s73]
    %s124 = scalar_lea.vmem [#allocation0], 24
    %125 = vst [vmem:[%s124] sm:%s73] %v123
    %s126 = scalar_lea.vmem [#allocation1], 8
    %v127 = vld [vmem:[%s126] sm:%s73]
    %s128 = scalar_lea.vmem [#allocation0], 16
    %129 = vst [vmem:[%s128] sm:%s73] %v127
    %s130 = scalar_lea.vmem [#allocation1], 4
    %v131 = vld [vmem:[%s130] sm:%s73]
    %s132 = scalar_lea.vmem [#allocation0], 8
    %133 = vst [vmem:[%s132] sm:%s73] %v131
    %v134 = vld [vmem:[#allocation1] sm:%s73]
    %135 = vst [vmem:[#allocation0] sm:%s73] %v134
    %s136 = scalar_lea.vmem [#allocation0], 7
    %v137 = vld [vmem:[%s136] ss:$-1 sm:$0xff]
    %v138 = vrot.slane %v137, 5
    %139 = vst [vmem:[#allocation2] sm:$0xff] %v138
    %s140 = scalar_lea.vmem [#allocation0], 8
    %s141 = scalar_lea.vmem %s140, 7 [#allocation0]
    %v142 = vld [vmem:[%s141] ss:$-1 sm:$0xff]
    %v143 = vrot.slane %v142, 5
    %v144 = vlaneseq
    %v145 = vshrl.u32 %v144, 7
    %vm146 = vcmp.lt.s32.totalorder %v145, 3
    %147 = vst.msk [vmem:[#allocation2] sm:$0xff] %vm146, %v143
    %s148 = scalar_lea.vmem [#allocation2], 8
    %s149 = scalar_lea.vmem [#allocation0], 16
    %s150 = scalar_lea.vmem %s149, 7 [#allocation0]
    %v151 = vld [vmem:[%s150] ss:$-1 sm:$0xff]
    %v152 = vrot.slane %v151, 5
    %153 = vst [vmem:[%s148] sm:$0xff] %v152
    %s154 = scalar_lea.vmem %s149, 8 [#allocation0]
    %s155 = scalar_lea.vmem %s154, 7 [#allocation0]
    %v156 = vld [vmem:[%s155] ss:$-1 sm:$0xff]
    %v157 = vrot.slane %v156, 5
    %v158 = vlaneseq
    %v159 = vshrl.u32 %v158, 7
    %vm160 = vcmp.lt.s32.totalorder %v159, 3
    %161 = vst.msk [vmem:[%s148] sm:$0xff] %vm160, %v157
    %s162 = scalar_lea.vmem [#allocation2], 16
    %s163 = scalar_lea.vmem [#allocation0], 32
    %s164 = scalar_lea.vmem %s163, 7 [#allocation0]
    %v165 = vld [vmem:[%s164] ss:$-1 sm:$0xff]
    %v166 = vrot.slane %v165, 5
    %167 = vst [vmem:[%s162] sm:$0xff] %v166
    %s168 = scalar_lea.vmem %s163, 8 [#allocation0]
    %s169 = scalar_lea.vmem %s168, 7 [#allocation0]
    %v170 = vld [vmem:[%s169] ss:$-1 sm:$0xff]
    %v171 = vrot.slane %v170, 5
    %v172 = vlaneseq
    %v173 = vshrl.u32 %v172, 7
    %vm174 = vcmp.lt.s32.totalorder %v173, 3
    %175 = vst.msk [vmem:[%s162] sm:$0xff] %vm174, %v171
    %s176 = scalar_lea.vmem [#allocation2], 24
    %s177 = scalar_lea.vmem [#allocation0], 48
    %s178 = scalar_lea.vmem %s177, 7 [#allocation0]
    %v179 = vld [vmem:[%s178] ss:$-1 sm:$0xff]
    %v180 = vrot.slane %v179, 5
    %181 = vst [vmem:[%s176] sm:$0xff] %v180
    %s182 = scalar_lea.vmem %s177, 8 [#allocation0]
    %s183 = scalar_lea.vmem %s182, 7 [#allocation0]
    %v184 = vld [vmem:[%s183] ss:$-1 sm:$0xff]
    %v185 = vrot.slane %v184, 5
    %v186 = vlaneseq
    %v187 = vshrl.u32 %v186, 7
    %vm188 = vcmp.lt.s32.totalorder %v187, 3
    %189 = vst.msk [vmem:[%s176] sm:$0xff] %vm188, %v185
    %s190 = scalar_lea.vmem [#allocation2], 32
    %s191 = scalar_lea.vmem [#allocation0], 64
    %s192 = scalar_lea.vmem %s191, 7 [#allocation0]
    %v193 = vld [vmem:[%s192] ss:$-1 sm:$0xff]
    %v194 = vrot.slane %v193, 5
    %195 = vst [vmem:[%s190] sm:$0xff] %v194
    %s196 = scalar_lea.vmem %s191, 8 [#allocation0]
    %s197 = scalar_lea.vmem %s196, 7 [#allocation0]
    %v198 = vld [vmem:[%s197] ss:$-1 sm:$0xff]
    %v199 = vrot.slane %v198, 5
    %v200 = vlaneseq
    %v201 = vshrl.u32 %v200, 7
    %vm202 = vcmp.lt.s32.totalorder %v201, 3
    %203 = vst.msk [vmem:[%s190] sm:$0xff] %vm202, %v199
    %s204 = scalar_lea.vmem [#allocation2], 40
    %s205 = scalar_lea.vmem [#allocation0], 80
    %s206 = scalar_lea.vmem %s205, 7 [#allocation0]
    %v207 = vld [vmem:[%s206] ss:$-1 sm:$0xff]
    %v208 = vrot.slane %v207, 5
    %209 = vst [vmem:[%s204] sm:$0xff] %v208
    %s210 = scalar_lea.vmem %s205, 8 [#allocation0]
    %s211 = scalar_lea.vmem %s210, 7 [#allocation0]
    %v212 = vld [vmem:[%s211] ss:$-1 sm:$0xff]
    %v213 = vrot.slane %v212, 5
    %v214 = vlaneseq
    %v215 = vshrl.u32 %v214, 7
    %vm216 = vcmp.lt.s32.totalorder %v215, 3
    %217 = vst.msk [vmem:[%s204] sm:$0xff] %vm216, %v213
    %s218 = scalar_lea.vmem [#allocation2], 48
    %s219 = scalar_lea.vmem [#allocation0], 96
    %s220 = scalar_lea.vmem %s219, 7 [#allocation0]
    %v221 = vld [vmem:[%s220] ss:$-1 sm:$0xff]
    %v222 = vrot.slane %v221, 5
    %223 = vst [vmem:[%s218] sm:$0xff] %v222
    %s224 = scalar_lea.vmem %s219, 8 [#allocation0]
    %s225 = scalar_lea.vmem %s224, 7 [#allocation0]
    %v226 = vld [vmem:[%s225] ss:$-1 sm:$0xff]
    %v227 = vrot.slane %v226, 5
    %v228 = vlaneseq
    %v229 = vshrl.u32 %v228, 7
    %vm230 = vcmp.lt.s32.totalorder %v229, 3
    %231 = vst.msk [vmem:[%s218] sm:$0xff] %vm230, %v227
    %s232 = scalar_lea.vmem [#allocation2], 56
    %s233 = scalar_lea.vmem [#allocation0], 112
    %s234 = scalar_lea.vmem %s233, 7 [#allocation0]
    %v235 = vld [vmem:[%s234] ss:$-1 sm:$0xff]
    %v236 = vrot.slane %v235, 5
    %237 = vst [vmem:[%s232] sm:$0xff] %v236
    %s238 = scalar_lea.vmem %s233, 8 [#allocation0]
    %s239 = scalar_lea.vmem %s238, 7 [#allocation0]
    %v240 = vld [vmem:[%s239] ss:$-1 sm:$0xff]
    %v241 = vrot.slane %v240, 5
    %v242 = vlaneseq
    %v243 = vshrl.u32 %v242, 7
    %vm244 = vcmp.lt.s32.totalorder %v243, 3
    %245 = vst.msk [vmem:[%s232] sm:$0xff] %vm244, %v241
    %s247 = ssub.s32 16, 1
    %v248 = vld [vmem:[#allocation2] sm:%s247]
    %s250 = ssub.s32 16, 1
    %251 = vst [vmem:[#allocation3] sm:%s250] %v248
    %s252 = scalar_lea.vmem [#allocation2], 8
    %v253 = vld [vmem:[%s252] sm:%s247]
    %s255 = ssub.s32 16, 1
    %s256 = scalar_lea.vmem [#allocation3], 4
    %257 = vst [vmem:[%s256] sm:%s255] %v253
    %s258 = scalar_lea.vmem [#allocation2], 16
    %v259 = vld [vmem:[%s258] sm:%s247]
    %s261 = ssub.s32 16, 1
    %s262 = scalar_lea.vmem [#allocation3], 8
    %263 = vst [vmem:[%s262] sm:%s261] %v259
    %s264 = scalar_lea.vmem [#allocation2], 24
    %v265 = vld [vmem:[%s264] sm:%s247]
    %s267 = ssub.s32 16, 1
    %s268 = scalar_lea.vmem [#allocation3], 12
    %269 = vst [vmem:[%s268] sm:%s267] %v265
    %s270 = scalar_lea.vmem [#allocation2], 32
    %v271 = vld [vmem:[%s270] sm:%s247]
    %s273 = ssub.s32 16, 1
    %s274 = scalar_lea.vmem [#allocation3], 16
    %275 = vst [vmem:[%s274] sm:%s273] %v271
    %s276 = scalar_lea.vmem [#allocation2], 40
    %v277 = vld [vmem:[%s276] sm:%s247]
    %s279 = ssub.s32 16, 1
    %s280 = scalar_lea.vmem [#allocation3], 20
    %281 = vst [vmem:[%s280] sm:%s279] %v277
    %s282 = scalar_lea.vmem [#allocation2], 48
    %v283 = vld [vmem:[%s282] sm:%s247]
    %s285 = ssub.s32 16, 1
    %s286 = scalar_lea.vmem [#allocation3], 24
    %287 = vst [vmem:[%s286] sm:%s285] %v283
    %s288 = scalar_lea.vmem [#allocation2], 56
    %v289 = vld [vmem:[%s288] sm:%s247]
    %s291 = ssub.s32 16, 1
    %s292 = scalar_lea.vmem [#allocation3], 28
    %293 = vst [vmem:[%s292] sm:%s291] %v289
    // Predicated region
    $region39: #{reverse.11} parent=1 // pred_check
      _
    $region40: #{reverse.11} parent=1 // pred_check_branch
      %295 = sbr.rel (0) target = $region42
    $region41: #{reverse.11} parent=1 // pred_region
      // Predicated region
      $region43: #{reverse.11} parent=41 // pred_check
        _
      $region44: #{reverse.11} parent=41 // pred_check_branch
        %297 = sbr.rel target = $region46
      $region45: #{reverse.11} parent=41 // pred_region
        // Predicated region
        $region58: #{reverse.11} parent=45 // pred_check
          _
        $region59: #{reverse.11} parent=45 // pred_check_branch
          %327 = sbr.rel (0) target = $region61
        $region60: #{reverse.11} parent=45 // pred_region
          loop: start=0, step=1, limit=1
          $region62: #{reverse.11} parent=60 // loop_pre_header
            _
          $region63: #{reverse.11} parent=60 // loop_header
            %s329 = sphi 0, %s333
            %p330 = scmp.ge.s32.totalorder %s329, 1
            %s334 = sphi [#allocation3], [#allocation3]
            %s335 = sphi %s1, %s1
          $region64: #{reverse.11} parent=60 // loop_header_branch
            %332 = sbr.rel (%p330) target = $region68
          $region65: #{reverse.11} parent=60 // loop_body
            _
          $region66: #{reverse.11} parent=60 // loop_footer
            %s333 = sadd.s32 1, %s329
          $region67: #{reverse.11} parent=60 // loop_footer_branch
            %328 = sbr.rel target = $region63
          $region68: #{reverse.11} parent=60 // loop_exit
            _
          %s337 = ssub.s32 16, 1
          loop: start=0, step=1, limit=1
          $region69: #{reverse.11} parent=60 // loop_pre_header
            _
          $region70: #{reverse.11} parent=60 // loop_header
            %s339 = sphi 0, %s343
            %p340 = scmp.ge.s32.totalorder %s339, 1
            %s344 = sphi [#allocation3], [#allocation3]
            %s345 = sphi %s1, %s1
          $region71: #{reverse.11} parent=60 // loop_header_branch
            %342 = sbr.rel (%p340) target = $region75
          $region72: #{reverse.11} parent=60 // loop_body
            %v346 = vld [vmem:[%s344] sm:%s337]
            %347 = vst [vmem:[%s345] sm:%s337] %v346
            %v348 = vld [vmem:[%s344 + $0x4] sm:%s337]
            %349 = vst [vmem:[%s345 + $0x4] sm:%s337] %v348
            %v350 = vld [vmem:[%s344 + $0x8] sm:%s337]
            %351 = vst [vmem:[%s345 + $0x8] sm:%s337] %v350
            %v352 = vld [vmem:[%s344 + $0xc] sm:%s337]
            %353 = vst [vmem:[%s345 + $0xc] sm:%s337] %v352
            %v354 = vld [vmem:[%s344 + $0x10] sm:%s337]
            %355 = vst [vmem:[%s345 + $0x10] sm:%s337] %v354
            %v356 = vld [vmem:[%s344 + $0x14] sm:%s337]
            %357 = vst [vmem:[%s345 + $0x14] sm:%s337] %v356
            %v358 = vld [vmem:[%s344 + $0x18] sm:%s337]
            %359 = vst [vmem:[%s345 + $0x18] sm:%s337] %v358
            %v360 = vld [vmem:[%s344 + $0x1c] sm:%s337]
            %361 = vst [vmem:[%s345 + $0x1c] sm:%s337] %v360
          $region73: #{reverse.11} parent=60 // loop_footer
            %s343 = sadd.s32 1, %s339
          $region74: #{reverse.11} parent=60 // loop_footer_branch
            %338 = sbr.rel target = $region70
          $region75: #{reverse.11} parent=60 // loop_exit
            _
        $region61: #{reverse.11} parent=45 // pred_fallthru
          _
      $region46: #{reverse.11} parent=41 // pred_fallthru
        _
      // Predicated region
      $region47: #{reverse.11} parent=41 // pred_check
        _
      $region48: #{reverse.11} parent=41 // pred_check_branch
        %299 = sbr.rel (0) target = $region50
      $region49: #{reverse.11} parent=41 // pred_region
        %s301 = ssub.s32 16, 1
        loop: start=0, step=1, limit=1
        $region51: #{reverse.11} parent=49 // loop_pre_header
          _
        $region52: #{reverse.11} parent=49 // loop_header
          %s303 = sphi 0, %s307
          %p304 = scmp.ge.s32.totalorder %s303, 1
          %s308 = sphi [#allocation3], [#allocation3]
          %s309 = sphi %s1, %s1
        $region53: #{reverse.11} parent=49 // loop_header_branch
          %306 = sbr.rel (%p304) target = $region57
        $region54: #{reverse.11} parent=49 // loop_body
          %v310 = vld [vmem:[%s308] sm:%s301]
          %311 = vst [vmem:[%s309] sm:%s301] %v310
          %v312 = vld [vmem:[%s308 + $0x4] sm:%s301]
          %313 = vst [vmem:[%s309 + $0x4] sm:%s301] %v312
          %v314 = vld [vmem:[%s308 + $0x8] sm:%s301]
          %315 = vst [vmem:[%s309 + $0x8] sm:%s301] %v314
          %v316 = vld [vmem:[%s308 + $0xc] sm:%s301]
          %317 = vst [vmem:[%s309 + $0xc] sm:%s301] %v316
          %v318 = vld [vmem:[%s308 + $0x10] sm:%s301]
          %319 = vst [vmem:[%s309 + $0x10] sm:%s301] %v318
          %v320 = vld [vmem:[%s308 + $0x14] sm:%s301]
          %321 = vst [vmem:[%s309 + $0x14] sm:%s301] %v320
          %v322 = vld [vmem:[%s308 + $0x18] sm:%s301]
          %323 = vst [vmem:[%s309 + $0x18] sm:%s301] %v322
          %v324 = vld [vmem:[%s308 + $0x1c] sm:%s301]
          %325 = vst [vmem:[%s309 + $0x1c] sm:%s301] %v324
        $region55: #{reverse.11} parent=49 // loop_footer
          %s307 = sadd.s32 1, %s303
        $region56: #{reverse.11} parent=49 // loop_footer_branch
          %302 = sbr.rel target = $region52
        $region57: #{reverse.11} parent=49 // loop_exit
          _
      $region50: #{reverse.11} parent=41 // pred_fallthru
        _
    $region42: #{reverse.11} parent=1 // pred_fallthru
      _
    %362 = vnop

// kernel: tile.14
$region0: #{tile.14}
  %s0 = inlined_call_operand.vmem [shape: f32[4,2,2,8,2,8], index: 0, kind: input, shape index: {}]
  %s1 = inlined_call_operand.vmem [shape: f32[4,512], index: 1, kind: output, shape index: {}]
  $region1: #{tile.14} parent=0
    #allocation0 [shape = 'u8[16384]{0}', space=vmem, size = 0x4000, scoped, tag = 'scoped mem for output reshape']
    #allocation1 [shape = 'u8[524288]{0}', space=vmem, size = 0x80000, scoped, tag = 'scoped mem for input reshape']
    %s3 = ssub.s32 4, 1
    %s4 = scalar_lea.vmem %s0, 254
    %v5 = vld [vmem:[%s4] sm:%s3]
    %s6 = scalar_lea.vmem [#allocation1], 1016
    %7 = vst [vmem:[%s6] sm:%s3] %v5
    %s8 = scalar_lea.vmem %s0, 252
    %v9 = vld [vmem:[%s8] sm:%s3]
    %s10 = scalar_lea.vmem [#allocation1], 1008
    %11 = vst [vmem:[%s10] sm:%s3] %v9
    %s12 = scalar_lea.vmem %s0, 250
    %v13 = vld [vmem:[%s12] sm:%s3]
    %s14 = scalar_lea.vmem [#allocation1], 1000
    %15 = vst [vmem:[%s14] sm:%s3] %v13
    %s16 = scalar_lea.vmem %s0, 248
    %v17 = vld [vmem:[%s16] sm:%s3]
    %s18 = scalar_lea.vmem [#allocation1], 992
    %19 = vst [vmem:[%s18] sm:%s3] %v17
    %s20 = scalar_lea.vmem %s0, 246
    %v21 = vld [vmem:[%s20] sm:%s3]
    %s22 = scalar_lea.vmem [#allocation1], 984
    %23 = vst [vmem:[%s22] sm:%s3] %v21
    %s24 = scalar_lea.vmem %s0, 244
    %v25 = vld [vmem:[%s24] sm:%s3]
    %s26 = scalar_lea.vmem [#allocation1], 976
    %27 = vst [vmem:[%s26] sm:%s3] %v25
    %s28 = scalar_lea.vmem %s0, 242
    %v29 = vld [vmem:[%s28] sm:%s3]
    %s30 = scalar_lea.vmem [#allocation1], 968
    %31 = vst [vmem:[%s30] sm:%s3] %v29
    %s32 = scalar_lea.vmem %s0, 240
    %v33 = vld [vmem:[%s32] sm:%s3]
    %s34 = scalar_lea.vmem [#allocation1], 960
    %35 = vst [vmem:[%s34] sm:%s3] %v33
    %s36 = scalar_lea.vmem %s0, 238
    %v37 = vld [vmem:[%s36] sm:%s3]
    %s38 = scalar_lea.vmem [#allocation1], 952
    %39 = vst [vmem:[%s38] sm:%s3] %v37
    %s40 = scalar_lea.vmem %s0, 236
    %v41 = vld [vmem:[%s40] sm:%s3]
    %s42 = scalar_lea.vmem [#allocation1], 944
    %43 = vst [vmem:[%s42] sm:%s3] %v41
    %s44 = scalar_lea.vmem %s0, 234
    %v45 = vld [vmem:[%s44] sm:%s3]
    %s46 = scalar_lea.vmem [#allocation1], 936
    %47 = vst [vmem:[%s46] sm:%s3] %v45
    %s48 = scalar_lea.vmem %s0, 232
    %v49 = vld [vmem:[%s48] sm:%s3]
    %s50 = scalar_lea.vmem [#allocation1], 928
    %51 = vst [vmem:[%s50] sm:%s3] %v49
    %s52 = scalar_lea.vmem %s0, 230
    %v53 = vld [vmem:[%s52] sm:%s3]
    %s54 = scalar_lea.vmem [#allocation1], 920
    %55 = vst [vmem:[%s54] sm:%s3] %v53
    %s56 = scalar_lea.vmem %s0, 228
    %v57 = vld [vmem:[%s56] sm:%s3]
    %s58 = scalar_lea.vmem [#allocation1], 912
    %59 = vst [vmem:[%s58] sm:%s3] %v57
    %s60 = scalar_lea.vmem %s0, 226
    %v61 = vld [vmem:[%s60] sm:%s3]
    %s62 = scalar_lea.vmem [#allocation1], 904
    %63 = vst [vmem:[%s62] sm:%s3] %v61
    %s64 = scalar_lea.vmem %s0, 224
    %v65 = vld [vmem:[%s64] sm:%s3]
    %s66 = scalar_lea.vmem [#allocation1], 896
    %67 = vst [vmem:[%s66] sm:%s3] %v65
    %s68 = scalar_lea.vmem %s0, 222
    %v69 = vld [vmem:[%s68] sm:%s3]
    %s70 = scalar_lea.vmem [#allocation1], 888
    %71 = vst [vmem:[%s70] sm:%s3] %v69
    %s72 = scalar_lea.vmem %s0, 220
    %v73 = vld [vmem:[%s72] sm:%s3]
    %s74 = scalar_lea.vmem [#allocation1], 880
    %75 = vst [vmem:[%s74] sm:%s3] %v73
    %s76 = scalar_lea.vmem %s0, 218
    %v77 = vld [vmem:[%s76] sm:%s3]
    %s78 = scalar_lea.vmem [#allocation1], 872
    %79 = vst [vmem:[%s78] sm:%s3] %v77
    %s80 = scalar_lea.vmem %s0, 216
    %v81 = vld [vmem:[%s80] sm:%s3]
    %s82 = scalar_lea.vmem [#allocation1], 864
    %83 = vst [vmem:[%s82] sm:%s3] %v81
    %s84 = scalar_lea.vmem %s0, 214
    %v85 = vld [vmem:[%s84] sm:%s3]
    %s86 = scalar_lea.vmem [#allocation1], 856
    %87 = vst [vmem:[%s86] sm:%s3] %v85
    %s88 = scalar_lea.vmem %s0, 212
    %v89 = vld [vmem:[%s88] sm:%s3]
    %s90 = scalar_lea.vmem [#allocation1], 848
    %91 = vst [vmem:[%s90] sm:%s3] %v89
    %s92 = scalar_lea.vmem %s0, 210
    %v93 = vld [vmem:[%s92] sm:%s3]
    %s94 = scalar_lea.vmem [#allocation1], 840
    %95 = vst [vmem:[%s94] sm:%s3] %v93
    %s96 = scalar_lea.vmem %s0, 208
    %v97 = vld [vmem:[%s96] sm:%s3]
    %s98 = scalar_lea.vmem [#allocation1], 832
    %99 = vst [vmem:[%s98] sm:%s3] %v97
    %s100 = scalar_lea.vmem %s0, 206
    %v101 = vld [vmem:[%s100] sm:%s3]
    %s102 = scalar_lea.vmem [#allocation1], 824
    %103 = vst [vmem:[%s102] sm:%s3] %v101
    %s104 = scalar_lea.vmem %s0, 204
    %v105 = vld [vmem:[%s104] sm:%s3]
    %s106 = scalar_lea.vmem [#allocation1], 816
    %107 = vst [vmem:[%s106] sm:%s3] %v105
    %s108 = scalar_lea.vmem %s0, 202
    %v109 = vld [vmem:[%s108] sm:%s3]
    %s110 = scalar_lea.vmem [#allocation1], 808
    %111 = vst [vmem:[%s110] sm:%s3] %v109
    %s112 = scalar_lea.vmem %s0, 200
    %v113 = vld [vmem:[%s112] sm:%s3]
    %s114 = scalar_lea.vmem [#allocation1], 800
    %115 = vst [vmem:[%s114] sm:%s3] %v113
    %s116 = scalar_lea.vmem %s0, 198
    %v117 = vld [vmem:[%s116] sm:%s3]
    %s118 = scalar_lea.vmem [#allocation1], 792
    %119 = vst [vmem:[%s118] sm:%s3] %v117
    %s120 = scalar_lea.vmem %s0, 196
    %v121 = vld [vmem:[%s120] sm:%s3]
    %s122 = scalar_lea.vmem [#allocation1], 784
    %123 = vst [vmem:[%s122] sm:%s3] %v121
    %s124 = scalar_lea.vmem %s0, 194
    %v125 = vld [vmem:[%s124] sm:%s3]
    %s126 = scalar_lea.vmem [#allocation1], 776
    %127 = vst [vmem:[%s126] sm:%s3] %v125
    %s128 = scalar_lea.vmem %s0, 192
    %v129 = vld [vmem:[%s128] sm:%s3]
    %s130 = scalar_lea.vmem [#allocation1], 768
    %131 = vst [vmem:[%s130] sm:%s3] %v129
    %s132 = scalar_lea.vmem %s0, 190
    %v133 = vld [vmem:[%s132] sm:%s3]
    %s134 = scalar_lea.vmem [#allocation1], 760
    %135 = vst [vmem:[%s134] sm:%s3] %v133
    %s136 = scalar_lea.vmem %s0, 188
    %v137 = vld [vmem:[%s136] sm:%s3]
    %s138 = scalar_lea.vmem [#allocation1], 752
    %139 = vst [vmem:[%s138] sm:%s3] %v137
    %s140 = scalar_lea.vmem %s0, 186
    %v141 = vld [vmem:[%s140] sm:%s3]
    %s142 = scalar_lea.vmem [#allocation1], 744
    %143 = vst [vmem:[%s142] sm:%s3] %v141
    %s144 = scalar_lea.vmem %s0, 184
    %v145 = vld [vmem:[%s144] sm:%s3]
    %s146 = scalar_lea.vmem [#allocation1], 736
    %147 = vst [vmem:[%s146] sm:%s3] %v145
    %s148 = scalar_lea.vmem %s0, 182
    %v149 = vld [vmem:[%s148] sm:%s3]
    %s150 = scalar_lea.vmem [#allocation1], 728
    %151 = vst [vmem:[%s150] sm:%s3] %v149
    %s152 = scalar_lea.vmem %s0, 180
    %v153 = vld [vmem:[%s152] sm:%s3]
    %s154 = scalar_lea.vmem [#allocation1], 720
    %155 = vst [vmem:[%s154] sm:%s3] %v153
    %s156 = scalar_lea.vmem %s0, 178
    %v157 = vld [vmem:[%s156] sm:%s3]
    %s158 = scalar_lea.vmem [#allocation1], 712
    %159 = vst [vmem:[%s158] sm:%s3] %v157
    %s160 = scalar_lea.vmem %s0, 176
    %v161 = vld [vmem:[%s160] sm:%s3]
    %s162 = scalar_lea.vmem [#allocation1], 704
    %163 = vst [vmem:[%s162] sm:%s3] %v161
    %s164 = scalar_lea.vmem %s0, 174
    %v165 = vld [vmem:[%s164] sm:%s3]
    %s166 = scalar_lea.vmem [#allocation1], 696
    %167 = vst [vmem:[%s166] sm:%s3] %v165
    %s168 = scalar_lea.vmem %s0, 172
    %v169 = vld [vmem:[%s168] sm:%s3]
    %s170 = scalar_lea.vmem [#allocation1], 688
    %171 = vst [vmem:[%s170] sm:%s3] %v169
    %s172 = scalar_lea.vmem %s0, 170
    %v173 = vld [vmem:[%s172] sm:%s3]
    %s174 = scalar_lea.vmem [#allocation1], 680
    %175 = vst [vmem:[%s174] sm:%s3] %v173
    %s176 = scalar_lea.vmem %s0, 168
    %v177 = vld [vmem:[%s176] sm:%s3]
    %s178 = scalar_lea.vmem [#allocation1], 672
    %179 = vst [vmem:[%s178] sm:%s3] %v177
    %s180 = scalar_lea.vmem %s0, 166
    %v181 = vld [vmem:[%s180] sm:%s3]
    %s182 = scalar_lea.vmem [#allocation1], 664
    %183 = vst [vmem:[%s182] sm:%s3] %v181
    %s184 = scalar_lea.vmem %s0, 164
    %v185 = vld [vmem:[%s184] sm:%s3]
    %s186 = scalar_lea.vmem [#allocation1], 656
    %187 = vst [vmem:[%s186] sm:%s3] %v185
    %s188 = scalar_lea.vmem %s0, 162
    %v189 = vld [vmem:[%s188] sm:%s3]
    %s190 = scalar_lea.vmem [#allocation1], 648
    %191 = vst [vmem:[%s190] sm:%s3] %v189
    %s192 = scalar_lea.vmem %s0, 160
    %v193 = vld [vmem:[%s192] sm:%s3]
    %s194 = scalar_lea.vmem [#allocation1], 640
    %195 = vst [vmem:[%s194] sm:%s3] %v193
    %s196 = scalar_lea.vmem %s0, 158
    %v197 = vld [vmem:[%s196] sm:%s3]
    %s198 = scalar_lea.vmem [#allocation1], 632
    %199 = vst [vmem:[%s198] sm:%s3] %v197
    %s200 = scalar_lea.vmem %s0, 156
    %v201 = vld [vmem:[%s200] sm:%s3]
    %s202 = scalar_lea.vmem [#allocation1], 624
    %203 = vst [vmem:[%s202] sm:%s3] %v201
    %s204 = scalar_lea.vmem %s0, 154
    %v205 = vld [vmem:[%s204] sm:%s3]
    %s206 = scalar_lea.vmem [#allocation1], 616
    %207 = vst [vmem:[%s206] sm:%s3] %v205
    %s208 = scalar_lea.vmem %s0, 152
    %v209 = vld [vmem:[%s208] sm:%s3]
    %s210 = scalar_lea.vmem [#allocation1], 608
    %211 = vst [vmem:[%s210] sm:%s3] %v209
    %s212 = scalar_lea.vmem %s0, 150
    %v213 = vld [vmem:[%s212] sm:%s3]
    %s214 = scalar_lea.vmem [#allocation1], 600
    %215 = vst [vmem:[%s214] sm:%s3] %v213
    %s216 = scalar_lea.vmem %s0, 148
    %v217 = vld [vmem:[%s216] sm:%s3]
    %s218 = scalar_lea.vmem [#allocation1], 592
    %219 = vst [vmem:[%s218] sm:%s3] %v217
    %s220 = scalar_lea.vmem %s0, 146
    %v221 = vld [vmem:[%s220] sm:%s3]
    %s222 = scalar_lea.vmem [#allocation1], 584
    %223 = vst [vmem:[%s222] sm:%s3] %v221
    %s224 = scalar_lea.vmem %s0, 144
    %v225 = vld [vmem:[%s224] sm:%s3]
    %s226 = scalar_lea.vmem [#allocation1], 576
    %227 = vst [vmem:[%s226] sm:%s3] %v225
    %s228 = scalar_lea.vmem %s0, 142
    %v229 = vld [vmem:[%s228] sm:%s3]
    %s230 = scalar_lea.vmem [#allocation1], 568
    %231 = vst [vmem:[%s230] sm:%s3] %v229
    %s232 = scalar_lea.vmem %s0, 140
    %v233 = vld [vmem:[%s232] sm:%s3]
    %s234 = scalar_lea.vmem [#allocation1], 560
    %235 = vst [vmem:[%s234] sm:%s3] %v233
    %s236 = scalar_lea.vmem %s0, 138
    %v237 = vld [vmem:[%s236] sm:%s3]
    %s238 = scalar_lea.vmem [#allocation1], 552
    %239 = vst [vmem:[%s238] sm:%s3] %v237
    %s240 = scalar_lea.vmem %s0, 136
    %v241 = vld [vmem:[%s240] sm:%s3]
    %s242 = scalar_lea.vmem [#allocation1], 544
    %243 = vst [vmem:[%s242] sm:%s3] %v241
    %s244 = scalar_lea.vmem %s0, 134
    %v245 = vld [vmem:[%s244] sm:%s3]
    %s246 = scalar_lea.vmem [#allocation1], 536
    %247 = vst [vmem:[%s246] sm:%s3] %v245
    %s248 = scalar_lea.vmem %s0, 132
    %v249 = vld [vmem:[%s248] sm:%s3]
    %s250 = scalar_lea.vmem [#allocation1], 528
    %251 = vst [vmem:[%s250] sm:%s3] %v249
    %s252 = scalar_lea.vmem %s0, 130
    %v253 = vld [vmem:[%s252] sm:%s3]
    %s254 = scalar_lea.vmem [#allocation1], 520
    %255 = vst [vmem:[%s254] sm:%s3] %v253
    %s256 = scalar_lea.vmem %s0, 128
    %v257 = vld [vmem:[%s256] sm:%s3]
    %s258 = scalar_lea.vmem [#allocation1], 512
    %259 = vst [vmem:[%s258] sm:%s3] %v257
    %s260 = scalar_lea.vmem %s0, 126
    %v261 = vld [vmem:[%s260] sm:%s3]
    %s262 = scalar_lea.vmem [#allocation1], 504
    %263 = vst [vmem:[%s262] sm:%s3] %v261
    %s264 = scalar_lea.vmem %s0, 124
    %v265 = vld [vmem:[%s264] sm:%s3]
    %s266 = scalar_lea.vmem [#allocation1], 496
    %267 = vst [vmem:[%s266] sm:%s3] %v265
    %s268 = scalar_lea.vmem %s0, 122
    %v269 = vld [vmem:[%s268] sm:%s3]
    %s270 = scalar_lea.vmem [#allocation1], 488
    %271 = vst [vmem:[%s270] sm:%s3] %v269
    %s272 = scalar_lea.vmem %s0, 120
    %v273 = vld [vmem:[%s272] sm:%s3]
    %s274 = scalar_lea.vmem [#allocation1], 480
    %275 = vst [vmem:[%s274] sm:%s3] %v273
    %s276 = scalar_lea.vmem %s0, 118
    %v277 = vld [vmem:[%s276] sm:%s3]
    %s278 = scalar_lea.vmem [#allocation1], 472
    %279 = vst [vmem:[%s278] sm:%s3] %v277
    %s280 = scalar_lea.vmem %s0, 116
    %v281 = vld [vmem:[%s280] sm:%s3]
    %s282 = scalar_lea.vmem [#allocation1], 464
    %283 = vst [vmem:[%s282] sm:%s3] %v281
    %s284 = scalar_lea.vmem %s0, 114
    %v285 = vld [vmem:[%s284] sm:%s3]
    %s286 = scalar_lea.vmem [#allocation1], 456
    %287 = vst [vmem:[%s286] sm:%s3] %v285
    %s288 = scalar_lea.vmem %s0, 112
    %v289 = vld [vmem:[%s288] sm:%s3]
    %s290 = scalar_lea.vmem [#allocation1], 448
    %291 = vst [vmem:[%s290] sm:%s3] %v289
    %s292 = scalar_lea.vmem %s0, 110
    %v293 = vld [vmem:[%s292] sm:%s3]
    %s294 = scalar_lea.vmem [#allocation1], 440
    %295 = vst [vmem:[%s294] sm:%s3] %v293
    %s296 = scalar_lea.vmem %s0, 108
    %v297 = vld [vmem:[%s296] sm:%s3]
    %s298 = scalar_lea.vmem [#allocation1], 432
    %299 = vst [vmem:[%s298] sm:%s3] %v297
    %s300 = scalar_lea.vmem %s0, 106
    %v301 = vld [vmem:[%s300] sm:%s3]
    %s302 = scalar_lea.vmem [#allocation1], 424
    %303 = vst [vmem:[%s302] sm:%s3] %v301
    %s304 = scalar_lea.vmem %s0, 104
    %v305 = vld [vmem:[%s304] sm:%s3]
    %s306 = scalar_lea.vmem [#allocation1], 416
    %307 = vst [vmem:[%s306] sm:%s3] %v305
    %s308 = scalar_lea.vmem %s0, 102
    %v309 = vld [vmem:[%s308] sm:%s3]
    %s310 = scalar_lea.vmem [#allocation1], 408
    %311 = vst [vmem:[%s310] sm:%s3] %v309
    %s312 = scalar_lea.vmem %s0, 100
    %v313 = vld [vmem:[%s312] sm:%s3]
    %s314 = scalar_lea.vmem [#allocation1], 400
    %315 = vst [vmem:[%s314] sm:%s3] %v313
    %s316 = scalar_lea.vmem %s0, 98
    %v317 = vld [vmem:[%s316] sm:%s3]
    %s318 = scalar_lea.vmem [#allocation1], 392
    %319 = vst [vmem:[%s318] sm:%s3] %v317
    %s320 = scalar_lea.vmem %s0, 96
    %v321 = vld [vmem:[%s320] sm:%s3]
    %s322 = scalar_lea.vmem [#allocation1], 384
    %323 = vst [vmem:[%s322] sm:%s3] %v321
    %s324 = scalar_lea.vmem %s0, 94
    %v325 = vld [vmem:[%s324] sm:%s3]
    %s326 = scalar_lea.vmem [#allocation1], 376
    %327 = vst [vmem:[%s326] sm:%s3] %v325
    %s328 = scalar_lea.vmem %s0, 92
    %v329 = vld [vmem:[%s328] sm:%s3]
    %s330 = scalar_lea.vmem [#allocation1], 368
    %331 = vst [vmem:[%s330] sm:%s3] %v329
    %s332 = scalar_lea.vmem %s0, 90
    %v333 = vld [vmem:[%s332] sm:%s3]
    %s334 = scalar_lea.vmem [#allocation1], 360
    %335 = vst [vmem:[%s334] sm:%s3] %v333
    %s336 = scalar_lea.vmem %s0, 88
    %v337 = vld [vmem:[%s336] sm:%s3]
    %s338 = scalar_lea.vmem [#allocation1], 352
    %339 = vst [vmem:[%s338] sm:%s3] %v337
    %s340 = scalar_lea.vmem %s0, 86
    %v341 = vld [vmem:[%s340] sm:%s3]
    %s342 = scalar_lea.vmem [#allocation1], 344
    %343 = vst [vmem:[%s342] sm:%s3] %v341
    %s344 = scalar_lea.vmem %s0, 84
    %v345 = vld [vmem:[%s344] sm:%s3]
    %s346 = scalar_lea.vmem [#allocation1], 336
    %347 = vst [vmem:[%s346] sm:%s3] %v345
    %s348 = scalar_lea.vmem %s0, 82
    %v349 = vld [vmem:[%s348] sm:%s3]
    %s350 = scalar_lea.vmem [#allocation1], 328
    %351 = vst [vmem:[%s350] sm:%s3] %v349
    %s352 = scalar_lea.vmem %s0, 80
    %v353 = vld [vmem:[%s352] sm:%s3]
    %s354 = scalar_lea.vmem [#allocation1], 320
    %355 = vst [vmem:[%s354] sm:%s3] %v353
    %s356 = scalar_lea.vmem %s0, 78
    %v357 = vld [vmem:[%s356] sm:%s3]
    %s358 = scalar_lea.vmem [#allocation1], 312
    %359 = vst [vmem:[%s358] sm:%s3] %v357
    %s360 = scalar_lea.vmem %s0, 76
    %v361 = vld [vmem:[%s360] sm:%s3]
    %s362 = scalar_lea.vmem [#allocation1], 304
    %363 = vst [vmem:[%s362] sm:%s3] %v361
    %s364 = scalar_lea.vmem %s0, 74
    %v365 = vld [vmem:[%s364] sm:%s3]
    %s366 = scalar_lea.vmem [#allocation1], 296
    %367 = vst [vmem:[%s366] sm:%s3] %v365
    %s368 = scalar_lea.vmem %s0, 72
    %v369 = vld [vmem:[%s368] sm:%s3]
    %s370 = scalar_lea.vmem [#allocation1], 288
    %371 = vst [vmem:[%s370] sm:%s3] %v369
    %s372 = scalar_lea.vmem %s0, 70
    %v373 = vld [vmem:[%s372] sm:%s3]
    %s374 = scalar_lea.vmem [#allocation1], 280
    %375 = vst [vmem:[%s374] sm:%s3] %v373
    %s376 = scalar_lea.vmem %s0, 68
    %v377 = vld [vmem:[%s376] sm:%s3]
    %s378 = scalar_lea.vmem [#allocation1], 272
    %379 = vst [vmem:[%s378] sm:%s3] %v377
    %s380 = scalar_lea.vmem %s0, 66
    %v381 = vld [vmem:[%s380] sm:%s3]
    %s382 = scalar_lea.vmem [#allocation1], 264
    %383 = vst [vmem:[%s382] sm:%s3] %v381
    %s384 = scalar_lea.vmem %s0, 64
    %v385 = vld [vmem:[%s384] sm:%s3]
    %s386 = scalar_lea.vmem [#allocation1], 256
    %387 = vst [vmem:[%s386] sm:%s3] %v385
    %s388 = scalar_lea.vmem %s0, 62
    %v389 = vld [vmem:[%s388] sm:%s3]
    %s390 = scalar_lea.vmem [#allocation1], 248
    %391 = vst [vmem:[%s390] sm:%s3] %v389
    %s392 = scalar_lea.vmem %s0, 60
    %v393 = vld [vmem:[%s392] sm:%s3]
    %s394 = scalar_lea.vmem [#allocation1], 240
    %395 = vst [vmem:[%s394] sm:%s3] %v393
    %s396 = scalar_lea.vmem %s0, 58
    %v397 = vld [vmem:[%s396] sm:%s3]
    %s398 = scalar_lea.vmem [#allocation1], 232
    %399 = vst [vmem:[%s398] sm:%s3] %v397
    %s400 = scalar_lea.vmem %s0, 56
    %v401 = vld [vmem:[%s400] sm:%s3]
    %s402 = scalar_lea.vmem [#allocation1], 224
    %403 = vst [vmem:[%s402] sm:%s3] %v401
    %s404 = scalar_lea.vmem %s0, 54
    %v405 = vld [vmem:[%s404] sm:%s3]
    %s406 = scalar_lea.vmem [#allocation1], 216
    %407 = vst [vmem:[%s406] sm:%s3] %v405
    %s408 = scalar_lea.vmem %s0, 52
    %v409 = vld [vmem:[%s408] sm:%s3]
    %s410 = scalar_lea.vmem [#allocation1], 208
    %411 = vst [vmem:[%s410] sm:%s3] %v409
    %s412 = scalar_lea.vmem %s0, 50
    %v413 = vld [vmem:[%s412] sm:%s3]
    %s414 = scalar_lea.vmem [#allocation1], 200
    %415 = vst [vmem:[%s414] sm:%s3] %v413
    %s416 = scalar_lea.vmem %s0, 48
    %v417 = vld [vmem:[%s416] sm:%s3]
    %s418 = scalar_lea.vmem [#allocation1], 192
    %419 = vst [vmem:[%s418] sm:%s3] %v417
    %s420 = scalar_lea.vmem %s0, 46
    %v421 = vld [vmem:[%s420] sm:%s3]
    %s422 = scalar_lea.vmem [#allocation1], 184
    %423 = vst [vmem:[%s422] sm:%s3] %v421
    %s424 = scalar_lea.vmem %s0, 44
    %v425 = vld [vmem:[%s424] sm:%s3]
    %s426 = scalar_lea.vmem [#allocation1], 176
    %427 = vst [vmem:[%s426] sm:%s3] %v425
    %s428 = scalar_lea.vmem %s0, 42
    %v429 = vld [vmem:[%s428] sm:%s3]
    %s430 = scalar_lea.vmem [#allocation1], 168
    %431 = vst [vmem:[%s430] sm:%s3] %v429
    %s432 = scalar_lea.vmem %s0, 40
    %v433 = vld [vmem:[%s432] sm:%s3]
    %s434 = scalar_lea.vmem [#allocation1], 160
    %435 = vst [vmem:[%s434] sm:%s3] %v433
    %s436 = scalar_lea.vmem %s0, 38
    %v437 = vld [vmem:[%s436] sm:%s3]
    %s438 = scalar_lea.vmem [#allocation1], 152
    %439 = vst [vmem:[%s438] sm:%s3] %v437
    %s440 = scalar_lea.vmem %s0, 36
    %v441 = vld [vmem:[%s440] sm:%s3]
    %s442 = scalar_lea.vmem [#allocation1], 144
    %443 = vst [vmem:[%s442] sm:%s3] %v441
    %s444 = scalar_lea.vmem %s0, 34
    %v445 = vld [vmem:[%s444] sm:%s3]
    %s446 = scalar_lea.vmem [#allocation1], 136
    %447 = vst [vmem:[%s446] sm:%s3] %v445
    %s448 = scalar_lea.vmem %s0, 32
    %v449 = vld [vmem:[%s448] sm:%s3]
    %s450 = scalar_lea.vmem [#allocation1], 128
    %451 = vst [vmem:[%s450] sm:%s3] %v449
    %s452 = scalar_lea.vmem %s0, 30
    %v453 = vld [vmem:[%s452] sm:%s3]
    %s454 = scalar_lea.vmem [#allocation1], 120
    %455 = vst [vmem:[%s454] sm:%s3] %v453
    %s456 = scalar_lea.vmem %s0, 28
    %v457 = vld [vmem:[%s456] sm:%s3]
    %s458 = scalar_lea.vmem [#allocation1], 112
    %459 = vst [vmem:[%s458] sm:%s3] %v457
    %s460 = scalar_lea.vmem %s0, 26
    %v461 = vld [vmem:[%s460] sm:%s3]
    %s462 = scalar_lea.vmem [#allocation1], 104
    %463 = vst [vmem:[%s462] sm:%s3] %v461
    %s464 = scalar_lea.vmem %s0, 24
    %v465 = vld [vmem:[%s464] sm:%s3]
    %s466 = scalar_lea.vmem [#allocation1], 96
    %467 = vst [vmem:[%s466] sm:%s3] %v465
    %s468 = scalar_lea.vmem %s0, 22
    %v469 = vld [vmem:[%s468] sm:%s3]
    %s470 = scalar_lea.vmem [#allocation1], 88
    %471 = vst [vmem:[%s470] sm:%s3] %v469
    %s472 = scalar_lea.vmem %s0, 20
    %v473 = vld [vmem:[%s472] sm:%s3]
    %s474 = scalar_lea.vmem [#allocation1], 80
    %475 = vst [vmem:[%s474] sm:%s3] %v473
    %s476 = scalar_lea.vmem %s0, 18
    %v477 = vld [vmem:[%s476] sm:%s3]
    %s478 = scalar_lea.vmem [#allocation1], 72
    %479 = vst [vmem:[%s478] sm:%s3] %v477
    %s480 = scalar_lea.vmem %s0, 16
    %v481 = vld [vmem:[%s480] sm:%s3]
    %s482 = scalar_lea.vmem [#allocation1], 64
    %483 = vst [vmem:[%s482] sm:%s3] %v481
    %s484 = scalar_lea.vmem %s0, 14
    %v485 = vld [vmem:[%s484] sm:%s3]
    %s486 = scalar_lea.vmem [#allocation1], 56
    %487 = vst [vmem:[%s486] sm:%s3] %v485
    %s488 = scalar_lea.vmem %s0, 12
    %v489 = vld [vmem:[%s488] sm:%s3]
    %s490 = scalar_lea.vmem [#allocation1], 48
    %491 = vst [vmem:[%s490] sm:%s3] %v489
    %s492 = scalar_lea.vmem %s0, 10
    %v493 = vld [vmem:[%s492] sm:%s3]
    %s494 = scalar_lea.vmem [#allocation1], 40
    %495 = vst [vmem:[%s494] sm:%s3] %v493
    %s496 = scalar_lea.vmem %s0, 8
    %v497 = vld [vmem:[%s496] sm:%s3]
    %s498 = scalar_lea.vmem [#allocation1], 32
    %499 = vst [vmem:[%s498] sm:%s3] %v497
    %s500 = scalar_lea.vmem %s0, 6
    %v501 = vld [vmem:[%s500] sm:%s3]
    %s502 = scalar_lea.vmem [#allocation1], 24
    %503 = vst [vmem:[%s502] sm:%s3] %v501
    %s504 = scalar_lea.vmem %s0, 4
    %v505 = vld [vmem:[%s504] sm:%s3]
    %s506 = scalar_lea.vmem [#allocation1], 16
    %507 = vst [vmem:[%s506] sm:%s3] %v505
    %s508 = scalar_lea.vmem %s0, 2
    %v509 = vld [vmem:[%s508] sm:%s3]
    %s510 = scalar_lea.vmem [#allocation1], 8
    %511 = vst [vmem:[%s510] sm:%s3] %v509
    %v512 = vld [vmem:[%s0] sm:%s3]
    %513 = vst [vmem:[#allocation1] sm:%s3] %v512
    %v514 = vld [vmem:[#allocation1] sm:$0x1]
    %s515 = scalar_lea.vmem [#allocation1], 63
    %v516 = vld [vmem:[%s515] sm:$0x2]
    %vm517 = vcmask 1041409
    %v518 = vsel %vm517, %v516, %v514
    %s519 = scalar_lea.vmem [#allocation1], 126
    %v520 = vld [vmem:[%s519] sm:$0x4]
    %vm521 = vcmask 1042434
    %v522 = vsel %vm521, %v520, %v518
    %s523 = scalar_lea.vmem [#allocation1], 189
    %v524 = vld [vmem:[%s523] sm:$0x8]
    %vm525 = vcmask 1043459
    %v526 = vsel %vm525, %v524, %v522
    %s527 = scalar_lea.vmem [#allocation1], 252
    %v528 = vld [vmem:[%s527] sm:$0x10]
    %vm529 = vcmask 1044484
    %v530 = vsel %vm529, %v528, %v526
    %s531 = scalar_lea.vmem [#allocation1], 315
    %v532 = vld [vmem:[%s531] sm:$0x20]
    %vm533 = vcmask 1045509
    %v534 = vsel %vm533, %v532, %v530
    %s535 = scalar_lea.vmem [#allocation1], 378
    %v536 = vld [vmem:[%s535] sm:$0x40]
    %vm537 = vcmask 1046534
    %v538 = vsel %vm537, %v536, %v534
    %s539 = scalar_lea.vmem [#allocation1], 441
    %v540 = vld [vmem:[%s539] sm:$0x80]
    %vm541 = vcmask 1047559
    %v542 = vsel %vm541, %v540, %v538
    %vm543 = vcmask 64512
    %544 = vst.msk [vmem:[#allocation0] ss:$8 sm:$0xf] %vm543, %v542
    %s545 = scalar_lea.vmem [#allocation0], 4294967265
    %546 = vst.msk [vmem:[%s545] ss:$8 sm:$0xf0] %vm543, %v542
    %s547 = scalar_lea.vmem [#allocation1], 512
    %v548 = vld [vmem:[%s547] sm:$0x1]
    %s549 = scalar_lea.vmem [#allocation1], 575
    %v550 = vld [vmem:[%s549] sm:$0x2]
    %vm551 = vcmask 1041409
    %v552 = vsel %vm551, %v550, %v548
    %s553 = scalar_lea.vmem [#allocation1], 638
    %v554 = vld [vmem:[%s553] sm:$0x4]
    %vm555 = vcmask 1042434
    %v556 = vsel %vm555, %v554, %v552
    %s557 = scalar_lea.vmem [#allocation1], 701
    %v558 = vld [vmem:[%s557] sm:$0x8]
    %vm559 = vcmask 1043459
    %v560 = vsel %vm559, %v558, %v556
    %s561 = scalar_lea.vmem [#allocation1], 764
    %v562 = vld [vmem:[%s561] sm:$0x10]
    %vm563 = vcmask 1044484
    %v564 = vsel %vm563, %v562, %v560
    %s565 = scalar_lea.vmem [#allocation1], 827
    %v566 = vld [vmem:[%s565] sm:$0x20]
    %vm567 = vcmask 1045509
    %v568 = vsel %vm567, %v566, %v564
    %s569 = scalar_lea.vmem [#allocation1], 890
    %v570 = vld [vmem:[%s569] sm:$0x40]
    %vm571 = vcmask 1046534
    %v572 = vsel %vm571, %v570, %v568
    %s573 = scalar_lea.vmem [#allocation1], 953
    %v574 = vld [vmem:[%s573] sm:$0x80]
    %vm575 = vcmask 1047559
    %v576 = vsel %vm575, %v574, %v572
    %vm577 = vcmask 64512
    %s578 = scalar_lea.vmem [#allocation0], 2
    %579 = vst.msk [vmem:[%s578] ss:$8 sm:$0xf] %vm577, %v576
    %s580 = scalar_lea.vmem [#allocation0], 4294967267
    %581 = vst.msk [vmem:[%s580] ss:$8 sm:$0xf0] %vm577, %v576
    %s582 = scalar_lea.vmem [#allocation1], 57
    %v583 = vld [vmem:[%s582] sm:$0x1]
    %s584 = scalar_lea.vmem [#allocation1], 312
    %v585 = vld [vmem:[%s584] sm:$0x2]
    %vm586 = vcmask 1041409
    %v587 = vsel %vm586, %v585, %v583
    %s588 = scalar_lea.vmem [#allocation1], 567
    %v589 = vld [vmem:[%s588] sm:$0x4]
    %vm590 = vcmask 1042434
    %v591 = vsel %vm590, %v589, %v587
    %s592 = scalar_lea.vmem [#allocation1], 822
    %v593 = vld [vmem:[%s592] sm:$0x8]
    %vm594 = vcmask 1043459
    %v595 = vsel %vm594, %v593, %v591
    %s596 = scalar_lea.vmem [#allocation1], 117
    %v597 = vld [vmem:[%s596] sm:$0x10]
    %vm598 = vcmask 1044484
    %v599 = vsel %vm598, %v597, %v595
    %s600 = scalar_lea.vmem [#allocation1], 372
    %v601 = vld [vmem:[%s600] sm:$0x20]
    %vm602 = vcmask 1045509
    %v603 = vsel %vm602, %v601, %v599
    %s604 = scalar_lea.vmem [#allocation1], 627
    %v605 = vld [vmem:[%s604] sm:$0x40]
    %vm606 = vcmask 1046534
    %v607 = vsel %vm606, %v605, %v603
    %s608 = scalar_lea.vmem [#allocation1], 882
    %v609 = vld [vmem:[%s608] sm:$0x80]
    %vm610 = vcmask 1047559
    %v611 = vsel %vm610, %v609, %v607
    %612 = vrot.lane.b32.xlu0 %v611, 120
    %v613 = vpop.permute.xlu0 %612
    %vm614 = vcmask 1048512
    %615 = vst.msk [vmem:[#allocation0] sm:$0xf] %vm614, %v613
    %s616 = scalar_lea.vmem [#allocation0], 4
    %617 = vst.msk [vmem:[%s616] sm:$0xf0] %vm614, %v613
    %s618 = scalar_lea.vmem [#allocation1], 185
    %v619 = vld [vmem:[%s618] sm:$0x1]
    %s620 = scalar_lea.vmem [#allocation1], 440
    %v621 = vld [vmem:[%s620] sm:$0x2]
    %vm622 = vcmask 1041409
    %v623 = vsel %vm622, %v621, %v619
    %s624 = scalar_lea.vmem [#allocation1], 695
    %v625 = vld [vmem:[%s624] sm:$0x4]
    %vm626 = vcmask 1042434
    %v627 = vsel %vm626, %v625, %v623
    %s628 = scalar_lea.vmem [#allocation1], 950
    %v629 = vld [vmem:[%s628] sm:$0x8]
    %vm630 = vcmask 1043459
    %v631 = vsel %vm630, %v629, %v627
    %s632 = scalar_lea.vmem [#allocation1], 245
    %v633 = vld [vmem:[%s632] sm:$0x10]
    %vm634 = vcmask 1044484
    %v635 = vsel %vm634, %v633, %v631
    %s636 = scalar_lea.vmem [#allocation1], 500
    %v637 = vld [vmem:[%s636] sm:$0x20]
    %vm638 = vcmask 1045509
    %v639 = vsel %vm638, %v637, %v635
    %s640 = scalar_lea.vmem [#allocation1], 755
    %v641 = vld [vmem:[%s640] sm:$0x40]
    %vm642 = vcmask 1046534
    %v643 = vsel %vm642, %v641, %v639
    %s644 = scalar_lea.vmem [#allocation1], 1010
    %v645 = vld [vmem:[%s644] sm:$0x80]
    %vm646 = vcmask 1047559
    %v647 = vsel %vm646, %v645, %v643
    %648 = vrot.lane.b32.xlu0 %v647, 120
    %v649 = vpop.permute.xlu0 %648
    %vm650 = vcmask 1048512
    %s651 = scalar_lea.vmem [#allocation0], 16
    %652 = vst.msk [vmem:[%s651] sm:$0xf] %vm650, %v649
    %s653 = scalar_lea.vmem [#allocation0], 20
    %654 = vst.msk [vmem:[%s653] sm:$0xf0] %vm650, %v649
    %s655 = scalar_lea.vmem [#allocation1], 56
    %v656 = vld [vmem:[%s655] sm:$0x1]
    %s657 = scalar_lea.vmem [#allocation1], 311
    %v658 = vld [vmem:[%s657] sm:$0x2]
    %vm659 = vcmask 1041409
    %v660 = vsel %vm659, %v658, %v656
    %s661 = scalar_lea.vmem [#allocation1], 566
    %v662 = vld [vmem:[%s661] sm:$0x4]
    %vm663 = vcmask 1042434
    %v664 = vsel %vm663, %v662, %v660
    %s665 = scalar_lea.vmem [#allocation1], 821
    %v666 = vld [vmem:[%s665] sm:$0x8]
    %vm667 = vcmask 1043459
    %v668 = vsel %vm667, %v666, %v664
    %s669 = scalar_lea.vmem [#allocation1], 116
    %v670 = vld [vmem:[%s669] sm:$0x10]
    %vm671 = vcmask 1044484
    %v672 = vsel %vm671, %v670, %v668
    %s673 = scalar_lea.vmem [#allocation1], 371
    %v674 = vld [vmem:[%s673] sm:$0x20]
    %vm675 = vcmask 1045509
    %v676 = vsel %vm675, %v674, %v672
    %s677 = scalar_lea.vmem [#allocation1], 626
    %v678 = vld [vmem:[%s677] sm:$0x40]
    %vm679 = vcmask 1046534
    %v680 = vsel %vm679, %v678, %v676
    %s681 = scalar_lea.vmem [#allocation1], 881
    %v682 = vld [vmem:[%s681] sm:$0x80]
    %vm683 = vcmask 1047559
    %v684 = vsel %vm683, %v682, %v680
    %685 = vrot.lane.b32.xlu0 %v684, 112
    %v686 = vpop.permute.xlu0 %685
    %vm687 = vcmask 982912
    %688 = vst.msk [vmem:[#allocation0] sm:$0xf] %vm687, %v686
    %s689 = scalar_lea.vmem [#allocation0], 4
    %690 = vst.msk [vmem:[%s689] sm:$0xf0] %vm687, %v686
    %s691 = scalar_lea.vmem [#allocation1], 184
    %v692 = vld [vmem:[%s691] sm:$0x1]
    %s693 = scalar_lea.vmem [#allocation1], 439
    %v694 = vld [vmem:[%s693] sm:$0x2]
    %vm695 = vcmask 1041409
    %v696 = vsel %vm695, %v694, %v692
    %s697 = scalar_lea.vmem [#allocation1], 694
    %v698 = vld [vmem:[%s697] sm:$0x4]
    %vm699 = vcmask 1042434
    %v700 = vsel %vm699, %v698, %v696
    %s701 = scalar_lea.vmem [#allocation1], 949
    %v702 = vld [vmem:[%s701] sm:$0x8]
    %vm703 = vcmask 1043459
    %v704 = vsel %vm703, %v702, %v700
    %s705 = scalar_lea.vmem [#allocation1], 244
    %v706 = vld [vmem:[%s705] sm:$0x10]
    %vm707 = vcmask 1044484
    %v708 = vsel %vm707, %v706, %v704
    %s709 = scalar_lea.vmem [#allocation1], 499
    %v710 = vld [vmem:[%s709] sm:$0x20]
    %vm711 = vcmask 1045509
    %v712 = vsel %vm711, %v710, %v708
    %s713 = scalar_lea.vmem [#allocation1], 754
    %v714 = vld [vmem:[%s713] sm:$0x40]
    %vm715 = vcmask 1046534
    %v716 = vsel %vm715, %v714, %v712
    %s717 = scalar_lea.vmem [#allocation1], 1009
    %v718 = vld [vmem:[%s717] sm:$0x80]
    %vm719 = vcmask 1047559
    %v720 = vsel %vm719, %v718, %v716
    %721 = vrot.lane.b32.xlu0 %v720, 112
    %v722 = vpop.permute.xlu0 %721
    %vm723 = vcmask 982912
    %s724 = scalar_lea.vmem [#allocation0], 16
    %725 = vst.msk [vmem:[%s724] sm:$0xf] %vm723, %v722
    %s726 = scalar_lea.vmem [#allocation0], 20
    %727 = vst.msk [vmem:[%s726] sm:$0xf0] %vm723, %v722
    %s728 = scalar_lea.vmem [#allocation1], 49
    %v729 = vld [vmem:[%s728] sm:$0x1]
    %s730 = scalar_lea.vmem [#allocation1], 304
    %v731 = vld [vmem:[%s730] sm:$0x2]
    %vm732 = vcmask 1041409
    %v733 = vsel %vm732, %v731, %v729
    %s734 = scalar_lea.vmem [#allocation1], 559
    %v735 = vld [vmem:[%s734] sm:$0x4]
    %vm736 = vcmask 1042434
    %v737 = vsel %vm736, %v735, %v733
    %s738 = scalar_lea.vmem [#allocation1], 814
    %v739 = vld [vmem:[%s738] sm:$0x8]
    %vm740 = vcmask 1043459
    %v741 = vsel %vm740, %v739, %v737
    %s742 = scalar_lea.vmem [#allocation1], 109
    %v743 = vld [vmem:[%s742] sm:$0x10]
    %vm744 = vcmask 1044484
    %v745 = vsel %vm744, %v743, %v741
    %s746 = scalar_lea.vmem [#allocation1], 364
    %v747 = vld [vmem:[%s746] sm:$0x20]
    %vm748 = vcmask 1045509
    %v749 = vsel %vm748, %v747, %v745
    %s750 = scalar_lea.vmem [#allocation1], 619
    %v751 = vld [vmem:[%s750] sm:$0x40]
    %vm752 = vcmask 1046534
    %v753 = vsel %vm752, %v751, %v749
    %s754 = scalar_lea.vmem [#allocation1], 874
    %v755 = vld [vmem:[%s754] sm:$0x80]
    %vm756 = vcmask 1047559
    %v757 = vsel %vm756, %v755, %v753
    %758 = vrot.lane.b32.xlu0 %v757, 104
    %v759 = vpop.permute.xlu0 %758
    %vm760 = vcmask 917312
    %761 = vst.msk [vmem:[#allocation0] sm:$0xf] %vm760, %v759
    %s762 = scalar_lea.vmem [#allocation0], 4
    %763 = vst.msk [vmem:[%s762] sm:$0xf0] %vm760, %v759
    %s764 = scalar_lea.vmem [#allocation1], 177
    %v765 = vld [vmem:[%s764] sm:$0x1]
    %s766 = scalar_lea.vmem [#allocation1], 432
    %v767 = vld [vmem:[%s766] sm:$0x2]
    %vm768 = vcmask 1041409
    %v769 = vsel %vm768, %v767, %v765
    %s770 = scalar_lea.vmem [#allocation1], 687
    %v771 = vld [vmem:[%s770] sm:$0x4]
    %vm772 = vcmask 1042434
    %v773 = vsel %vm772, %v771, %v769
    %s774 = scalar_lea.vmem [#allocation1], 942
    %v775 = vld [vmem:[%s774] sm:$0x8]
    %vm776 = vcmask 1043459
    %v777 = vsel %vm776, %v775, %v773
    %s778 = scalar_lea.vmem [#allocation1], 237
    %v779 = vld [vmem:[%s778] sm:$0x10]
    %vm780 = vcmask 1044484
    %v781 = vsel %vm780, %v779, %v777
    %s782 = scalar_lea.vmem [#allocation1], 492
    %v783 = vld [vmem:[%s782] sm:$0x20]
    %vm784 = vcmask 1045509
    %v785 = vsel %vm784, %v783, %v781
    %s786 = scalar_lea.vmem [#allocation1], 747
    %v787 = vld [vmem:[%s786] sm:$0x40]
    %vm788 = vcmask 1046534
    %v789 = vsel %vm788, %v787, %v785
    %s790 = scalar_lea.vmem [#allocation1], 1002
    %v791 = vld [vmem:[%s790] sm:$0x80]
    %vm792 = vcmask 1047559
    %v793 = vsel %vm792, %v791, %v789
    %794 = vrot.lane.b32.xlu0 %v793, 104
    %v795 = vpop.permute.xlu0 %794
    %vm796 = vcmask 917312
    %s797 = scalar_lea.vmem [#allocation0], 16
    %798 = vst.msk [vmem:[%s797] sm:$0xf] %vm796, %v795
    %s799 = scalar_lea.vmem [#allocation0], 20
    %800 = vst.msk [vmem:[%s799] sm:$0xf0] %vm796, %v795
    %s801 = scalar_lea.vmem [#allocation1], 48
    %v802 = vld [vmem:[%s801] sm:$0x1]
    %s803 = scalar_lea.vmem [#allocation1], 303
    %v804 = vld [vmem:[%s803] sm:$0x2]
    %vm805 = vcmask 1041409
    %v806 = vsel %vm805, %v804, %v802
    %s807 = scalar_lea.vmem [#allocation1], 558
    %v808 = vld [vmem:[%s807] sm:$0x4]
    %vm809 = vcmask 1042434
    %v810 = vsel %vm809, %v808, %v806
    %s811 = scalar_lea.vmem [#allocation1], 813
    %v812 = vld [vmem:[%s811] sm:$0x8]
    %vm813 = vcmask 1043459
    %v814 = vsel %vm813, %v812, %v810
    %s815 = scalar_lea.vmem [#allocation1], 108
    %v816 = vld [vmem:[%s815] sm:$0x10]
    %vm817 = vcmask 1044484
    %v818 = vsel %vm817, %v816, %v814
    %s819 = scalar_lea.vmem [#allocation1], 363
    %v820 = vld [vmem:[%s819] sm:$0x20]
    %vm821 = vcmask 1045509
    %v822 = vsel %vm821, %v820, %v818
    %s823 = scalar_lea.vmem [#allocation1], 618
    %v824 = vld [vmem:[%s823] sm:$0x40]
    %vm825 = vcmask 1046534
    %v826 = vsel %vm825, %v824, %v822
    %s827 = scalar_lea.vmem [#allocation1], 873
    %v828 = vld [vmem:[%s827] sm:$0x80]
    %vm829 = vcmask 1047559
    %v830 = vsel %vm829, %v828, %v826
    %831 = vrot.lane.b32.xlu0 %v830, 96
    %v832 = vpop.permute.xlu0 %831
    %vm833 = vcmask 851712
    %834 = vst.msk [vmem:[#allocation0] sm:$0xf] %vm833, %v832
    %s835 = scalar_lea.vmem [#allocation0], 4
    %836 = vst.msk [vmem:[%s835] sm:$0xf0] %vm833, %v832
    %s837 = scalar_lea.vmem [#allocation1], 176
    %v838 = vld [vmem:[%s837] sm:$0x1]
    %s839 = scalar_lea.vmem [#allocation1], 431
    %v840 = vld [vmem:[%s839] sm:$0x2]
    %vm841 = vcmask 1041409
    %v842 = vsel %vm841, %v840, %v838
    %s843 = scalar_lea.vmem [#allocation1], 686
    %v844 = vld [vmem:[%s843] sm:$0x4]
    %vm845 = vcmask 1042434
    %v846 = vsel %vm845, %v844, %v842
    %s847 = scalar_lea.vmem [#allocation1], 941
    %v848 = vld [vmem:[%s847] sm:$0x8]
    %vm849 = vcmask 1043459
    %v850 = vsel %vm849, %v848, %v846
    %s851 = scalar_lea.vmem [#allocation1], 236
    %v852 = vld [vmem:[%s851] sm:$0x10]
    %vm853 = vcmask 1044484
    %v854 = vsel %vm853, %v852, %v850
    %s855 = scalar_lea.vmem [#allocation1], 491
    %v856 = vld [vmem:[%s855] sm:$0x20]
    %vm857 = vcmask 1045509
    %v858 = vsel %vm857, %v856, %v854
    %s859 = scalar_lea.vmem [#allocation1], 746
    %v860 = vld [vmem:[%s859] sm:$0x40]
    %vm861 = vcmask 1046534
    %v862 = vsel %vm861, %v860, %v858
    %s863 = scalar_lea.vmem [#allocation1], 1001
    %v864 = vld [vmem:[%s863] sm:$0x80]
    %vm865 = vcmask 1047559
    %v866 = vsel %vm865, %v864, %v862
    %867 = vrot.lane.b32.xlu0 %v866, 96
    %v868 = vpop.permute.xlu0 %867
    %vm869 = vcmask 851712
    %s870 = scalar_lea.vmem [#allocation0], 16
    %871 = vst.msk [vmem:[%s870] sm:$0xf] %vm869, %v868
    %s872 = scalar_lea.vmem [#allocation0], 20
    %873 = vst.msk [vmem:[%s872] sm:$0xf0] %vm869, %v868
    %s874 = scalar_lea.vmem [#allocation1], 41
    %v875 = vld [vmem:[%s874] sm:$0x1]
    %s876 = scalar_lea.vmem [#allocation1], 296
    %v877 = vld [vmem:[%s876] sm:$0x2]
    %vm878 = vcmask 1041409
    %v879 = vsel %vm878, %v877, %v875
    %s880 = scalar_lea.vmem [#allocation1], 551
    %v881 = vld [vmem:[%s880] sm:$0x4]
    %vm882 = vcmask 1042434
    %v883 = vsel %vm882, %v881, %v879
    %s884 = scalar_lea.vmem [#allocation1], 806
    %v885 = vld [vmem:[%s884] sm:$0x8]
    %vm886 = vcmask 1043459
    %v887 = vsel %vm886, %v885, %v883
    %s888 = scalar_lea.vmem [#allocation1], 101
    %v889 = vld [vmem:[%s888] sm:$0x10]
    %vm890 = vcmask 1044484
    %v891 = vsel %vm890, %v889, %v887
    %s892 = scalar_lea.vmem [#allocation1], 356
    %v893 = vld [vmem:[%s892] sm:$0x20]
    %vm894 = vcmask 1045509
    %v895 = vsel %vm894, %v893, %v891
    %s896 = scalar_lea.vmem [#allocation1], 611
    %v897 = vld [vmem:[%s896] sm:$0x40]
    %vm898 = vcmask 1046534
    %v899 = vsel %vm898, %v897, %v895
    %s900 = scalar_lea.vmem [#allocation1], 866
    %v901 = vld [vmem:[%s900] sm:$0x80]
    %vm902 = vcmask 1047559
    %v903 = vsel %vm902, %v901, %v899
    %904 = vrot.lane.b32.xlu0 %v903, 88
    %v905 = vpop.permute.xlu0 %904
    %vm906 = vcmask 786112
    %907 = vst.msk [vmem:[#allocation0] sm:$0xf] %vm906, %v905
    %s908 = scalar_lea.vmem [#allocation0], 4
    %909 = vst.msk [vmem:[%s908] sm:$0xf0] %vm906, %v905
    %s910 = scalar_lea.vmem [#allocation1], 169
    %v911 = vld [vmem:[%s910] sm:$0x1]
    %s912 = scalar_lea.vmem [#allocation1], 424
    %v913 = vld [vmem:[%s912] sm:$0x2]
    %vm914 = vcmask 1041409
    %v915 = vsel %vm914, %v913, %v911
    %s916 = scalar_lea.vmem [#allocation1], 679
    %v917 = vld [vmem:[%s916] sm:$0x4]
    %vm918 = vcmask 1042434
    %v919 = vsel %vm918, %v917, %v915
    %s920 = scalar_lea.vmem [#allocation1], 934
    %v921 = vld [vmem:[%s920] sm:$0x8]
    %vm922 = vcmask 1043459
    %v923 = vsel %vm922, %v921, %v919
    %s924 = scalar_lea.vmem [#allocation1], 229
    %v925 = vld [vmem:[%s924] sm:$0x10]
    %vm926 = vcmask 1044484
    %v927 = vsel %vm926, %v925, %v923
    %s928 = scalar_lea.vmem [#allocation1], 484
    %v929 = vld [vmem:[%s928] sm:$0x20]
    %vm930 = vcmask 1045509
    %v931 = vsel %vm930, %v929, %v927
    %s932 = scalar_lea.vmem [#allocation1], 739
    %v933 = vld [vmem:[%s932] sm:$0x40]
    %vm934 = vcmask 1046534
    %v935 = vsel %vm934, %v933, %v931
    %s936 = scalar_lea.vmem [#allocation1], 994
    %v937 = vld [vmem:[%s936] sm:$0x80]
    %vm938 = vcmask 1047559
    %v939 = vsel %vm938, %v937, %v935
    %940 = vrot.lane.b32.xlu0 %v939, 88
    %v941 = vpop.permute.xlu0 %940
    %vm942 = vcmask 786112
    %s943 = scalar_lea.vmem [#allocation0], 16
    %944 = vst.msk [vmem:[%s943] sm:$0xf] %vm942, %v941
    %s945 = scalar_lea.vmem [#allocation0], 20
    %946 = vst.msk [vmem:[%s945] sm:$0xf0] %vm942, %v941
    %s947 = scalar_lea.vmem [#allocation1], 40
    %v948 = vld [vmem:[%s947] sm:$0x1]
    %s949 = scalar_lea.vmem [#allocation1], 295
    %v950 = vld [vmem:[%s949] sm:$0x2]
    %vm951 = vcmask 1041409
    %v952 = vsel %vm951, %v950, %v948
    %s953 = scalar_lea.vmem [#allocation1], 550
    %v954 = vld [vmem:[%s953] sm:$0x4]
    %vm955 = vcmask 1042434
    %v956 = vsel %vm955, %v954, %v952
    %s957 = scalar_lea.vmem [#allocation1], 805
    %v958 = vld [vmem:[%s957] sm:$0x8]
    %vm959 = vcmask 1043459
    %v960 = vsel %vm959, %v958, %v956
    %s961 = scalar_lea.vmem [#allocation1], 100
    %v962 = vld [vmem:[%s961] sm:$0x10]
    %vm963 = vcmask 1044484
    %v964 = vsel %vm963, %v962, %v960
    %s965 = scalar_lea.vmem [#allocation1], 355
    %v966 = vld [vmem:[%s965] sm:$0x20]
    %vm967 = vcmask 1045509
    %v968 = vsel %vm967, %v966, %v964
    %s969 = scalar_lea.vmem [#allocation1], 610
    %v970 = vld [vmem:[%s969] sm:$0x40]
    %vm971 = vcmask 1046534
    %v972 = vsel %vm971, %v970, %v968
    %s973 = scalar_lea.vmem [#allocation1], 865
    %v974 = vld [vmem:[%s973] sm:$0x80]
    %vm975 = vcmask 1047559
    %v976 = vsel %vm975, %v974, %v972
    %977 = vrot.lane.b32.xlu0 %v976, 80
    %v978 = vpop.permute.xlu0 %977
    %vm979 = vcmask 720512
    %980 = vst.msk [vmem:[#allocation0] sm:$0xf] %vm979, %v978
    %s981 = scalar_lea.vmem [#allocation0], 4
    %982 = vst.msk [vmem:[%s981] sm:$0xf0] %vm979, %v978
    %s983 = scalar_lea.vmem [#allocation1], 168
    %v984 = vld [vmem:[%s983] sm:$0x1]
    %s985 = scalar_lea.vmem [#allocation1], 423
    %v986 = vld [vmem:[%s985] sm:$0x2]
    %vm987 = vcmask 1041409
    %v988 = vsel %vm987, %v986, %v984
    %s989 = scalar_lea.vmem [#allocation1], 678
    %v990 = vld [vmem:[%s989] sm:$0x4]
    %vm991 = vcmask 1042434
    %v992 = vsel %vm991, %v990, %v988
    %s993 = scalar_lea.vmem [#allocation1], 933
    %v994 = vld [vmem:[%s993] sm:$0x8]
    %vm995 = vcmask 1043459
    %v996 = vsel %vm995, %v994, %v992
    %s997 = scalar_lea.vmem [#allocation1], 228
    %v998 = vld [vmem:[%s997] sm:$0x10]
    %vm999 = vcmask 1044484
    %v1000 = vsel %vm999, %v998, %v996
    %s1001 = scalar_lea.vmem [#allocation1], 483
    %v1002 = vld [vmem:[%s1001] sm:$0x20]
    %vm1003 = vcmask 1045509
    %v1004 = vsel %vm1003, %v1002, %v1000
    %s1005 = scalar_lea.vmem [#allocation1], 738
    %v1006 = vld [vmem:[%s1005] sm:$0x40]
    %vm1007 = vcmask 1046534
    %v1008 = vsel %vm1007, %v1006, %v1004
    %s1009 = scalar_lea.vmem [#allocation1], 993
    %v1010 = vld [vmem:[%s1009] sm:$0x80]
    %vm1011 = vcmask 1047559
    %v1012 = vsel %vm1011, %v1010, %v1008
    %1013 = vrot.lane.b32.xlu0 %v1012, 80
    %v1014 = vpop.permute.xlu0 %1013
    %vm1015 = vcmask 720512
    %s1016 = scalar_lea.vmem [#allocation0], 16
    %1017 = vst.msk [vmem:[%s1016] sm:$0xf] %vm1015, %v1014
    %s1018 = scalar_lea.vmem [#allocation0], 20
    %1019 = vst.msk [vmem:[%s1018] sm:$0xf0] %vm1015, %v1014
    %s1020 = scalar_lea.vmem [#allocation1], 33
    %v1021 = vld [vmem:[%s1020] sm:$0x1]
    %s1022 = scalar_lea.vmem [#allocation1], 288
    %v1023 = vld [vmem:[%s1022] sm:$0x2]
    %vm1024 = vcmask 1041409
    %v1025 = vsel %vm1024, %v1023, %v1021
    %s1026 = scalar_lea.vmem [#allocation1], 543
    %v1027 = vld [vmem:[%s1026] sm:$0x4]
    %vm1028 = vcmask 1042434
    %v1029 = vsel %vm1028, %v1027, %v1025
    %s1030 = scalar_lea.vmem [#allocation1], 798
    %v1031 = vld [vmem:[%s1030] sm:$0x8]
    %vm1032 = vcmask 1043459
    %v1033 = vsel %vm1032, %v1031, %v1029
    %s1034 = scalar_lea.vmem [#allocation1], 93
    %v1035 = vld [vmem:[%s1034] sm:$0x10]
    %vm1036 = vcmask 1044484
    %v1037 = vsel %vm1036, %v1035, %v1033
    %s1038 = scalar_lea.vmem [#allocation1], 348
    %v1039 = vld [vmem:[%s1038] sm:$0x20]
    %vm1040 = vcmask 1045509
    %v1041 = vsel %vm1040, %v1039, %v1037
    %s1042 = scalar_lea.vmem [#allocation1], 603
    %v1043 = vld [vmem:[%s1042] sm:$0x40]
    %vm1044 = vcmask 1046534
    %v1045 = vsel %vm1044, %v1043, %v1041
    %s1046 = scalar_lea.vmem [#allocation1], 858
    %v1047 = vld [vmem:[%s1046] sm:$0x80]
    %vm1048 = vcmask 1047559
    %v1049 = vsel %vm1048, %v1047, %v1045
    %1050 = vrot.lane.b32.xlu0 %v1049, 72
    %v1051 = vpop.permute.xlu0 %1050
    %vm1052 = vcmask 654912
    %1053 = vst.msk [vmem:[#allocation0] sm:$0xf] %vm1052, %v1051
    %s1054 = scalar_lea.vmem [#allocation0], 4
    %1055 = vst.msk [vmem:[%s1054] sm:$0xf0] %vm1052, %v1051
    %s1056 = scalar_lea.vmem [#allocation1], 161
    %v1057 = vld [vmem:[%s1056] sm:$0x1]
    %s1058 = scalar_lea.vmem [#allocation1], 416
    %v1059 = vld [vmem:[%s1058] sm:$0x2]
    %vm1060 = vcmask 1041409
    %v1061 = vsel %vm1060, %v1059, %v1057
    %s1062 = scalar_lea.vmem [#allocation1], 671
    %v1063 = vld [vmem:[%s1062] sm:$0x4]
    %vm1064 = vcmask 1042434
    %v1065 = vsel %vm1064, %v1063, %v1061
    %s1066 = scalar_lea.vmem [#allocation1], 926
    %v1067 = vld [vmem:[%s1066] sm:$0x8]
    %vm1068 = vcmask 1043459
    %v1069 = vsel %vm1068, %v1067, %v1065
    %s1070 = scalar_lea.vmem [#allocation1], 221
    %v1071 = vld [vmem:[%s1070] sm:$0x10]
    %vm1072 = vcmask 1044484
    %v1073 = vsel %vm1072, %v1071, %v1069
    %s1074 = scalar_lea.vmem [#allocation1], 476
    %v1075 = vld [vmem:[%s1074] sm:$0x20]
    %vm1076 = vcmask 1045509
    %v1077 = vsel %vm1076, %v1075, %v1073
    %s1078 = scalar_lea.vmem [#allocation1], 731
    %v1079 = vld [vmem:[%s1078] sm:$0x40]
    %vm1080 = vcmask 1046534
    %v1081 = vsel %vm1080, %v1079, %v1077
    %s1082 = scalar_lea.vmem [#allocation1], 986
    %v1083 = vld [vmem:[%s1082] sm:$0x80]
    %vm1084 = vcmask 1047559
    %v1085 = vsel %vm1084, %v1083, %v1081
    %1086 = vrot.lane.b32.xlu0 %v1085, 72
    %v1087 = vpop.permute.xlu0 %1086
    %vm1088 = vcmask 654912
    %s1089 = scalar_lea.vmem [#allocation0], 16
    %1090 = vst.msk [vmem:[%s1089] sm:$0xf] %vm1088, %v1087
    %s1091 = scalar_lea.vmem [#allocation0], 20
    %1092 = vst.msk [vmem:[%s1091] sm:$0xf0] %vm1088, %v1087
    %s1093 = scalar_lea.vmem [#allocation1], 32
    %v1094 = vld [vmem:[%s1093] sm:$0x1]
    %s1095 = scalar_lea.vmem [#allocation1], 287
    %v1096 = vld [vmem:[%s1095] sm:$0x2]
    %vm1097 = vcmask 1041409
    %v1098 = vsel %vm1097, %v1096, %v1094
    %s1099 = scalar_lea.vmem [#allocation1], 542
    %v1100 = vld [vmem:[%s1099] sm:$0x4]
    %vm1101 = vcmask 1042434
    %v1102 = vsel %vm1101, %v1100, %v1098
    %s1103 = scalar_lea.vmem [#allocation1], 797
    %v1104 = vld [vmem:[%s1103] sm:$0x8]
    %vm1105 = vcmask 1043459
    %v1106 = vsel %vm1105, %v1104, %v1102
    %s1107 = scalar_lea.vmem [#allocation1], 92
    %v1108 = vld [vmem:[%s1107] sm:$0x10]
    %vm1109 = vcmask 1044484
    %v1110 = vsel %vm1109, %v1108, %v1106
    %s1111 = scalar_lea.vmem [#allocation1], 347
    %v1112 = vld [vmem:[%s1111] sm:$0x20]
    %vm1113 = vcmask 1045509
    %v1114 = vsel %vm1113, %v1112, %v1110
    %s1115 = scalar_lea.vmem [#allocation1], 602
    %v1116 = vld [vmem:[%s1115] sm:$0x40]
    %vm1117 = vcmask 1046534
    %v1118 = vsel %vm1117, %v1116, %v1114
    %s1119 = scalar_lea.vmem [#allocation1], 857
    %v1120 = vld [vmem:[%s1119] sm:$0x80]
    %vm1121 = vcmask 1047559
    %v1122 = vsel %vm1121, %v1120, %v1118
    %1123 = vrot.lane.b32.xlu0 %v1122, 64
    %v1124 = vpop.permute.xlu0 %1123
    %vm1125 = vcmask 589312
    %1126 = vst.msk [vmem:[#allocation0] sm:$0xf] %vm1125, %v1124
    %s1127 = scalar_lea.vmem [#allocation0], 4
    %1128 = vst.msk [vmem:[%s1127] sm:$0xf0] %vm1125, %v1124
    %s1129 = scalar_lea.vmem [#allocation1], 160
    %v1130 = vld [vmem:[%s1129] sm:$0x1]
    %s1131 = scalar_lea.vmem [#allocation1], 415
    %v1132 = vld [vmem:[%s1131] sm:$0x2]
    %vm1133 = vcmask 1041409
    %v1134 = vsel %vm1133, %v1132, %v1130
    %s1135 = scalar_lea.vmem [#allocation1], 670
    %v1136 = vld [vmem:[%s1135] sm:$0x4]
    %vm1137 = vcmask 1042434
    %v1138 = vsel %vm1137, %v1136, %v1134
    %s1139 = scalar_lea.vmem [#allocation1], 925
    %v1140 = vld [vmem:[%s1139] sm:$0x8]
    %vm1141 = vcmask 1043459
    %v1142 = vsel %vm1141, %v1140, %v1138
    %s1143 = scalar_lea.vmem [#allocation1], 220
    %v1144 = vld [vmem:[%s1143] sm:$0x10]
    %vm1145 = vcmask 1044484
    %v1146 = vsel %vm1145, %v1144, %v1142
    %s1147 = scalar_lea.vmem [#allocation1], 475
    %v1148 = vld [vmem:[%s1147] sm:$0x20]
    %vm1149 = vcmask 1045509
    %v1150 = vsel %vm1149, %v1148, %v1146
    %s1151 = scalar_lea.vmem [#allocation1], 730
    %v1152 = vld [vmem:[%s1151] sm:$0x40]
    %vm1153 = vcmask 1046534
    %v1154 = vsel %vm1153, %v1152, %v1150
    %s1155 = scalar_lea.vmem [#allocation1], 985
    %v1156 = vld [vmem:[%s1155] sm:$0x80]
    %vm1157 = vcmask 1047559
    %v1158 = vsel %vm1157, %v1156, %v1154
    %1159 = vrot.lane.b32.xlu0 %v1158, 64
    %v1160 = vpop.permute.xlu0 %1159
    %vm1161 = vcmask 589312
    %s1162 = scalar_lea.vmem [#allocation0], 16
    %1163 = vst.msk [vmem:[%s1162] sm:$0xf] %vm1161, %v1160
    %s1164 = scalar_lea.vmem [#allocation0], 20
    %1165 = vst.msk [vmem:[%s1164] sm:$0xf0] %vm1161, %v1160
    %s1166 = scalar_lea.vmem [#allocation1], 25
    %v1167 = vld [vmem:[%s1166] sm:$0x1]
    %s1168 = scalar_lea.vmem [#allocation1], 280
    %v1169 = vld [vmem:[%s1168] sm:$0x2]
    %vm1170 = vcmask 1041409
    %v1171 = vsel %vm1170, %v1169, %v1167
    %s1172 = scalar_lea.vmem [#allocation1], 535
    %v1173 = vld [vmem:[%s1172] sm:$0x4]
    %vm1174 = vcmask 1042434
    %v1175 = vsel %vm1174, %v1173, %v1171
    %s1176 = scalar_lea.vmem [#allocation1], 790
    %v1177 = vld [vmem:[%s1176] sm:$0x8]
    %vm1178 = vcmask 1043459
    %v1179 = vsel %vm1178, %v1177, %v1175
    %s1180 = scalar_lea.vmem [#allocation1], 85
    %v1181 = vld [vmem:[%s1180] sm:$0x10]
    %vm1182 = vcmask 1044484
    %v1183 = vsel %vm1182, %v1181, %v1179
    %s1184 = scalar_lea.vmem [#allocation1], 340
    %v1185 = vld [vmem:[%s1184] sm:$0x20]
    %vm1186 = vcmask 1045509
    %v1187 = vsel %vm1186, %v1185, %v1183
    %s1188 = scalar_lea.vmem [#allocation1], 595
    %v1189 = vld [vmem:[%s1188] sm:$0x40]
    %vm1190 = vcmask 1046534
    %v1191 = vsel %vm1190, %v1189, %v1187
    %s1192 = scalar_lea.vmem [#allocation1], 850
    %v1193 = vld [vmem:[%s1192] sm:$0x80]
    %vm1194 = vcmask 1047559
    %v1195 = vsel %vm1194, %v1193, %v1191
    %1196 = vrot.lane.b32.xlu0 %v1195, 56
    %v1197 = vpop.permute.xlu0 %1196
    %vm1198 = vcmask 523712
    %1199 = vst.msk [vmem:[#allocation0] sm:$0xf] %vm1198, %v1197
    %s1200 = scalar_lea.vmem [#allocation0], 4
    %1201 = vst.msk [vmem:[%s1200] sm:$0xf0] %vm1198, %v1197
    %s1202 = scalar_lea.vmem [#allocation1], 153
    %v1203 = vld [vmem:[%s1202] sm:$0x1]
    %s1204 = scalar_lea.vmem [#allocation1], 408
    %v1205 = vld [vmem:[%s1204] sm:$0x2]
    %vm1206 = vcmask 1041409
    %v1207 = vsel %vm1206, %v1205, %v1203
    %s1208 = scalar_lea.vmem [#allocation1], 663
    %v1209 = vld [vmem:[%s1208] sm:$0x4]
    %vm1210 = vcmask 1042434
    %v1211 = vsel %vm1210, %v1209, %v1207
    %s1212 = scalar_lea.vmem [#allocation1], 918
    %v1213 = vld [vmem:[%s1212] sm:$0x8]
    %vm1214 = vcmask 1043459
    %v1215 = vsel %vm1214, %v1213, %v1211
    %s1216 = scalar_lea.vmem [#allocation1], 213
    %v1217 = vld [vmem:[%s1216] sm:$0x10]
    %vm1218 = vcmask 1044484
    %v1219 = vsel %vm1218, %v1217, %v1215
    %s1220 = scalar_lea.vmem [#allocation1], 468
    %v1221 = vld [vmem:[%s1220] sm:$0x20]
    %vm1222 = vcmask 1045509
    %v1223 = vsel %vm1222, %v1221, %v1219
    %s1224 = scalar_lea.vmem [#allocation1], 723
    %v1225 = vld [vmem:[%s1224] sm:$0x40]
    %vm1226 = vcmask 1046534
    %v1227 = vsel %vm1226, %v1225, %v1223
    %s1228 = scalar_lea.vmem [#allocation1], 978
    %v1229 = vld [vmem:[%s1228] sm:$0x80]
    %vm1230 = vcmask 1047559
    %v1231 = vsel %vm1230, %v1229, %v1227
    %1232 = vrot.lane.b32.xlu0 %v1231, 56
    %v1233 = vpop.permute.xlu0 %1232
    %vm1234 = vcmask 523712
    %s1235 = scalar_lea.vmem [#allocation0], 16
    %1236 = vst.msk [vmem:[%s1235] sm:$0xf] %vm1234, %v1233
    %s1237 = scalar_lea.vmem [#allocation0], 20
    %1238 = vst.msk [vmem:[%s1237] sm:$0xf0] %vm1234, %v1233
    %s1239 = scalar_lea.vmem [#allocation1], 24
    %v1240 = vld [vmem:[%s1239] sm:$0x1]
    %s1241 = scalar_lea.vmem [#allocation1], 279
    %v1242 = vld [vmem:[%s1241] sm:$0x2]
    %vm1243 = vcmask 1041409
    %v1244 = vsel %vm1243, %v1242, %v1240
    %s1245 = scalar_lea.vmem [#allocation1], 534
    %v1246 = vld [vmem:[%s1245] sm:$0x4]
    %vm1247 = vcmask 1042434
    %v1248 = vsel %vm1247, %v1246, %v1244
    %s1249 = scalar_lea.vmem [#allocation1], 789
    %v1250 = vld [vmem:[%s1249] sm:$0x8]
    %vm1251 = vcmask 1043459
    %v1252 = vsel %vm1251, %v1250, %v1248
    %s1253 = scalar_lea.vmem [#allocation1], 84
    %v1254 = vld [vmem:[%s1253] sm:$0x10]
    %vm1255 = vcmask 1044484
    %v1256 = vsel %vm1255, %v1254, %v1252
    %s1257 = scalar_lea.vmem [#allocation1], 339
    %v1258 = vld [vmem:[%s1257] sm:$0x20]
    %vm1259 = vcmask 1045509
    %v1260 = vsel %vm1259, %v1258, %v1256
    %s1261 = scalar_lea.vmem [#allocation1], 594
    %v1262 = vld [vmem:[%s1261] sm:$0x40]
    %vm1263 = vcmask 1046534
    %v1264 = vsel %vm1263, %v1262, %v1260
    %s1265 = scalar_lea.vmem [#allocation1], 849
    %v1266 = vld [vmem:[%s1265] sm:$0x80]
    %vm1267 = vcmask 1047559
    %v1268 = vsel %vm1267, %v1266, %v1264
    %1269 = vrot.lane.b32.xlu0 %v1268, 48
    %v1270 = vpop.permute.xlu0 %1269
    %vm1271 = vcmask 458112
    %1272 = vst.msk [vmem:[#allocation0] sm:$0xf] %vm1271, %v1270
    %s1273 = scalar_lea.vmem [#allocation0], 4
    %1274 = vst.msk [vmem:[%s1273] sm:$0xf0] %vm1271, %v1270
    %s1275 = scalar_lea.vmem [#allocation1], 152
    %v1276 = vld [vmem:[%s1275] sm:$0x1]
    %s1277 = scalar_lea.vmem [#allocation1], 407
    %v1278 = vld [vmem:[%s1277] sm:$0x2]
    %vm1279 = vcmask 1041409
    %v1280 = vsel %vm1279, %v1278, %v1276
    %s1281 = scalar_lea.vmem [#allocation1], 662
    %v1282 = vld [vmem:[%s1281] sm:$0x4]
    %vm1283 = vcmask 1042434
    %v1284 = vsel %vm1283, %v1282, %v1280
    %s1285 = scalar_lea.vmem [#allocation1], 917
    %v1286 = vld [vmem:[%s1285] sm:$0x8]
    %vm1287 = vcmask 1043459
    %v1288 = vsel %vm1287, %v1286, %v1284
    %s1289 = scalar_lea.vmem [#allocation1], 212
    %v1290 = vld [vmem:[%s1289] sm:$0x10]
    %vm1291 = vcmask 1044484
    %v1292 = vsel %vm1291, %v1290, %v1288
    %s1293 = scalar_lea.vmem [#allocation1], 467
    %v1294 = vld [vmem:[%s1293] sm:$0x20]
    %vm1295 = vcmask 1045509
    %v1296 = vsel %vm1295, %v1294, %v1292
    %s1297 = scalar_lea.vmem [#allocation1], 722
    %v1298 = vld [vmem:[%s1297] sm:$0x40]
    %vm1299 = vcmask 1046534
    %v1300 = vsel %vm1299, %v1298, %v1296
    %s1301 = scalar_lea.vmem [#allocation1], 977
    %v1302 = vld [vmem:[%s1301] sm:$0x80]
    %vm1303 = vcmask 1047559
    %v1304 = vsel %vm1303, %v1302, %v1300
    %1305 = vrot.lane.b32.xlu0 %v1304, 48
    %v1306 = vpop.permute.xlu0 %1305
    %vm1307 = vcmask 458112
    %s1308 = scalar_lea.vmem [#allocation0], 16
    %1309 = vst.msk [vmem:[%s1308] sm:$0xf] %vm1307, %v1306
    %s1310 = scalar_lea.vmem [#allocation0], 20
    %1311 = vst.msk [vmem:[%s1310] sm:$0xf0] %vm1307, %v1306
    %s1312 = scalar_lea.vmem [#allocation1], 17
    %v1313 = vld [vmem:[%s1312] sm:$0x1]
    %s1314 = scalar_lea.vmem [#allocation1], 272
    %v1315 = vld [vmem:[%s1314] sm:$0x2]
    %vm1316 = vcmask 1041409
    %v1317 = vsel %vm1316, %v1315, %v1313
    %s1318 = scalar_lea.vmem [#allocation1], 527
    %v1319 = vld [vmem:[%s1318] sm:$0x4]
    %vm1320 = vcmask 1042434
    %v1321 = vsel %vm1320, %v1319, %v1317
    %s1322 = scalar_lea.vmem [#allocation1], 782
    %v1323 = vld [vmem:[%s1322] sm:$0x8]
    %vm1324 = vcmask 1043459
    %v1325 = vsel %vm1324, %v1323, %v1321
    %s1326 = scalar_lea.vmem [#allocation1], 77
    %v1327 = vld [vmem:[%s1326] sm:$0x10]
    %vm1328 = vcmask 1044484
    %v1329 = vsel %vm1328, %v1327, %v1325
    %s1330 = scalar_lea.vmem [#allocation1], 332
    %v1331 = vld [vmem:[%s1330] sm:$0x20]
    %vm1332 = vcmask 1045509
    %v1333 = vsel %vm1332, %v1331, %v1329
    %s1334 = scalar_lea.vmem [#allocation1], 587
    %v1335 = vld [vmem:[%s1334] sm:$0x40]
    %vm1336 = vcmask 1046534
    %v1337 = vsel %vm1336, %v1335, %v1333
    %s1338 = scalar_lea.vmem [#allocation1], 842
    %v1339 = vld [vmem:[%s1338] sm:$0x80]
    %vm1340 = vcmask 1047559
    %v1341 = vsel %vm1340, %v1339, %v1337
    %1342 = vrot.lane.b32.xlu0 %v1341, 40
    %v1343 = vpop.permute.xlu0 %1342
    %vm1344 = vcmask 392512
    %1345 = vst.msk [vmem:[#allocation0] sm:$0xf] %vm1344, %v1343
    %s1346 = scalar_lea.vmem [#allocation0], 4
    %1347 = vst.msk [vmem:[%s1346] sm:$0xf0] %vm1344, %v1343
    %s1348 = scalar_lea.vmem [#allocation1], 145
    %v1349 = vld [vmem:[%s1348] sm:$0x1]
    %s1350 = scalar_lea.vmem [#allocation1], 400
    %v1351 = vld [vmem:[%s1350] sm:$0x2]
    %vm1352 = vcmask 1041409
    %v1353 = vsel %vm1352, %v1351, %v1349
    %s1354 = scalar_lea.vmem [#allocation1], 655
    %v1355 = vld [vmem:[%s1354] sm:$0x4]
    %vm1356 = vcmask 1042434
    %v1357 = vsel %vm1356, %v1355, %v1353
    %s1358 = scalar_lea.vmem [#allocation1], 910
    %v1359 = vld [vmem:[%s1358] sm:$0x8]
    %vm1360 = vcmask 1043459
    %v1361 = vsel %vm1360, %v1359, %v1357
    %s1362 = scalar_lea.vmem [#allocation1], 205
    %v1363 = vld [vmem:[%s1362] sm:$0x10]
    %vm1364 = vcmask 1044484
    %v1365 = vsel %vm1364, %v1363, %v1361
    %s1366 = scalar_lea.vmem [#allocation1], 460
    %v1367 = vld [vmem:[%s1366] sm:$0x20]
    %vm1368 = vcmask 1045509
    %v1369 = vsel %vm1368, %v1367, %v1365
    %s1370 = scalar_lea.vmem [#allocation1], 715
    %v1371 = vld [vmem:[%s1370] sm:$0x40]
    %vm1372 = vcmask 1046534
    %v1373 = vsel %vm1372, %v1371, %v1369
    %s1374 = scalar_lea.vmem [#allocation1], 970
    %v1375 = vld [vmem:[%s1374] sm:$0x80]
    %vm1376 = vcmask 1047559
    %v1377 = vsel %vm1376, %v1375, %v1373
    %1378 = vrot.lane.b32.xlu0 %v1377, 40
    %v1379 = vpop.permute.xlu0 %1378
    %vm1380 = vcmask 392512
    %s1381 = scalar_lea.vmem [#allocation0], 16
    %1382 = vst.msk [vmem:[%s1381] sm:$0xf] %vm1380, %v1379
    %s1383 = scalar_lea.vmem [#allocation0], 20
    %1384 = vst.msk [vmem:[%s1383] sm:$0xf0] %vm1380, %v1379
    %s1385 = scalar_lea.vmem [#allocation1], 16
    %v1386 = vld [vmem:[%s1385] sm:$0x1]
    %s1387 = scalar_lea.vmem [#allocation1], 271
    %v1388 = vld [vmem:[%s1387] sm:$0x2]
    %vm1389 = vcmask 1041409
    %v1390 = vsel %vm1389, %v1388, %v1386
    %s1391 = scalar_lea.vmem [#allocation1], 526
    %v1392 = vld [vmem:[%s1391] sm:$0x4]
    %vm1393 = vcmask 1042434
    %v1394 = vsel %vm1393, %v1392, %v1390
    %s1395 = scalar_lea.vmem [#allocation1], 781
    %v1396 = vld [vmem:[%s1395] sm:$0x8]
    %vm1397 = vcmask 1043459
    %v1398 = vsel %vm1397, %v1396, %v1394
    %s1399 = scalar_lea.vmem [#allocation1], 76
    %v1400 = vld [vmem:[%s1399] sm:$0x10]
    %vm1401 = vcmask 1044484
    %v1402 = vsel %vm1401, %v1400, %v1398
    %s1403 = scalar_lea.vmem [#allocation1], 331
    %v1404 = vld [vmem:[%s1403] sm:$0x20]
    %vm1405 = vcmask 1045509
    %v1406 = vsel %vm1405, %v1404, %v1402
    %s1407 = scalar_lea.vmem [#allocation1], 586
    %v1408 = vld [vmem:[%s1407] sm:$0x40]
    %vm1409 = vcmask 1046534
    %v1410 = vsel %vm1409, %v1408, %v1406
    %s1411 = scalar_lea.vmem [#allocation1], 841
    %v1412 = vld [vmem:[%s1411] sm:$0x80]
    %vm1413 = vcmask 1047559
    %v1414 = vsel %vm1413, %v1412, %v1410
    %1415 = vrot.lane.b32.xlu0 %v1414, 32
    %v1416 = vpop.permute.xlu0 %1415
    %vm1417 = vcmask 326912
    %1418 = vst.msk [vmem:[#allocation0] sm:$0xf] %vm1417, %v1416
    %s1419 = scalar_lea.vmem [#allocation0], 4
    %1420 = vst.msk [vmem:[%s1419] sm:$0xf0] %vm1417, %v1416
    %s1421 = scalar_lea.vmem [#allocation1], 144
    %v1422 = vld [vmem:[%s1421] sm:$0x1]
    %s1423 = scalar_lea.vmem [#allocation1], 399
    %v1424 = vld [vmem:[%s1423] sm:$0x2]
    %vm1425 = vcmask 1041409
    %v1426 = vsel %vm1425, %v1424, %v1422
    %s1427 = scalar_lea.vmem [#allocation1], 654
    %v1428 = vld [vmem:[%s1427] sm:$0x4]
    %vm1429 = vcmask 1042434
    %v1430 = vsel %vm1429, %v1428, %v1426
    %s1431 = scalar_lea.vmem [#allocation1], 909
    %v1432 = vld [vmem:[%s1431] sm:$0x8]
    %vm1433 = vcmask 1043459
    %v1434 = vsel %vm1433, %v1432, %v1430
    %s1435 = scalar_lea.vmem [#allocation1], 204
    %v1436 = vld [vmem:[%s1435] sm:$0x10]
    %vm1437 = vcmask 1044484
    %v1438 = vsel %vm1437, %v1436, %v1434
    %s1439 = scalar_lea.vmem [#allocation1], 459
    %v1440 = vld [vmem:[%s1439] sm:$0x20]
    %vm1441 = vcmask 1045509
    %v1442 = vsel %vm1441, %v1440, %v1438
    %s1443 = scalar_lea.vmem [#allocation1], 714
    %v1444 = vld [vmem:[%s1443] sm:$0x40]
    %vm1445 = vcmask 1046534
    %v1446 = vsel %vm1445, %v1444, %v1442
    %s1447 = scalar_lea.vmem [#allocation1], 969
    %v1448 = vld [vmem:[%s1447] sm:$0x80]
    %vm1449 = vcmask 1047559
    %v1450 = vsel %vm1449, %v1448, %v1446
    %1451 = vrot.lane.b32.xlu0 %v1450, 32
    %v1452 = vpop.permute.xlu0 %1451
    %vm1453 = vcmask 326912
    %s1454 = scalar_lea.vmem [#allocation0], 16
    %1455 = vst.msk [vmem:[%s1454] sm:$0xf] %vm1453, %v1452
    %s1456 = scalar_lea.vmem [#allocation0], 20
    %1457 = vst.msk [vmem:[%s1456] sm:$0xf0] %vm1453, %v1452
    %s1458 = scalar_lea.vmem [#allocation1], 9
    %v1459 = vld [vmem:[%s1458] sm:$0x1]
    %s1460 = scalar_lea.vmem [#allocation1], 264
    %v1461 = vld [vmem:[%s1460] sm:$0x2]
    %vm1462 = vcmask 1041409
    %v1463 = vsel %vm1462, %v1461, %v1459
    %s1464 = scalar_lea.vmem [#allocation1], 519
    %v1465 = vld [vmem:[%s1464] sm:$0x4]
    %vm1466 = vcmask 1042434
    %v1467 = vsel %vm1466, %v1465, %v1463
    %s1468 = scalar_lea.vmem [#allocation1], 774
    %v1469 = vld [vmem:[%s1468] sm:$0x8]
    %vm1470 = vcmask 1043459
    %v1471 = vsel %vm1470, %v1469, %v1467
    %s1472 = scalar_lea.vmem [#allocation1], 69
    %v1473 = vld [vmem:[%s1472] sm:$0x10]
    %vm1474 = vcmask 1044484
    %v1475 = vsel %vm1474, %v1473, %v1471
    %s1476 = scalar_lea.vmem [#allocation1], 324
    %v1477 = vld [vmem:[%s1476] sm:$0x20]
    %vm1478 = vcmask 1045509
    %v1479 = vsel %vm1478, %v1477, %v1475
    %s1480 = scalar_lea.vmem [#allocation1], 579
    %v1481 = vld [vmem:[%s1480] sm:$0x40]
    %vm1482 = vcmask 1046534
    %v1483 = vsel %vm1482, %v1481, %v1479
    %s1484 = scalar_lea.vmem [#allocation1], 834
    %v1485 = vld [vmem:[%s1484] sm:$0x80]
    %vm1486 = vcmask 1047559
    %v1487 = vsel %vm1486, %v1485, %v1483
    %1488 = vrot.lane.b32.xlu0 %v1487, 24
    %v1489 = vpop.permute.xlu0 %1488
    %vm1490 = vcmask 261312
    %1491 = vst.msk [vmem:[#allocation0] sm:$0xf] %vm1490, %v1489
    %s1492 = scalar_lea.vmem [#allocation0], 4
    %1493 = vst.msk [vmem:[%s1492] sm:$0xf0] %vm1490, %v1489
    %s1494 = scalar_lea.vmem [#allocation1], 137
    %v1495 = vld [vmem:[%s1494] sm:$0x1]
    %s1496 = scalar_lea.vmem [#allocation1], 392
    %v1497 = vld [vmem:[%s1496] sm:$0x2]
    %vm1498 = vcmask 1041409
    %v1499 = vsel %vm1498, %v1497, %v1495
    %s1500 = scalar_lea.vmem [#allocation1], 647
    %v1501 = vld [vmem:[%s1500] sm:$0x4]
    %vm1502 = vcmask 1042434
    %v1503 = vsel %vm1502, %v1501, %v1499
    %s1504 = scalar_lea.vmem [#allocation1], 902
    %v1505 = vld [vmem:[%s1504] sm:$0x8]
    %vm1506 = vcmask 1043459
    %v1507 = vsel %vm1506, %v1505, %v1503
    %s1508 = scalar_lea.vmem [#allocation1], 197
    %v1509 = vld [vmem:[%s1508] sm:$0x10]
    %vm1510 = vcmask 1044484
    %v1511 = vsel %vm1510, %v1509, %v1507
    %s1512 = scalar_lea.vmem [#allocation1], 452
    %v1513 = vld [vmem:[%s1512] sm:$0x20]
    %vm1514 = vcmask 1045509
    %v1515 = vsel %vm1514, %v1513, %v1511
    %s1516 = scalar_lea.vmem [#allocation1], 707
    %v1517 = vld [vmem:[%s1516] sm:$0x40]
    %vm1518 = vcmask 1046534
    %v1519 = vsel %vm1518, %v1517, %v1515
    %s1520 = scalar_lea.vmem [#allocation1], 962
    %v1521 = vld [vmem:[%s1520] sm:$0x80]
    %vm1522 = vcmask 1047559
    %v1523 = vsel %vm1522, %v1521, %v1519
    %1524 = vrot.lane.b32.xlu0 %v1523, 24
    %v1525 = vpop.permute.xlu0 %1524
    %vm1526 = vcmask 261312
    %s1527 = scalar_lea.vmem [#allocation0], 16
    %1528 = vst.msk [vmem:[%s1527] sm:$0xf] %vm1526, %v1525
    %s1529 = scalar_lea.vmem [#allocation0], 20
    %1530 = vst.msk [vmem:[%s1529] sm:$0xf0] %vm1526, %v1525
    %s1531 = scalar_lea.vmem [#allocation1], 8
    %v1532 = vld [vmem:[%s1531] sm:$0x1]
    %s1533 = scalar_lea.vmem [#allocation1], 263
    %v1534 = vld [vmem:[%s1533] sm:$0x2]
    %vm1535 = vcmask 1041409
    %v1536 = vsel %vm1535, %v1534, %v1532
    %s1537 = scalar_lea.vmem [#allocation1], 518
    %v1538 = vld [vmem:[%s1537] sm:$0x4]
    %vm1539 = vcmask 1042434
    %v1540 = vsel %vm1539, %v1538, %v1536
    %s1541 = scalar_lea.vmem [#allocation1], 773
    %v1542 = vld [vmem:[%s1541] sm:$0x8]
    %vm1543 = vcmask 1043459
    %v1544 = vsel %vm1543, %v1542, %v1540
    %s1545 = scalar_lea.vmem [#allocation1], 68
    %v1546 = vld [vmem:[%s1545] sm:$0x10]
    %vm1547 = vcmask 1044484
    %v1548 = vsel %vm1547, %v1546, %v1544
    %s1549 = scalar_lea.vmem [#allocation1], 323
    %v1550 = vld [vmem:[%s1549] sm:$0x20]
    %vm1551 = vcmask 1045509
    %v1552 = vsel %vm1551, %v1550, %v1548
    %s1553 = scalar_lea.vmem [#allocation1], 578
    %v1554 = vld [vmem:[%s1553] sm:$0x40]
    %vm1555 = vcmask 1046534
    %v1556 = vsel %vm1555, %v1554, %v1552
    %s1557 = scalar_lea.vmem [#allocation1], 833
    %v1558 = vld [vmem:[%s1557] sm:$0x80]
    %vm1559 = vcmask 1047559
    %v1560 = vsel %vm1559, %v1558, %v1556
    %1561 = vrot.lane.b32.xlu0 %v1560, 16
    %v1562 = vpop.permute.xlu0 %1561
    %vm1563 = vcmask 195712
    %1564 = vst.msk [vmem:[#allocation0] sm:$0xf] %vm1563, %v1562
    %s1565 = scalar_lea.vmem [#allocation0], 4
    %1566 = vst.msk [vmem:[%s1565] sm:$0xf0] %vm1563, %v1562
    %s1567 = scalar_lea.vmem [#allocation1], 136
    %v1568 = vld [vmem:[%s1567] sm:$0x1]
    %s1569 = scalar_lea.vmem [#allocation1], 391
    %v1570 = vld [vmem:[%s1569] sm:$0x2]
    %vm1571 = vcmask 1041409
    %v1572 = vsel %vm1571, %v1570, %v1568
    %s1573 = scalar_lea.vmem [#allocation1], 646
    %v1574 = vld [vmem:[%s1573] sm:$0x4]
    %vm1575 = vcmask 1042434
    %v1576 = vsel %vm1575, %v1574, %v1572
    %s1577 = scalar_lea.vmem [#allocation1], 901
    %v1578 = vld [vmem:[%s1577] sm:$0x8]
    %vm1579 = vcmask 1043459
    %v1580 = vsel %vm1579, %v1578, %v1576
    %s1581 = scalar_lea.vmem [#allocation1], 196
    %v1582 = vld [vmem:[%s1581] sm:$0x10]
    %vm1583 = vcmask 1044484
    %v1584 = vsel %vm1583, %v1582, %v1580
    %s1585 = scalar_lea.vmem [#allocation1], 451
    %v1586 = vld [vmem:[%s1585] sm:$0x20]
    %vm1587 = vcmask 1045509
    %v1588 = vsel %vm1587, %v1586, %v1584
    %s1589 = scalar_lea.vmem [#allocation1], 706
    %v1590 = vld [vmem:[%s1589] sm:$0x40]
    %vm1591 = vcmask 1046534
    %v1592 = vsel %vm1591, %v1590, %v1588
    %s1593 = scalar_lea.vmem [#allocation1], 961
    %v1594 = vld [vmem:[%s1593] sm:$0x80]
    %vm1595 = vcmask 1047559
    %v1596 = vsel %vm1595, %v1594, %v1592
    %1597 = vrot.lane.b32.xlu0 %v1596, 16
    %v1598 = vpop.permute.xlu0 %1597
    %vm1599 = vcmask 195712
    %s1600 = scalar_lea.vmem [#allocation0], 16
    %1601 = vst.msk [vmem:[%s1600] sm:$0xf] %vm1599, %v1598
    %s1602 = scalar_lea.vmem [#allocation0], 20
    %1603 = vst.msk [vmem:[%s1602] sm:$0xf0] %vm1599, %v1598
    %s1604 = scalar_lea.vmem [#allocation1], 1
    %v1605 = vld [vmem:[%s1604] sm:$0x1]
    %s1606 = scalar_lea.vmem [#allocation1], 256
    %v1607 = vld [vmem:[%s1606] sm:$0x2]
    %vm1608 = vcmask 1041409
    %v1609 = vsel %vm1608, %v1607, %v1605
    %s1610 = scalar_lea.vmem [#allocation1], 511
    %v1611 = vld [vmem:[%s1610] sm:$0x4]
    %vm1612 = vcmask 1042434
    %v1613 = vsel %vm1612, %v1611, %v1609
    %s1614 = scalar_lea.vmem [#allocation1], 766
    %v1615 = vld [vmem:[%s1614] sm:$0x8]
    %vm1616 = vcmask 1043459
    %v1617 = vsel %vm1616, %v1615, %v1613
    %s1618 = scalar_lea.vmem [#allocation1], 61
    %v1619 = vld [vmem:[%s1618] sm:$0x10]
    %vm1620 = vcmask 1044484
    %v1621 = vsel %vm1620, %v1619, %v1617
    %s1622 = scalar_lea.vmem [#allocation1], 316
    %v1623 = vld [vmem:[%s1622] sm:$0x20]
    %vm1624 = vcmask 1045509
    %v1625 = vsel %vm1624, %v1623, %v1621
    %s1626 = scalar_lea.vmem [#allocation1], 571
    %v1627 = vld [vmem:[%s1626] sm:$0x40]
    %vm1628 = vcmask 1046534
    %v1629 = vsel %vm1628, %v1627, %v1625
    %s1630 = scalar_lea.vmem [#allocation1], 826
    %v1631 = vld [vmem:[%s1630] sm:$0x80]
    %vm1632 = vcmask 1047559
    %v1633 = vsel %vm1632, %v1631, %v1629
    %1634 = vrot.lane.b32.xlu0 %v1633, 8
    %v1635 = vpop.permute.xlu0 %1634
    %vm1636 = vcmask 130112
    %1637 = vst.msk [vmem:[#allocation0] sm:$0xf] %vm1636, %v1635
    %s1638 = scalar_lea.vmem [#allocation0], 4
    %1639 = vst.msk [vmem:[%s1638] sm:$0xf0] %vm1636, %v1635
    %s1640 = scalar_lea.vmem [#allocation1], 129
    %v1641 = vld [vmem:[%s1640] sm:$0x1]
    %s1642 = scalar_lea.vmem [#allocation1], 384
    %v1643 = vld [vmem:[%s1642] sm:$0x2]
    %vm1644 = vcmask 1041409
    %v1645 = vsel %vm1644, %v1643, %v1641
    %s1646 = scalar_lea.vmem [#allocation1], 639
    %v1647 = vld [vmem:[%s1646] sm:$0x4]
    %vm1648 = vcmask 1042434
    %v1649 = vsel %vm1648, %v1647, %v1645
    %s1650 = scalar_lea.vmem [#allocation1], 894
    %v1651 = vld [vmem:[%s1650] sm:$0x8]
    %vm1652 = vcmask 1043459
    %v1653 = vsel %vm1652, %v1651, %v1649
    %s1654 = scalar_lea.vmem [#allocation1], 189
    %v1655 = vld [vmem:[%s1654] sm:$0x10]
    %vm1656 = vcmask 1044484
    %v1657 = vsel %vm1656, %v1655, %v1653
    %s1658 = scalar_lea.vmem [#allocation1], 444
    %v1659 = vld [vmem:[%s1658] sm:$0x20]
    %vm1660 = vcmask 1045509
    %v1661 = vsel %vm1660, %v1659, %v1657
    %s1662 = scalar_lea.vmem [#allocation1], 699
    %v1663 = vld [vmem:[%s1662] sm:$0x40]
    %vm1664 = vcmask 1046534
    %v1665 = vsel %vm1664, %v1663, %v1661
    %s1666 = scalar_lea.vmem [#allocation1], 954
    %v1667 = vld [vmem:[%s1666] sm:$0x80]
    %vm1668 = vcmask 1047559
    %v1669 = vsel %vm1668, %v1667, %v1665
    %1670 = vrot.lane.b32.xlu0 %v1669, 8
    %v1671 = vpop.permute.xlu0 %1670
    %vm1672 = vcmask 130112
    %s1673 = scalar_lea.vmem [#allocation0], 16
    %1674 = vst.msk [vmem:[%s1673] sm:$0xf] %vm1672, %v1671
    %s1675 = scalar_lea.vmem [#allocation0], 20
    %1676 = vst.msk [vmem:[%s1675] sm:$0xf0] %vm1672, %v1671
    %s1678 = ssub.s32 16, 1
    %v1679 = vld [vmem:[#allocation0] sm:%s1678]
    %s1681 = ssub.s32 16, 1
    %1682 = vst [vmem:[%s1] sm:%s1681] %v1679
    %s1683 = scalar_lea.vmem [#allocation0], 8
    %v1684 = vld [vmem:[%s1683] sm:%s1678]
    %s1686 = ssub.s32 16, 1
    %s1687 = scalar_lea.vmem %s1, 4
    %1688 = vst [vmem:[%s1687] sm:%s1686] %v1684
    %s1689 = scalar_lea.vmem [#allocation0], 16
    %v1690 = vld [vmem:[%s1689] sm:%s1678]
    %s1692 = ssub.s32 16, 1
    %s1693 = scalar_lea.vmem %s1, 8
    %1694 = vst [vmem:[%s1693] sm:%s1692] %v1690
    %s1695 = scalar_lea.vmem [#allocation0], 24
    %v1696 = vld [vmem:[%s1695] sm:%s1678]
    %s1698 = ssub.s32 16, 1
    %s1699 = scalar_lea.vmem %s1, 12
    %1700 = vst [vmem:[%s1699] sm:%s1698] %v1696

// kernel: split.0
$region0: #{split.0}
  #allocation0 [shape = 'u32[2048]{0}', space=vmem, size = 0x2000, scoped, tag = 'scoped memory for split.0']
  #allocation1 [shape = 'u32[2048]{0}', space=vmem, size = 0x2000, scoped, tag = 'scoped memory for split.0']
  #allocation2 [shape = 'u32[2048]{0}', space=vmem, size = 0x2000, scoped, tag = 'scoped memory for split.0']
  #allocation3 [shape = 'u32[2048]{0}', space=vmem, size = 0x2000, scoped, tag = 'scoped memory for split.0']
  #allocation4 [shape = 'u32[2048]{0}', space=vmem, size = 0x2000, scoped, tag = 'scoped memory for split.0']
  #allocation5 [shape = 's32[1]{0}', space=sflag, size = 0x4, scoped, tag = 'scoped memory for split.0']
  %s0 = inlined_call_operand.vmem [shape: f32[8,2,16,9], index: 0, kind: input, shape index: {}]
  %s1 = inlined_call_operand.vmem [shape: f32[4,2,16,9], index: 1, kind: output, shape index: {}]
  %s2 = scalar_lea.vmem %s0, 128
  %s3 = scalar_lea.vmem %s0, 128
  %s4 = scalar_lea.vmem %s0, 128
  %v5 = vld [vmem:[%s4] sm:$0xff]
  %6 = vst [vmem:[%s1] sm:$0xff] %v5
  %s7 = scalar_lea.vmem %s4, 32
  %v8 = vld [vmem:[%s7] sm:$0xff]
  %s9 = scalar_lea.vmem %s1, 32
  %10 = vst [vmem:[%s9] sm:$0xff] %v8
  %s11 = scalar_lea.vmem %s4, 64
  %v12 = vld [vmem:[%s11] sm:$0xff]
  %s13 = scalar_lea.vmem %s1, 64
  %14 = vst [vmem:[%s13] sm:$0xff] %v12
  %s15 = scalar_lea.vmem %s4, 96
  %v16 = vld [vmem:[%s15] sm:$0xff]
  %s17 = scalar_lea.vmem %s1, 96
  %18 = vst [vmem:[%s17] sm:$0xff] %v16
  %s19 = scalar_lea.vmem %s4, 16
  %v20 = vld [vmem:[%s19] sm:$0xff]
  %s21 = scalar_lea.vmem %s1, 16
  %22 = vst [vmem:[%s21] sm:$0xff] %v20
  %s23 = scalar_lea.vmem %s4, 48
  %v24 = vld [vmem:[%s23] sm:$0xff]
  %s25 = scalar_lea.vmem %s1, 48
  %26 = vst [vmem:[%s25] sm:$0xff] %v24
  %s27 = scalar_lea.vmem %s4, 80
  %v28 = vld [vmem:[%s27] sm:$0xff]
  %s29 = scalar_lea.vmem %s1, 80
  %30 = vst [vmem:[%s29] sm:$0xff] %v28
  %s31 = scalar_lea.vmem %s4, 112
  %v32 = vld [vmem:[%s31] sm:$0xff]
  %s33 = scalar_lea.vmem %s1, 112
  %34 = vst [vmem:[%s33] sm:$0xff] %v32
  %s35 = scalar_lea.vmem %s4, 8
  %v36 = vld [vmem:[%s35] sm:$0xff]
  %s37 = scalar_lea.vmem %s1, 8
  %38 = vst [vmem:[%s37] sm:$0xff] %v36
  %s39 = scalar_lea.vmem %s4, 40
  %v40 = vld [vmem:[%s39] sm:$0xff]
  %s41 = scalar_lea.vmem %s1, 40
  %42 = vst [vmem:[%s41] sm:$0xff] %v40
  %s43 = scalar_lea.vmem %s4, 72
  %v44 = vld [vmem:[%s43] sm:$0xff]
  %s45 = scalar_lea.vmem %s1, 72
  %46 = vst [vmem:[%s45] sm:$0xff] %v44
  %s47 = scalar_lea.vmem %s4, 104
  %v48 = vld [vmem:[%s47] sm:$0xff]
  %s49 = scalar_lea.vmem %s1, 104
  %50 = vst [vmem:[%s49] sm:$0xff] %v48
  %s51 = scalar_lea.vmem %s4, 24
  %v52 = vld [vmem:[%s51] sm:$0xff]
  %s53 = scalar_lea.vmem %s1, 24
  %54 = vst [vmem:[%s53] sm:$0xff] %v52
  %s55 = scalar_lea.vmem %s4, 56
  %v56 = vld [vmem:[%s55] sm:$0xff]
  %s57 = scalar_lea.vmem %s1, 56
  %58 = vst [vmem:[%s57] sm:$0xff] %v56
  %s59 = scalar_lea.vmem %s4, 88
  %v60 = vld [vmem:[%s59] sm:$0xff]
  %s61 = scalar_lea.vmem %s1, 88
  %62 = vst [vmem:[%s61] sm:$0xff] %v60
  %s63 = scalar_lea.vmem %s4, 120
  %v64 = vld [vmem:[%s63] sm:$0xff]
  %s65 = scalar_lea.vmem %s1, 120
  %66 = vst [vmem:[%s65] sm:$0xff] %v64

// kernel: _lambda_.9
$region0: #{_lambda_.9}
  #allocation0 [shape = 'u32[]', space=smem, size = 0x4, offset = 0x4, fixed_abs, tag = 'smem constant byte address 0x4 - core index']
  #allocation1 [shape = 'u32[72,128]{1,0:T(1,128)}', space=vmem, size = 0x9000, scoped, tag = 'internal scratch']
  %s0 = inlined_call_operand.vmem [shape: bf16[8,288], index: 0, kind: input, shape index: {}]
  %s1 = inlined_call_operand.vmem [shape: bf16[8,8], index: 1, kind: input, shape index: {}]
  %s2 = inlined_call_operand.vmem [shape: f32[8,1], index: 2, kind: input, shape index: {}]
  %s3 = inlined_call_operand.vmem [shape: f32[8,288], index: 3, kind: output, shape index: {}]
  %s4 = sld [smem:[#allocation0]]
  $region22: #{_lambda_.9} parent=0
    _
  %s6 = ssub.s32 1, %s4
  %s7 = scalar_select 0, %s6, %s4
  // Predicated region
  $region2: #{_lambda_.9} parent=0 // pred_check
    _
  $region3: #{_lambda_.9} parent=0 // pred_check_branch
    %9 = sbr.rel (0) target = $region5
  $region4: #{_lambda_.9} parent=0 // pred_region
    _
  $region5: #{_lambda_.9} parent=0 // pred_fallthru
    _
  // Predicated region
  $region6: #{_lambda_.9} parent=0 // pred_check
    _
  $region7: #{_lambda_.9} parent=0 // pred_check_branch
    %11 = sbr.rel (0) target = $region9
  $region8: #{_lambda_.9} parent=0 // pred_region
    _
  $region9: #{_lambda_.9} parent=0 // pred_fallthru
    _
  // Predicated region
  $region10: #{_lambda_.9} parent=0 // pred_check
    _
  $region11: #{_lambda_.9} parent=0 // pred_check_branch
    %13 = sbr.rel (0) target = $region13
  $region12: #{_lambda_.9} parent=0 // pred_region
    _
  $region13: #{_lambda_.9} parent=0 // pred_fallthru
    _
  %v15 = vld [vmem:[%s1] sm:$0xf]
  %v16 = vld [vmem:[%s0] sm:$0xff]
  %v17 = vld [vmem:[%s0 + $0x8] sm:$0xf]
  %v18 = vld [vmem:[%s2] sm:$0xff]
  %20 = vset.pattern.permute.xlu0 0
  %21 = vperm.xlu0 %20, %v18
  %v22 = vpop.permute.xlu0 %21
  %v26 = vunpack.c.l.b16 %v16
  %v27 = vunpack.c.h.b16 %v16
  %v28 = vunpack.c.l.b16 %v17
  %v29 = vpack.c.b16 %v26, %v26
  %v30 = vpack.c.b16 %v27, %v27
  %v31 = vpack.c.b16 %v28, %v28
  %vm32 = vcmask 64512
  %v34 = vsel %vm32, %v15, 0
  %vm36 = vcmask 1043456
  %v38 = vsel %vm36, %v29, 0
  %v41 = vsel %vm36, %v30, 0
  %v44 = vsel %vm36, %v31, 0
  %46 = vmatpush.bf16.msra.mxu0 0
  %47 = vmatpush.bf16.msra.mxu0 0
  %48 = vmatpush.bf16.msra.mxu0 0
  %49 = vmatpush.bf16.msra.mxu0 0
  %50 = vmatpush.bf16.msra.mxu0 0
  %51 = vmatpush.bf16.msra.mxu0 0
  %52 = vmatpush.bf16.msra.mxu0 0
  %53 = vmatpush.bf16.msra.mxu0 %v38
  %54 = vmatmul.bf16.gmra.mxu0 %v34
  %v55 = vpop.f32.mrf.mxu0
  %v56 = vadd.f32 %v22, %v55
  %v57 = vpop.f32.mrf.mxu0
  %58 = vdwg.mxu0
  %59 = vmatpush.bf16.msra.mxu0 0
  %60 = vmatpush.bf16.msra.mxu0 0
  %61 = vmatpush.bf16.msra.mxu0 0
  %62 = vmatpush.bf16.msra.mxu0 0
  %63 = vmatpush.bf16.msra.mxu0 0
  %64 = vmatpush.bf16.msra.mxu0 0
  %65 = vmatpush.bf16.msra.mxu0 0
  %66 = vmatpush.bf16.msra.mxu0 %v41
  %67 = vmatmul.bf16.gmra.mxu0 %v34
  %v68 = vpop.f32.mrf.mxu0
  %v69 = vadd.f32 %v22, %v68
  %v70 = vpop.f32.mrf.mxu0
  %71 = vdwg.mxu0
  %72 = vmatpush.bf16.msra.mxu0 0
  %73 = vmatpush.bf16.msra.mxu0 0
  %74 = vmatpush.bf16.msra.mxu0 0
  %75 = vmatpush.bf16.msra.mxu0 0
  %76 = vmatpush.bf16.msra.mxu0 0
  %77 = vmatpush.bf16.msra.mxu0 0
  %78 = vmatpush.bf16.msra.mxu0 0
  %79 = vmatpush.bf16.msra.mxu0 %v44
  %80 = vmatmul.bf16.gmra.mxu0 %v34
  %v81 = vpop.f32.mrf.mxu0
  %v82 = vadd.f32 %v22, %v81
  %v83 = vpop.f32.mrf.mxu0
  %84 = vdwg.mxu0
  %v85 = vmax.f32 %v56, 0.0
  %v86 = vmax.f32 %v69, 0.0
  %v87 = vmax.f32 %v82, 0.0
  %88 = vst [vmem:[%s3] sm:$0xff] %v85
  %89 = vst [vmem:[%s3 + $0x8] sm:$0xff] %v86
  %vm90 = vcmask 261120
  %91 = vst.msk [vmem:[%s3 + $0x10] sm:$0xff] %vm90, %v87
  // Predicated region
  $region14: #{_lambda_.9} parent=0 // pred_check
    _
  $region15: #{_lambda_.9} parent=0 // pred_check_branch
    %93 = sbr.rel (0) target = $region17
  $region16: #{_lambda_.9} parent=0 // pred_region
    _
  $region17: #{_lambda_.9} parent=0 // pred_fallthru
    _
  // Predicated region
  $region18: #{_lambda_.9} parent=0 // pred_check
    _
  $region19: #{_lambda_.9} parent=0 // pred_check_branch
    %95 = sbr.rel (0) target = $region21
  $region20: #{_lambda_.9} parent=0 // pred_region
    _
  $region21: #{_lambda_.9} parent=0 // pred_fallthru
    _

// kernel: reverse.9
$region0: #{reverse.9}
  %s0 = inlined_call_operand.vmem [shape: f32[4,2,16,7], index: 0, kind: input, shape index: {}]
  %s1 = inlined_call_operand.vmem [shape: f32[4,2,16,7], index: 1, kind: output, shape index: {}]
  $region1: #{reverse.9} parent=0
    #allocation0 [shape = 'u8[65536]{0}', space=vmem, size = 0x10000, scoped, tag = 'operand span for operand 0']
    #allocation1 [shape = 'u8[32768]{0}', space=vmem, size = 0x8000, scoped, tag = 'operand span for operand 1']
    %s2 = scalar_lea.vmem [#allocation0], 8
    // Predicated region
    $region2: #{reverse.9} parent=1 // pred_check
      _
    $region3: #{reverse.9} parent=1 // pred_check_branch
      %4 = sbr.rel (0) target = $region5
    $region4: #{reverse.9} parent=1 // pred_region
      // Predicated region
      $region6: #{reverse.9} parent=4 // pred_check
        _
      $region7: #{reverse.9} parent=4 // pred_check_branch
        %6 = sbr.rel (0) target = $region9
      $region8: #{reverse.9} parent=4 // pred_region
        // Predicated region
        $region21: #{reverse.9} parent=8 // pred_check
          _
        $region22: #{reverse.9} parent=8 // pred_check_branch
          %36 = sbr.rel (0) target = $region24
        $region23: #{reverse.9} parent=8 // pred_region
          loop: start=0, step=1, limit=1
          $region25: #{reverse.9} parent=23 // loop_pre_header
            _
          $region26: #{reverse.9} parent=23 // loop_header
            %s38 = sphi 0, %s42
            %p39 = scmp.ge.s32.totalorder %s38, 1
            %s43 = sphi %s0, %s0
            %s44 = sphi %s2, %s2
          $region27: #{reverse.9} parent=23 // loop_header_branch
            %41 = sbr.rel (%p39) target = $region31
          $region28: #{reverse.9} parent=23 // loop_body
            %v45 = vld [vmem:[%s43] sm:$0xff]
            %46 = vst [vmem:[%s44] sm:$0xff] %v45
            %v47 = vld [vmem:[%s43 + $0x8] sm:$0xff]
            %48 = vst [vmem:[%s44 + $0x10] sm:$0xff] %v47
            %v49 = vld [vmem:[%s43 + $0x10] sm:$0xff]
            %50 = vst [vmem:[%s44 + $0x20] sm:$0xff] %v49
            %v51 = vld [vmem:[%s43 + $0x18] sm:$0xff]
            %52 = vst [vmem:[%s44 + $0x30] sm:$0xff] %v51
            %v53 = vld [vmem:[%s43 + $0x20] sm:$0xff]
            %54 = vst [vmem:[%s44 + $0x40] sm:$0xff] %v53
            %v55 = vld [vmem:[%s43 + $0x28] sm:$0xff]
            %56 = vst [vmem:[%s44 + $0x50] sm:$0xff] %v55
            %v57 = vld [vmem:[%s43 + $0x30] sm:$0xff]
            %58 = vst [vmem:[%s44 + $0x60] sm:$0xff] %v57
            %v59 = vld [vmem:[%s43 + $0x38] sm:$0xff]
            %60 = vst [vmem:[%s44 + $0x70] sm:$0xff] %v59
          $region29: #{reverse.9} parent=23 // loop_footer
            %s42 = sadd.s32 1, %s38
          $region30: #{reverse.9} parent=23 // loop_footer_branch
            %37 = sbr.rel target = $region26
          $region31: #{reverse.9} parent=23 // loop_exit
            _
        $region24: #{reverse.9} parent=8 // pred_fallthru
          _
        // Predicated region
        $region32: #{reverse.9} parent=8 // pred_check
          _
        $region33: #{reverse.9} parent=8 // pred_check_branch
          %62 = sbr.rel target = $region35
        $region34: #{reverse.9} parent=8 // pred_region
          _
        $region35: #{reverse.9} parent=8 // pred_fallthru
          _
      $region9: #{reverse.9} parent=4 // pred_fallthru
        _
      // Predicated region
      $region10: #{reverse.9} parent=4 // pred_check
        _
      $region11: #{reverse.9} parent=4 // pred_check_branch
        %8 = sbr.rel target = $region13
      $region12: #{reverse.9} parent=4 // pred_region
        %s10 = ssub.s32 256, 1
        loop: start=0, step=1, limit=1
        $region14: #{reverse.9} parent=12 // loop_pre_header
          _
        $region15: #{reverse.9} parent=12 // loop_header
          %s12 = sphi 0, %s16
          %p13 = scmp.ge.s32.totalorder %s12, 1
          %s17 = sphi %s0, %s0
          %s18 = sphi %s2, %s2
        $region16: #{reverse.9} parent=12 // loop_header_branch
          %15 = sbr.rel (%p13) target = $region20
        $region17: #{reverse.9} parent=12 // loop_body
          %v19 = vld [vmem:[%s17] sm:%s10]
          %20 = vst [vmem:[%s18] sm:%s10] %v19
          %v21 = vld [vmem:[%s17 + $0x8] sm:%s10]
          %22 = vst [vmem:[%s18 + $0x10] sm:%s10] %v21
          %v23 = vld [vmem:[%s17 + $0x10] sm:%s10]
          %24 = vst [vmem:[%s18 + $0x20] sm:%s10] %v23
          %v25 = vld [vmem:[%s17 + $0x18] sm:%s10]
          %26 = vst [vmem:[%s18 + $0x30] sm:%s10] %v25
          %v27 = vld [vmem:[%s17 + $0x20] sm:%s10]
          %28 = vst [vmem:[%s18 + $0x40] sm:%s10] %v27
          %v29 = vld [vmem:[%s17 + $0x28] sm:%s10]
          %30 = vst [vmem:[%s18 + $0x50] sm:%s10] %v29
          %v31 = vld [vmem:[%s17 + $0x30] sm:%s10]
          %32 = vst [vmem:[%s18 + $0x60] sm:%s10] %v31
          %v33 = vld [vmem:[%s17 + $0x38] sm:%s10]
          %34 = vst [vmem:[%s18 + $0x70] sm:%s10] %v33
        $region18: #{reverse.9} parent=12 // loop_footer
          %s16 = sadd.s32 1, %s12
        $region19: #{reverse.9} parent=12 // loop_footer_branch
          %11 = sbr.rel target = $region15
        $region20: #{reverse.9} parent=12 // loop_exit
          _
      $region13: #{reverse.9} parent=4 // pred_fallthru
        _
    $region5: #{reverse.9} parent=1 // pred_fallthru
      _
    %63 = vnop
    %s64 = scalar_lea.vmem [#allocation0], 7
    %v65 = vld [vmem:[%s64] ss:$-1 sm:$0xff]
    %v66 = vrot.slane %v65, 1
    %67 = vst [vmem:[#allocation1] sm:$0xff] %v66
    %s68 = scalar_lea.vmem [#allocation0], 8
    %s69 = scalar_lea.vmem %s68, 7 [#allocation0]
    %v70 = vld [vmem:[%s69] ss:$-1 sm:$0xff]
    %v71 = vrot.slane %v70, 1
    %v72 = vlaneseq
    %v73 = vshrl.u32 %v72, 7
    %vm74 = vcmp.lt.s32.totalorder %v73, 7
    %75 = vst.msk [vmem:[#allocation1] sm:$0xff] %vm74, %v71
    %s76 = scalar_lea.vmem [#allocation1], 8
    %s77 = scalar_lea.vmem [#allocation0], 16
    %s78 = scalar_lea.vmem %s77, 7 [#allocation0]
    %v79 = vld [vmem:[%s78] ss:$-1 sm:$0xff]
    %v80 = vrot.slane %v79, 1
    %81 = vst [vmem:[%s76] sm:$0xff] %v80
    %s82 = scalar_lea.vmem %s77, 8 [#allocation0]
    %s83 = scalar_lea.vmem %s82, 7 [#allocation0]
    %v84 = vld [vmem:[%s83] ss:$-1 sm:$0xff]
    %v85 = vrot.slane %v84, 1
    %v86 = vlaneseq
    %v87 = vshrl.u32 %v86, 7
    %vm88 = vcmp.lt.s32.totalorder %v87, 7
    %89 = vst.msk [vmem:[%s76] sm:$0xff] %vm88, %v85
    %s90 = scalar_lea.vmem [#allocation1], 16
    %s91 = scalar_lea.vmem [#allocation0], 32
    %s92 = scalar_lea.vmem %s91, 7 [#allocation0]
    %v93 = vld [vmem:[%s92] ss:$-1 sm:$0xff]
    %v94 = vrot.slane %v93, 1
    %95 = vst [vmem:[%s90] sm:$0xff] %v94
    %s96 = scalar_lea.vmem %s91, 8 [#allocation0]
    %s97 = scalar_lea.vmem %s96, 7 [#allocation0]
    %v98 = vld [vmem:[%s97] ss:$-1 sm:$0xff]
    %v99 = vrot.slane %v98, 1
    %v100 = vlaneseq
    %v101 = vshrl.u32 %v100, 7
    %vm102 = vcmp.lt.s32.totalorder %v101, 7
    %103 = vst.msk [vmem:[%s90] sm:$0xff] %vm102, %v99
    %s104 = scalar_lea.vmem [#allocation1], 24
    %s105 = scalar_lea.vmem [#allocation0], 48
    %s106 = scalar_lea.vmem %s105, 7 [#allocation0]
    %v107 = vld [vmem:[%s106] ss:$-1 sm:$0xff]
    %v108 = vrot.slane %v107, 1
    %109 = vst [vmem:[%s104] sm:$0xff] %v108
    %s110 = scalar_lea.vmem %s105, 8 [#allocation0]
    %s111 = scalar_lea.vmem %s110, 7 [#allocation0]
    %v112 = vld [vmem:[%s111] ss:$-1 sm:$0xff]
    %v113 = vrot.slane %v112, 1
    %v114 = vlaneseq
    %v115 = vshrl.u32 %v114, 7
    %vm116 = vcmp.lt.s32.totalorder %v115, 7
    %117 = vst.msk [vmem:[%s104] sm:$0xff] %vm116, %v113
    %s118 = scalar_lea.vmem [#allocation1], 32
    %s119 = scalar_lea.vmem [#allocation0], 64
    %s120 = scalar_lea.vmem %s119, 7 [#allocation0]
    %v121 = vld [vmem:[%s120] ss:$-1 sm:$0xff]
    %v122 = vrot.slane %v121, 1
    %123 = vst [vmem:[%s118] sm:$0xff] %v122
    %s124 = scalar_lea.vmem %s119, 8 [#allocation0]
    %s125 = scalar_lea.vmem %s124, 7 [#allocation0]
    %v126 = vld [vmem:[%s125] ss:$-1 sm:$0xff]
    %v127 = vrot.slane %v126, 1
    %v128 = vlaneseq
    %v129 = vshrl.u32 %v128, 7
    %vm130 = vcmp.lt.s32.totalorder %v129, 7
    %131 = vst.msk [vmem:[%s118] sm:$0xff] %vm130, %v127
    %s132 = scalar_lea.vmem [#allocation1], 40
    %s133 = scalar_lea.vmem [#allocation0], 80
    %s134 = scalar_lea.vmem %s133, 7 [#allocation0]
    %v135 = vld [vmem:[%s134] ss:$-1 sm:$0xff]
    %v136 = vrot.slane %v135, 1
    %137 = vst [vmem:[%s132] sm:$0xff] %v136
    %s138 = scalar_lea.vmem %s133, 8 [#allocation0]
    %s139 = scalar_lea.vmem %s138, 7 [#allocation0]
    %v140 = vld [vmem:[%s139] ss:$-1 sm:$0xff]
    %v141 = vrot.slane %v140, 1
    %v142 = vlaneseq
    %v143 = vshrl.u32 %v142, 7
    %vm144 = vcmp.lt.s32.totalorder %v143, 7
    %145 = vst.msk [vmem:[%s132] sm:$0xff] %vm144, %v141
    %s146 = scalar_lea.vmem [#allocation1], 48
    %s147 = scalar_lea.vmem [#allocation0], 96
    %s148 = scalar_lea.vmem %s147, 7 [#allocation0]
    %v149 = vld [vmem:[%s148] ss:$-1 sm:$0xff]
    %v150 = vrot.slane %v149, 1
    %151 = vst [vmem:[%s146] sm:$0xff] %v150
    %s152 = scalar_lea.vmem %s147, 8 [#allocation0]
    %s153 = scalar_lea.vmem %s152, 7 [#allocation0]
    %v154 = vld [vmem:[%s153] ss:$-1 sm:$0xff]
    %v155 = vrot.slane %v154, 1
    %v156 = vlaneseq
    %v157 = vshrl.u32 %v156, 7
    %vm158 = vcmp.lt.s32.totalorder %v157, 7
    %159 = vst.msk [vmem:[%s146] sm:$0xff] %vm158, %v155
    %s160 = scalar_lea.vmem [#allocation1], 56
    %s161 = scalar_lea.vmem [#allocation0], 112
    %s162 = scalar_lea.vmem %s161, 7 [#allocation0]
    %v163 = vld [vmem:[%s162] ss:$-1 sm:$0xff]
    %v164 = vrot.slane %v163, 1
    %165 = vst [vmem:[%s160] sm:$0xff] %v164
    %s166 = scalar_lea.vmem %s161, 8 [#allocation0]
    %s167 = scalar_lea.vmem %s166, 7 [#allocation0]
    %v168 = vld [vmem:[%s167] ss:$-1 sm:$0xff]
    %v169 = vrot.slane %v168, 1
    %v170 = vlaneseq
    %v171 = vshrl.u32 %v170, 7
    %vm172 = vcmp.lt.s32.totalorder %v171, 7
    %173 = vst.msk [vmem:[%s160] sm:$0xff] %vm172, %v169
    // Predicated region
    $region36: #{reverse.9} parent=1 // pred_check
      _
    $region37: #{reverse.9} parent=1 // pred_check_branch
      %175 = sbr.rel (0) target = $region39
    $region38: #{reverse.9} parent=1 // pred_region
      // Predicated region
      $region40: #{reverse.9} parent=38 // pred_check
        _
      $region41: #{reverse.9} parent=38 // pred_check_branch
        %177 = sbr.rel (0) target = $region43
      $region42: #{reverse.9} parent=38 // pred_region
        // Predicated region
        $region55: #{reverse.9} parent=42 // pred_check
          _
        $region56: #{reverse.9} parent=42 // pred_check_branch
          %207 = sbr.rel (0) target = $region58
        $region57: #{reverse.9} parent=42 // pred_region
          loop: start=0, step=1, limit=1
          $region59: #{reverse.9} parent=57 // loop_pre_header
            _
          $region60: #{reverse.9} parent=57 // loop_header
            %s209 = sphi 0, %s213
            %p210 = scmp.ge.s32.totalorder %s209, 1
            %s214 = sphi [#allocation1], [#allocation1]
            %s215 = sphi %s1, %s1
          $region61: #{reverse.9} parent=57 // loop_header_branch
            %212 = sbr.rel (%p210) target = $region65
          $region62: #{reverse.9} parent=57 // loop_body
            %v216 = vld [vmem:[%s214] sm:$0xff]
            %217 = vst [vmem:[%s215] sm:$0xff] %v216
            %v218 = vld [vmem:[%s214 + $0x8] sm:$0xff]
            %219 = vst [vmem:[%s215 + $0x8] sm:$0xff] %v218
            %v220 = vld [vmem:[%s214 + $0x10] sm:$0xff]
            %221 = vst [vmem:[%s215 + $0x10] sm:$0xff] %v220
            %v222 = vld [vmem:[%s214 + $0x18] sm:$0xff]
            %223 = vst [vmem:[%s215 + $0x18] sm:$0xff] %v222
            %v224 = vld [vmem:[%s214 + $0x20] sm:$0xff]
            %225 = vst [vmem:[%s215 + $0x20] sm:$0xff] %v224
            %v226 = vld [vmem:[%s214 + $0x28] sm:$0xff]
            %227 = vst [vmem:[%s215 + $0x28] sm:$0xff] %v226
            %v228 = vld [vmem:[%s214 + $0x30] sm:$0xff]
            %229 = vst [vmem:[%s215 + $0x30] sm:$0xff] %v228
            %v230 = vld [vmem:[%s214 + $0x38] sm:$0xff]
            %231 = vst [vmem:[%s215 + $0x38] sm:$0xff] %v230
          $region63: #{reverse.9} parent=57 // loop_footer
            %s213 = sadd.s32 1, %s209
          $region64: #{reverse.9} parent=57 // loop_footer_branch
            %208 = sbr.rel target = $region60
          $region65: #{reverse.9} parent=57 // loop_exit
            _
        $region58: #{reverse.9} parent=42 // pred_fallthru
          _
        // Predicated region
        $region66: #{reverse.9} parent=42 // pred_check
          _
        $region67: #{reverse.9} parent=42 // pred_check_branch
          %233 = sbr.rel target = $region69
        $region68: #{reverse.9} parent=42 // pred_region
          _
        $region69: #{reverse.9} parent=42 // pred_fallthru
          _
      $region43: #{reverse.9} parent=38 // pred_fallthru
        _
      // Predicated region
      $region44: #{reverse.9} parent=38 // pred_check
        _
      $region45: #{reverse.9} parent=38 // pred_check_branch
        %179 = sbr.rel target = $region47
      $region46: #{reverse.9} parent=38 // pred_region
        %s181 = ssub.s32 256, 1
        loop: start=0, step=1, limit=1
        $region48: #{reverse.9} parent=46 // loop_pre_header
          _
        $region49: #{reverse.9} parent=46 // loop_header
          %s183 = sphi 0, %s187
          %p184 = scmp.ge.s32.totalorder %s183, 1
          %s188 = sphi [#allocation1], [#allocation1]
          %s189 = sphi %s1, %s1
        $region50: #{reverse.9} parent=46 // loop_header_branch
          %186 = sbr.rel (%p184) target = $region54
        $region51: #{reverse.9} parent=46 // loop_body
          %v190 = vld [vmem:[%s188] sm:%s181]
          %191 = vst [vmem:[%s189] sm:%s181] %v190
          %v192 = vld [vmem:[%s188 + $0x8] sm:%s181]
          %193 = vst [vmem:[%s189 + $0x8] sm:%s181] %v192
          %v194 = vld [vmem:[%s188 + $0x10] sm:%s181]
          %195 = vst [vmem:[%s189 + $0x10] sm:%s181] %v194
          %v196 = vld [vmem:[%s188 + $0x18] sm:%s181]
          %197 = vst [vmem:[%s189 + $0x18] sm:%s181] %v196
          %v198 = vld [vmem:[%s188 + $0x20] sm:%s181]
          %199 = vst [vmem:[%s189 + $0x20] sm:%s181] %v198
          %v200 = vld [vmem:[%s188 + $0x28] sm:%s181]
          %201 = vst [vmem:[%s189 + $0x28] sm:%s181] %v200
          %v202 = vld [vmem:[%s188 + $0x30] sm:%s181]
          %203 = vst [vmem:[%s189 + $0x30] sm:%s181] %v202
          %v204 = vld [vmem:[%s188 + $0x38] sm:%s181]
          %205 = vst [vmem:[%s189 + $0x38] sm:%s181] %v204
        $region52: #{reverse.9} parent=46 // loop_footer
          %s187 = sadd.s32 1, %s183
        $region53: #{reverse.9} parent=46 // loop_footer_branch
          %182 = sbr.rel target = $region49
        $region54: #{reverse.9} parent=46 // loop_exit
          _
      $region47: #{reverse.9} parent=38 // pred_fallthru
        _
    $region39: #{reverse.9} parent=1 // pred_fallthru
      _
    %234 = vnop

// kernel: _lambda_.11
$region0: #{_lambda_.11}
  #allocation0 [shape = 'u32[]', space=smem, size = 0x4, offset = 0x4, fixed_abs, tag = 'smem constant byte address 0x4 - core index']
  #allocation1 [shape = 'u32[72,128]{1,0:T(1,128)}', space=vmem, size = 0x9000, scoped, tag = 'internal scratch']
  %s0 = inlined_call_operand.vmem [shape: bf16[144,512], index: 0, kind: input, shape index: {}]
  %s1 = inlined_call_operand.vmem [shape: bf16[16,144], index: 1, kind: input, shape index: {}]
  %s2 = inlined_call_operand.vmem [shape: f32[4,512], index: 2, kind: input, shape index: {}]
  %s3 = inlined_call_operand.vmem [shape: f32[4,512], index: 3, kind: input, shape index: {}]
  %s4 = inlined_call_operand.vmem [shape: f32[4,512], index: 4, kind: input, shape index: {}]
  %s5 = inlined_call_operand.vmem [shape: bf16[8,4], index: 5, kind: input, shape index: {}]
  %s6 = inlined_call_operand.vmem [shape: f32[8,1], index: 6, kind: input, shape index: {}]
  %s7 = inlined_call_operand.vmem [shape: f32[8,1], index: 7, kind: input, shape index: {}]
  %s8 = inlined_call_operand.vmem [shape: f32[8,512], index: 8, kind: output, shape index: {0}]
  %s9 = inlined_call_operand.vmem [shape: f32[8,512], index: 9, kind: output, shape index: {1}]
  %10 = xla_tuple %s8, %s9
  %s11 = sld [smem:[#allocation0]]
  $region111: #{_lambda_.11} parent=0
    _
  %s13 = ssub.s32 1, %s11
  %s14 = scalar_select 0, %s13, %s11
  $region1: #{_lambda_.11} parent=0
    #allocation2 [shape = 'u8[147456]{0}', space=vmem, size = 0x24000, scoped, tag = 'input window, operand 0']
    loop: start=0, step=1, limit=4
    $region2: #{_lambda_.11} parent=1 // loop_pre_header
      _
    $region3: #{_lambda_.11} parent=1 // loop_header
      %s16 = sphi 0, %s20
      %p17 = scmp.ge.s32.totalorder %s16, 4
      %s26 = sphi 0, %s28
      %s29 = sphi 0, %s26
      %s30 = sphi 0, %s29
      %s46 = sphi 0, %s30
      %s50 = sphi 0, %s50
      %s52 = sphi 0, %s50
      %s53 = sphi 0, %s52
      %s67 = sphi 0, %s53
      %s73 = sphi 0, %s75
      %s76 = sphi 0, %s73
      %s77 = sphi 0, %s76
      %s93 = sphi 0, %s77
      %s99 = sphi 0, %s101
      %s102 = sphi 0, %s99
      %s103 = sphi 0, %s102
      %s119 = sphi 0, %s103
      %s125 = sphi 0, %s127
      %s128 = sphi 0, %s125
      %s129 = sphi 0, %s128
      %s145 = sphi 0, %s129
      %s149 = sphi 0, %s149
      %s151 = sphi 0, %s149
      %s152 = sphi 0, %s151
      %s166 = sphi 0, %s152
      %s170 = sphi 0, %s170
      %s172 = sphi 0, %s170
      %s173 = sphi 0, %s172
      %s187 = sphi 0, %s173
      %s191 = sphi 0, %s191
      %s193 = sphi 0, %s191
      %s194 = sphi 0, %s193
      %s208 = sphi 0, %s194
      %s214 = sphi 0, %s216
      %s217 = sphi 0, %s214
      %s218 = sphi 0, %s217
      %s234 = sphi 0, %s218
      %s240 = sphi 0, %s242
      %s243 = sphi 0, %s240
      %s244 = sphi 0, %s243
      %s260 = sphi 0, %s244
    $region4: #{_lambda_.11} parent=1 // loop_header_branch
      %19 = sbr.rel (%p17) target = $region8
    $region5: #{_lambda_.11} parent=1 // loop_body
      %s21 = ssub.s32 %s16, 1
      %s22 = ssub.s32 %s16, 2
      %s23 = sadd.s32 %s16, 1
      %s24 = ssub.s32 %s16, %s23
      %p25 = scmp.eq.s32.totalorder %s24, 0
      %s27 = sadd.s32 %s26, 1
      %s28 = scalar_select %p25, %s26, %s27
      %p31 = pneg %p25
      %p32 = scmp.eq.s32.totalorder %s16, 1
      %p33 = por %p31, %p32
      %p34 = scmp.ne.s32.totalorder %s26, %s29
      %p35 = scmp.eq.s32.totalorder %s16, 0
      %p36 = por %p34, %p35
      %p37 = scmp.ne.s32.totalorder %s26, %s29
      %p38 = scmp.eq.s32.totalorder %s21, 1
      %p39 = por %p37, %p38
      %p40 = scmp.ne.s32.totalorder %s29, %s30
      %p41 = scmp.eq.s32.totalorder %s21, 0
      %p42 = por %p40, %p41
      %p43 = scmp.ne.s32.totalorder %s29, %s30
      %p44 = scmp.eq.s32.totalorder %s22, 1
      %p45 = por %p43, %p44
      %p47 = scmp.ne.s32.totalorder %s30, %s46
      %p48 = scmp.eq.s32.totalorder %s22, 0
      %p49 = por %p47, %p48
      %s51 = sadd.s32 %s50, 1
      %p54 = scmp.eq.s32.totalorder %s16, 1
      %p55 = scmp.ne.s32.totalorder %s50, %s52
      %p56 = scmp.eq.s32.totalorder %s16, 0
      %p57 = por %p55, %p56
      %p58 = scmp.ne.s32.totalorder %s50, %s52
      %p59 = scmp.eq.s32.totalorder %s21, 1
      %p60 = por %p58, %p59
      %p61 = scmp.ne.s32.totalorder %s52, %s53
      %p62 = scmp.eq.s32.totalorder %s21, 0
      %p63 = por %p61, %p62
      %p64 = scmp.ne.s32.totalorder %s52, %s53
      %p65 = scmp.eq.s32.totalorder %s22, 1
      %p66 = por %p64, %p65
      %p68 = scmp.ne.s32.totalorder %s53, %s67
      %p69 = scmp.eq.s32.totalorder %s22, 0
      %p70 = por %p68, %p69
      %s71 = ssub.s32 %s16, %s23
      %p72 = scmp.eq.s32.totalorder %s71, 0
      %s74 = sadd.s32 %s73, 1
      %s75 = scalar_select %p72, %s73, %s74
      %p78 = pneg %p72
      %p79 = scmp.eq.s32.totalorder %s16, 1
      %p80 = por %p78, %p79
      %p81 = scmp.ne.s32.totalorder %s73, %s76
      %p82 = scmp.eq.s32.totalorder %s16, 0
      %p83 = por %p81, %p82
      %p84 = scmp.ne.s32.totalorder %s73, %s76
      %p85 = scmp.eq.s32.totalorder %s21, 1
      %p86 = por %p84, %p85
      %p87 = scmp.ne.s32.totalorder %s76, %s77
      %p88 = scmp.eq.s32.totalorder %s21, 0
      %p89 = por %p87, %p88
      %p90 = scmp.ne.s32.totalorder %s76, %s77
      %p91 = scmp.eq.s32.totalorder %s22, 1
      %p92 = por %p90, %p91
      %p94 = scmp.ne.s32.totalorder %s77, %s93
      %p95 = scmp.eq.s32.totalorder %s22, 0
      %p96 = por %p94, %p95
      %s97 = ssub.s32 %s16, %s23
      %p98 = scmp.eq.s32.totalorder %s97, 0
      %s100 = sadd.s32 %s99, 1
      %s101 = scalar_select %p98, %s99, %s100
      %p104 = pneg %p98
      %p105 = scmp.eq.s32.totalorder %s16, 1
      %p106 = por %p104, %p105
      %p107 = scmp.ne.s32.totalorder %s99, %s102
      %p108 = scmp.eq.s32.totalorder %s16, 0
      %p109 = por %p107, %p108
      %p110 = scmp.ne.s32.totalorder %s99, %s102
      %p111 = scmp.eq.s32.totalorder %s21, 1
      %p112 = por %p110, %p111
      %p113 = scmp.ne.s32.totalorder %s102, %s103
      %p114 = scmp.eq.s32.totalorder %s21, 0
      %p115 = por %p113, %p114
      %p116 = scmp.ne.s32.totalorder %s102, %s103
      %p117 = scmp.eq.s32.totalorder %s22, 1
      %p118 = por %p116, %p117
      %p120 = scmp.ne.s32.totalorder %s103, %s119
      %p121 = scmp.eq.s32.totalorder %s22, 0
      %p122 = por %p120, %p121
      %s123 = ssub.s32 %s16, %s23
      %p124 = scmp.eq.s32.totalorder %s123, 0
      %s126 = sadd.s32 %s125, 1
      %s127 = scalar_select %p124, %s125, %s126
      %p130 = pneg %p124
      %p131 = scmp.eq.s32.totalorder %s16, 1
      %p132 = por %p130, %p131
      %p133 = scmp.ne.s32.totalorder %s125, %s128
      %p134 = scmp.eq.s32.totalorder %s16, 0
      %p135 = por %p133, %p134
      %p136 = scmp.ne.s32.totalorder %s125, %s128
      %p137 = scmp.eq.s32.totalorder %s21, 1
      %p138 = por %p136, %p137
      %p139 = scmp.ne.s32.totalorder %s128, %s129
      %p140 = scmp.eq.s32.totalorder %s21, 0
      %p141 = por %p139, %p140
      %p142 = scmp.ne.s32.totalorder %s128, %s129
      %p143 = scmp.eq.s32.totalorder %s22, 1
      %p144 = por %p142, %p143
      %p146 = scmp.ne.s32.totalorder %s129, %s145
      %p147 = scmp.eq.s32.totalorder %s22, 0
      %p148 = por %p146, %p147
      %s150 = sadd.s32 %s149, 1
      %p153 = scmp.eq.s32.totalorder %s16, 1
      %p154 = scmp.ne.s32.totalorder %s149, %s151
      %p155 = scmp.eq.s32.totalorder %s16, 0
      %p156 = por %p154, %p155
      %p157 = scmp.ne.s32.totalorder %s149, %s151
      %p158 = scmp.eq.s32.totalorder %s21, 1
      %p159 = por %p157, %p158
      %p160 = scmp.ne.s32.totalorder %s151, %s152
      %p161 = scmp.eq.s32.totalorder %s21, 0
      %p162 = por %p160, %p161
      %p163 = scmp.ne.s32.totalorder %s151, %s152
      %p164 = scmp.eq.s32.totalorder %s22, 1
      %p165 = por %p163, %p164
      %p167 = scmp.ne.s32.totalorder %s152, %s166
      %p168 = scmp.eq.s32.totalorder %s22, 0
      %p169 = por %p167, %p168
      %s171 = sadd.s32 %s170, 1
      %p174 = scmp.eq.s32.totalorder %s16, 1
      %p175 = scmp.ne.s32.totalorder %s170, %s172
      %p176 = scmp.eq.s32.totalorder %s16, 0
      %p177 = por %p175, %p176
      %p178 = scmp.ne.s32.totalorder %s170, %s172
      %p179 = scmp.eq.s32.totalorder %s21, 1
      %p180 = por %p178, %p179
      %p181 = scmp.ne.s32.totalorder %s172, %s173
      %p182 = scmp.eq.s32.totalorder %s21, 0
      %p183 = por %p181, %p182
      %p184 = scmp.ne.s32.totalorder %s172, %s173
      %p185 = scmp.eq.s32.totalorder %s22, 1
      %p186 = por %p184, %p185
      %p188 = scmp.ne.s32.totalorder %s173, %s187
      %p189 = scmp.eq.s32.totalorder %s22, 0
      %p190 = por %p188, %p189
      %s192 = sadd.s32 %s191, 1
      %p195 = scmp.eq.s32.totalorder %s16, 1
      %p196 = scmp.ne.s32.totalorder %s191, %s193
      %p197 = scmp.eq.s32.totalorder %s16, 0
      %p198 = por %p196, %p197
      %p199 = scmp.ne.s32.totalorder %s191, %s193
      %p200 = scmp.eq.s32.totalorder %s21, 1
      %p201 = por %p199, %p200
      %p202 = scmp.ne.s32.totalorder %s193, %s194
      %p203 = scmp.eq.s32.totalorder %s21, 0
      %p204 = por %p202, %p203
      %p205 = scmp.ne.s32.totalorder %s193, %s194
      %p206 = scmp.eq.s32.totalorder %s22, 1
      %p207 = por %p205, %p206
      %p209 = scmp.ne.s32.totalorder %s194, %s208
      %p210 = scmp.eq.s32.totalorder %s22, 0
      %p211 = por %p209, %p210
      %s212 = ssub.s32 %s16, %s23
      %p213 = scmp.eq.s32.totalorder %s212, 0
      %s215 = sadd.s32 %s214, 1
      %s216 = scalar_select %p213, %s214, %s215
      %p219 = pneg %p213
      %p220 = scmp.eq.s32.totalorder %s16, 1
      %p221 = por %p219, %p220
      %p222 = scmp.ne.s32.totalorder %s214, %s217
      %p223 = scmp.eq.s32.totalorder %s16, 0
      %p224 = por %p222, %p223
      %p225 = scmp.ne.s32.totalorder %s214, %s217
      %p226 = scmp.eq.s32.totalorder %s21, 1
      %p227 = por %p225, %p226
      %p228 = scmp.ne.s32.totalorder %s217, %s218
      %p229 = scmp.eq.s32.totalorder %s21, 0
      %p230 = por %p228, %p229
      %p231 = scmp.ne.s32.totalorder %s217, %s218
      %p232 = scmp.eq.s32.totalorder %s22, 1
      %p233 = por %p231, %p232
      %p235 = scmp.ne.s32.totalorder %s218, %s234
      %p236 = scmp.eq.s32.totalorder %s22, 0
      %p237 = por %p235, %p236
      %s238 = ssub.s32 %s16, %s23
      %p239 = scmp.eq.s32.totalorder %s238, 0
      %s241 = sadd.s32 %s240, 1
      %s242 = scalar_select %p239, %s240, %s241
      %p245 = pneg %p239
      %p246 = scmp.eq.s32.totalorder %s16, 1
      %p247 = por %p245, %p246
      %p248 = scmp.ne.s32.totalorder %s240, %s243
      %p249 = scmp.eq.s32.totalorder %s16, 0
      %p250 = por %p248, %p249
      %p251 = scmp.ne.s32.totalorder %s240, %s243
      %p252 = scmp.eq.s32.totalorder %s21, 1
      %p253 = por %p251, %p252
      %p254 = scmp.ne.s32.totalorder %s243, %s244
      %p255 = scmp.eq.s32.totalorder %s21, 0
      %p256 = por %p254, %p255
      %p257 = scmp.ne.s32.totalorder %s243, %s244
      %p258 = scmp.eq.s32.totalorder %s22, 1
      %p259 = por %p257, %p258
      %p261 = scmp.ne.s32.totalorder %s244, %s260
      %p262 = scmp.eq.s32.totalorder %s22, 0
      %p263 = por %p261, %p262
      %p264 = scmp.le.s32.totalorder 1, %s16
      %p265 = scmp.lt.s32.totalorder %s16, 3
      %p266 = pnand %p264, %p265
      %p267 = pneg %p266
      // Predicated region
      $region9: #{_lambda_.11} parent=5 // pred_check
        _
      $region10: #{_lambda_.11} parent=5 // pred_check_branch
        %269 = sbr.rel (%p266) target = $region12
      $region11: #{_lambda_.11} parent=5 // pred_region
        %s270 = ssub.s32 %s16, 1
        // Predicated region
        $region13: #{_lambda_.11} parent=11 // pred_check
          %p271 = pneg %p63
        $region14: #{_lambda_.11} parent=11 // pred_check_branch
          %273 = sbr.rel (%p271) target = $region16
        $region15: #{_lambda_.11} parent=11 // pred_region
          _
        $region16: #{_lambda_.11} parent=11 // pred_fallthru
          _
        // Predicated region
        $region17: #{_lambda_.11} parent=11 // pred_check
          %p274 = pneg %p162
        $region18: #{_lambda_.11} parent=11 // pred_check_branch
          %276 = sbr.rel (%p274) target = $region20
        $region19: #{_lambda_.11} parent=11 // pred_region
          _
        $region20: #{_lambda_.11} parent=11 // pred_fallthru
          _
        // Predicated region
        $region21: #{_lambda_.11} parent=11 // pred_check
          %p277 = pneg %p183
        $region22: #{_lambda_.11} parent=11 // pred_check_branch
          %279 = sbr.rel (%p277) target = $region24
        $region23: #{_lambda_.11} parent=11 // pred_region
          _
        $region24: #{_lambda_.11} parent=11 // pred_fallthru
          _
        // Predicated region
        $region25: #{_lambda_.11} parent=11 // pred_check
          %p280 = pneg %p204
        $region26: #{_lambda_.11} parent=11 // pred_check_branch
          %282 = sbr.rel (%p280) target = $region28
        $region27: #{_lambda_.11} parent=11 // pred_region
          _
        $region28: #{_lambda_.11} parent=11 // pred_fallthru
          _
      $region12: #{_lambda_.11} parent=5 // pred_fallthru
        _
      %p283 = scmp.lt.s32.totalorder %s16, 2
      // Predicated region
      $region29: #{_lambda_.11} parent=5 // pred_check
        %p284 = pneg %p283
      $region30: #{_lambda_.11} parent=5 // pred_check_branch
        %286 = sbr.rel (%p284) target = $region32
      $region31: #{_lambda_.11} parent=5 // pred_region
        // Predicated region
        $region33: #{_lambda_.11} parent=31 // pred_check
          %p287 = pneg %p36
        $region34: #{_lambda_.11} parent=31 // pred_check_branch
          %289 = sbr.rel (%p287) target = $region36
        $region35: #{_lambda_.11} parent=31 // pred_region
          %s290 = sand.u32 %s26, 1
          %s291 = sand.u32 %s26, 1
          %s292 = smul.addr %s291, 144
          %s293 = scalar_lea.vmem [#allocation2], %s292
          %s294 = smul.u32 2, %s16
          %s295 = smul.addr %s294, 4
          %s296 = scalar_lea.vmem %s0, %s295
          // Predicated region
          $region37: #{_lambda_.11} parent=35 // pred_check
            _
          $region38: #{_lambda_.11} parent=35 // pred_check_branch
            %298 = sbr.rel (0) target = $region40
          $region39: #{_lambda_.11} parent=35 // pred_region
            // Predicated region
            $region41: #{_lambda_.11} parent=39 // pred_check
              _
            $region42: #{_lambda_.11} parent=39 // pred_check_branch
              %300 = sbr.rel (0) target = $region44
            $region43: #{_lambda_.11} parent=39 // pred_region
              // Predicated region
              $region56: #{_lambda_.11} parent=43 // pred_check
                _
              $region57: #{_lambda_.11} parent=43 // pred_check_branch
                %350 = sbr.rel (0) target = $region59
              $region58: #{_lambda_.11} parent=43 // pred_region
                loop: start=0, step=1, limit=1
                $region60: #{_lambda_.11} parent=58 // loop_pre_header
                  _
                $region61: #{_lambda_.11} parent=58 // loop_header
                  %s352 = sphi 0, %s356
                  %p353 = scmp.ge.s32.totalorder %s352, 1
                  %s357 = sphi %s296, %s296
                  %s358 = sphi %s293, %s293
                $region62: #{_lambda_.11} parent=58 // loop_header_branch
                  %355 = sbr.rel (%p353) target = $region66
                $region63: #{_lambda_.11} parent=58 // loop_body
                  %v359 = vld [vmem:[%s357] sm:$0xff]
                  %360 = vst [vmem:[%s358] sm:$0xff] %v359
                  %v361 = vld [vmem:[%s357 + $0x10] sm:$0xff]
                  %362 = vst [vmem:[%s358 + $0x8] sm:$0xff] %v361
                  %v363 = vld [vmem:[%s357 + $0x20] sm:$0xff]
                  %364 = vst [vmem:[%s358 + $0x10] sm:$0xff] %v363
                  %v365 = vld [vmem:[%s357 + $0x30] sm:$0xff]
                  %366 = vst [vmem:[%s358 + $0x18] sm:$0xff] %v365
                  %v367 = vld [vmem:[%s357 + $0x40] sm:$0xff]
                  %368 = vst [vmem:[%s358 + $0x20] sm:$0xff] %v367
                  %v369 = vld [vmem:[%s357 + $0x50] sm:$0xff]
                  %370 = vst [vmem:[%s358 + $0x28] sm:$0xff] %v369
                  %v371 = vld [vmem:[%s357 + $0x60] sm:$0xff]
                  %372 = vst [vmem:[%s358 + $0x30] sm:$0xff] %v371
                  %v373 = vld [vmem:[%s357 + $0x70] sm:$0xff]
                  %374 = vst [vmem:[%s358 + $0x38] sm:$0xff] %v373
                  %v375 = vld [vmem:[%s357 + $0x80] sm:$0xff]
                  %376 = vst [vmem:[%s358 + $0x40] sm:$0xff] %v375
                  %v377 = vld [vmem:[%s357 + $0x90] sm:$0xff]
                  %378 = vst [vmem:[%s358 + $0x48] sm:$0xff] %v377
                  %v379 = vld [vmem:[%s357 + $0xa0] sm:$0xff]
                  %380 = vst [vmem:[%s358 + $0x50] sm:$0xff] %v379
                  %v381 = vld [vmem:[%s357 + $0xb0] sm:$0xff]
                  %382 = vst [vmem:[%s358 + $0x58] sm:$0xff] %v381
                  %v383 = vld [vmem:[%s357 + $0xc0] sm:$0xff]
                  %384 = vst [vmem:[%s358 + $0x60] sm:$0xff] %v383
                  %v385 = vld [vmem:[%s357 + $0xd0] sm:$0xff]
                  %386 = vst [vmem:[%s358 + $0x68] sm:$0xff] %v385
                  %v387 = vld [vmem:[%s357 + $0xe0] sm:$0xff]
                  %388 = vst [vmem:[%s358 + $0x70] sm:$0xff] %v387
                  %v389 = vld [vmem:[%s357 + $0xf0] sm:$0xff]
                  %390 = vst [vmem:[%s358 + $0x78] sm:$0xff] %v389
                  %v391 = vld [vmem:[%s357 + $0x100] sm:$0xff]
                  %392 = vst [vmem:[%s358 + $0x80] sm:$0xff] %v391
                  %v393 = vld [vmem:[%s357 + $0x110] sm:$0xff]
                  %394 = vst [vmem:[%s358 + $0x88] sm:$0xff] %v393
                $region64: #{_lambda_.11} parent=58 // loop_footer
                  %s356 = sadd.s32 1, %s352
                $region65: #{_lambda_.11} parent=58 // loop_footer_branch
                  %351 = sbr.rel target = $region61
                $region66: #{_lambda_.11} parent=58 // loop_exit
                  _
              $region59: #{_lambda_.11} parent=43 // pred_fallthru
                _
              // Predicated region
              $region67: #{_lambda_.11} parent=43 // pred_check
                _
              $region68: #{_lambda_.11} parent=43 // pred_check_branch
                %396 = sbr.rel target = $region70
              $region69: #{_lambda_.11} parent=43 // pred_region
                _
              $region70: #{_lambda_.11} parent=43 // pred_fallthru
                _
            $region44: #{_lambda_.11} parent=39 // pred_fallthru
              _
            // Predicated region
            $region45: #{_lambda_.11} parent=39 // pred_check
              _
            $region46: #{_lambda_.11} parent=39 // pred_check_branch
              %302 = sbr.rel target = $region48
            $region47: #{_lambda_.11} parent=39 // pred_region
              %s304 = ssub.s32 256, 1
              loop: start=0, step=1, limit=1
              $region49: #{_lambda_.11} parent=47 // loop_pre_header
                _
              $region50: #{_lambda_.11} parent=47 // loop_header
                %s306 = sphi 0, %s310
                %p307 = scmp.ge.s32.totalorder %s306, 1
                %s311 = sphi %s296, %s296
                %s312 = sphi %s293, %s293
              $region51: #{_lambda_.11} parent=47 // loop_header_branch
                %309 = sbr.rel (%p307) target = $region55
              $region52: #{_lambda_.11} parent=47 // loop_body
                %v313 = vld [vmem:[%s311] sm:%s304]
                %314 = vst [vmem:[%s312] sm:%s304] %v313
                %v315 = vld [vmem:[%s311 + $0x10] sm:%s304]
                %316 = vst [vmem:[%s312 + $0x8] sm:%s304] %v315
                %v317 = vld [vmem:[%s311 + $0x20] sm:%s304]
                %318 = vst [vmem:[%s312 + $0x10] sm:%s304] %v317
                %v319 = vld [vmem:[%s311 + $0x30] sm:%s304]
                %320 = vst [vmem:[%s312 + $0x18] sm:%s304] %v319
                %v321 = vld [vmem:[%s311 + $0x40] sm:%s304]
                %322 = vst [vmem:[%s312 + $0x20] sm:%s304] %v321
                %v323 = vld [vmem:[%s311 + $0x50] sm:%s304]
                %324 = vst [vmem:[%s312 + $0x28] sm:%s304] %v323
                %v325 = vld [vmem:[%s311 + $0x60] sm:%s304]
                %326 = vst [vmem:[%s312 + $0x30] sm:%s304] %v325
                %v327 = vld [vmem:[%s311 + $0x70] sm:%s304]
                %328 = vst [vmem:[%s312 + $0x38] sm:%s304] %v327
                %v329 = vld [vmem:[%s311 + $0x80] sm:%s304]
                %330 = vst [vmem:[%s312 + $0x40] sm:%s304] %v329
                %v331 = vld [vmem:[%s311 + $0x90] sm:%s304]
                %332 = vst [vmem:[%s312 + $0x48] sm:%s304] %v331
                %v333 = vld [vmem:[%s311 + $0xa0] sm:%s304]
                %334 = vst [vmem:[%s312 + $0x50] sm:%s304] %v333
                %v335 = vld [vmem:[%s311 + $0xb0] sm:%s304]
                %336 = vst [vmem:[%s312 + $0x58] sm:%s304] %v335
                %v337 = vld [vmem:[%s311 + $0xc0] sm:%s304]
                %338 = vst [vmem:[%s312 + $0x60] sm:%s304] %v337
                %v339 = vld [vmem:[%s311 + $0xd0] sm:%s304]
                %340 = vst [vmem:[%s312 + $0x68] sm:%s304] %v339
                %v341 = vld [vmem:[%s311 + $0xe0] sm:%s304]
                %342 = vst [vmem:[%s312 + $0x70] sm:%s304] %v341
                %v343 = vld [vmem:[%s311 + $0xf0] sm:%s304]
                %344 = vst [vmem:[%s312 + $0x78] sm:%s304] %v343
                %v345 = vld [vmem:[%s311 + $0x100] sm:%s304]
                %346 = vst [vmem:[%s312 + $0x80] sm:%s304] %v345
                %v347 = vld [vmem:[%s311 + $0x110] sm:%s304]
                %348 = vst [vmem:[%s312 + $0x88] sm:%s304] %v347
              $region53: #{_lambda_.11} parent=47 // loop_footer
                %s310 = sadd.s32 1, %s306
              $region54: #{_lambda_.11} parent=47 // loop_footer_branch
                %305 = sbr.rel target = $region50
              $region55: #{_lambda_.11} parent=47 // loop_exit
                _
            $region48: #{_lambda_.11} parent=39 // pred_fallthru
              _
          $region40: #{_lambda_.11} parent=35 // pred_fallthru
            _
          %397 = vnop
        $region36: #{_lambda_.11} parent=31 // pred_fallthru
          _
        // Predicated region
        $region71: #{_lambda_.11} parent=31 // pred_check
          %p398 = pneg %p83
        $region72: #{_lambda_.11} parent=31 // pred_check_branch
          %400 = sbr.rel (%p398) target = $region74
        $region73: #{_lambda_.11} parent=31 // pred_region
          %s401 = smul.u32 2, %s16
          %p402 = scmp.lt.s32.totalorder %s401, 3
          %s403 = scalar_select %p402, %s401, 3
          %s404 = smul.addr %s403, 4
          %s405 = scalar_lea.vmem %s2, %s404
          %s406 = smul.u32 2, %s16
        $region74: #{_lambda_.11} parent=31 // pred_fallthru
          _
        // Predicated region
        $region75: #{_lambda_.11} parent=31 // pred_check
          %p407 = pneg %p109
        $region76: #{_lambda_.11} parent=31 // pred_check_branch
          %409 = sbr.rel (%p407) target = $region78
        $region77: #{_lambda_.11} parent=31 // pred_region
          %s410 = smul.u32 2, %s16
          %p411 = scmp.lt.s32.totalorder %s410, 3
          %s412 = scalar_select %p411, %s410, 3
          %s413 = smul.addr %s412, 4
          %s414 = scalar_lea.vmem %s3, %s413
          %s415 = smul.u32 2, %s16
        $region78: #{_lambda_.11} parent=31 // pred_fallthru
          _
        // Predicated region
        $region79: #{_lambda_.11} parent=31 // pred_check
          %p416 = pneg %p135
        $region80: #{_lambda_.11} parent=31 // pred_check_branch
          %418 = sbr.rel (%p416) target = $region82
        $region81: #{_lambda_.11} parent=31 // pred_region
          %s419 = smul.u32 2, %s16
          %p420 = scmp.lt.s32.totalorder %s419, 3
          %s421 = scalar_select %p420, %s419, 3
          %s422 = smul.addr %s421, 4
          %s423 = scalar_lea.vmem %s4, %s422
          %s424 = smul.u32 2, %s16
        $region82: #{_lambda_.11} parent=31 // pred_fallthru
          _
      $region32: #{_lambda_.11} parent=5 // pred_fallthru
        _
      %p425 = scmp.le.s32.totalorder 1, %s16
      %p426 = scmp.lt.s32.totalorder %s16, 3
      %p427 = pnand %p425, %p426
      %p428 = pneg %p427
      // Predicated region
      $region83: #{_lambda_.11} parent=5 // pred_check
        _
      $region84: #{_lambda_.11} parent=5 // pred_check_branch
        %430 = sbr.rel (%p427) target = $region86
      $region85: #{_lambda_.11} parent=5 // pred_region
        %s431 = ssub.s32 %s16, 1
        %s432 = sand.u32 %s29, 1
        %s433 = sand.u32 %s29, 1
        %s434 = smul.addr %s433, 144
        %s435 = scalar_lea.vmem [#allocation2], %s434
        // Predicated region
        $region87: #{_lambda_.11} parent=85 // pred_check
          %p436 = pneg %p42
        $region88: #{_lambda_.11} parent=85 // pred_check_branch
          %438 = sbr.rel (%p436) target = $region90
        $region89: #{_lambda_.11} parent=85 // pred_region
          _
        $region90: #{_lambda_.11} parent=85 // pred_fallthru
          _
        %s439 = sand.u32 %s29, 1
        %s440 = sand.u32 %s29, 1
        %s441 = smul.addr %s440, 144
        %s442 = scalar_lea.vmem [#allocation2], %s441
        %p443 = pneg %p42
        %p444 = pneg %p39
        %p445 = pneg %p63
        %p446 = pneg %p60
        %s447 = smul.u32 2, %s21
        %p448 = scmp.lt.s32.totalorder %s447, 3
        %s449 = scalar_select %p448, %s447, 3
        %s450 = smul.addr %s449, 4
        %s451 = scalar_lea.vmem %s2, %s450
        %p452 = pneg %p89
        %p453 = pneg %p86
        %s454 = smul.u32 2, %s21
        %p455 = scmp.lt.s32.totalorder %s454, 3
        %s456 = scalar_select %p455, %s454, 3
        %s457 = smul.addr %s456, 4
        %s458 = scalar_lea.vmem %s3, %s457
        %p459 = pneg %p115
        %p460 = pneg %p112
        %s461 = smul.u32 2, %s21
        %p462 = scmp.lt.s32.totalorder %s461, 3
        %s463 = scalar_select %p462, %s461, 3
        %s464 = smul.addr %s463, 4
        %s465 = scalar_lea.vmem %s4, %s464
        %p466 = pneg %p141
        %p467 = pneg %p138
        %p468 = pneg %p162
        %p469 = pneg %p159
        %p470 = pneg %p183
        %p471 = pneg %p180
        %p472 = pneg %p204
        %p473 = pneg %p201
        %p474 = pneg %p230
        %p475 = pneg %p227
        %s476 = smul.u32 2, %s21
        %p477 = scmp.lt.s32.totalorder %s476, 3
        %s478 = scalar_select %p477, %s476, 3
        %s479 = smul.addr %s478, 8
        %s480 = scalar_lea.vmem %s8, %s479
        %p481 = pneg %p256
        %p482 = pneg %p253
        %s483 = smul.u32 2, %s21
        %p484 = scmp.lt.s32.totalorder %s483, 3
        %s485 = scalar_select %p484, %s483, 3
        %s486 = smul.addr %s485, 8
        %s487 = scalar_lea.vmem %s9, %s486
        %s488 = smul.u32 2, %s21
        %s489 = smul.u32 2, %s21
        %p490 = scmp.lt.s32.totalorder %s489, 3
        %s491 = scalar_select %p490, %s489, 3
        %s492 = smul.addr %s491, 4
        %s493 = scalar_lea.vmem %s2, %s492
        %s494 = smul.u32 2, %s21
        %s495 = smul.u32 2, %s21
        %p496 = scmp.lt.s32.totalorder %s495, 3
        %s497 = scalar_select %p496, %s495, 3
        %s498 = smul.addr %s497, 4
        %s499 = scalar_lea.vmem %s3, %s498
        %s500 = smul.u32 2, %s21
        %s501 = smul.u32 2, %s21
        %p502 = scmp.lt.s32.totalorder %s501, 3
        %s503 = scalar_select %p502, %s501, 3
        %s504 = smul.addr %s503, 4
        %s505 = scalar_lea.vmem %s4, %s504
        %s506 = smul.u32 2, %s21
        %s507 = smul.u32 2, %s21
        %p508 = scmp.lt.s32.totalorder %s507, 3
        %s509 = scalar_select %p508, %s507, 3
        %s510 = smul.addr %s509, 8
        %s511 = scalar_lea.vmem %s8, %s510
        %s512 = smul.u32 2, %s21
        %s513 = smul.u32 2, %s21
        %p514 = scmp.lt.s32.totalorder %s513, 3
        %s515 = scalar_select %p514, %s513, 3
        %s516 = smul.addr %s515, 8
        %s517 = scalar_lea.vmem %s9, %s516
        %s518 = smul.u32 2, %s21
        %v520 = vld [vmem:[%s1] sm:$0xff]
        %v521 = vld [vmem:[%s1 + $0x8] sm:$0xff]
        %v522 = vld [vmem:[%s435] sm:$0xff]
        %v523 = vld [vmem:[%s435 + $0x8] sm:$0xff]
        %v524 = vld [vmem:[%s435 + $0x10] sm:$0xff]
        %v525 = vld [vmem:[%s435 + $0x18] sm:$0xff]
        %v526 = vld [vmem:[%s435 + $0x20] sm:$0xff]
        %v527 = vld [vmem:[%s435 + $0x28] sm:$0xff]
        %v528 = vld [vmem:[%s435 + $0x30] sm:$0xff]
        %v529 = vld [vmem:[%s435 + $0x38] sm:$0xff]
        %v530 = vld [vmem:[%s435 + $0x40] sm:$0xff]
        %v531 = vld [vmem:[%s435 + $0x48] sm:$0xff]
        %v532 = vld [vmem:[%s435 + $0x50] sm:$0xff]
        %v533 = vld [vmem:[%s435 + $0x58] sm:$0xff]
        %v534 = vld [vmem:[%s435 + $0x60] sm:$0xff]
        %v535 = vld [vmem:[%s435 + $0x68] sm:$0xff]
        %v536 = vld [vmem:[%s435 + $0x70] sm:$0xff]
        %v537 = vld [vmem:[%s435 + $0x78] sm:$0xff]
        %v538 = vld [vmem:[%s435 + $0x80] sm:$0xff]
        %v539 = vld [vmem:[%s435 + $0x88] sm:$0xff]
        %v542 = vunpack.c.l.b16 %v520
        %v543 = vunpack.c.h.b16 %v520
        %v544 = vunpack.c.l.b16 %v521
        %v545 = vunpack.c.h.b16 %v521
        %v546 = vpack.c.b16 %v544, %v542
        %v547 = vpack.c.b16 %v545, %v543
        %v567 = vunpack.c.l.b16 %v522
        %v568 = vunpack.c.h.b16 %v522
        %v569 = vunpack.c.l.b16 %v523
        %v570 = vunpack.c.h.b16 %v523
        %v571 = vunpack.c.l.b16 %v524
        %v572 = vunpack.c.h.b16 %v524
        %v573 = vunpack.c.l.b16 %v525
        %v574 = vunpack.c.h.b16 %v525
        %v575 = vunpack.c.l.b16 %v526
        %v576 = vunpack.c.h.b16 %v526
        %v577 = vunpack.c.l.b16 %v527
        %v578 = vunpack.c.h.b16 %v527
        %v579 = vunpack.c.l.b16 %v528
        %v580 = vunpack.c.h.b16 %v528
        %v581 = vunpack.c.l.b16 %v529
        %v582 = vunpack.c.h.b16 %v529
        %v583 = vunpack.c.l.b16 %v530
        %v584 = vunpack.c.h.b16 %v530
        %v585 = vunpack.c.l.b16 %v531
        %v586 = vunpack.c.h.b16 %v531
        %v587 = vunpack.c.l.b16 %v532
        %v588 = vunpack.c.h.b16 %v532
        %v589 = vunpack.c.l.b16 %v533
        %v590 = vunpack.c.h.b16 %v533
        %v591 = vunpack.c.l.b16 %v534
        %v592 = vunpack.c.h.b16 %v534
        %v593 = vunpack.c.l.b16 %v535
        %v594 = vunpack.c.h.b16 %v535
        %v595 = vunpack.c.l.b16 %v536
        %v596 = vunpack.c.h.b16 %v536
        %v597 = vunpack.c.l.b16 %v537
        %v598 = vunpack.c.h.b16 %v537
        %v599 = vunpack.c.l.b16 %v538
        %v600 = vunpack.c.h.b16 %v538
        %v601 = vunpack.c.l.b16 %v539
        %v602 = vunpack.c.h.b16 %v539
        %v603 = vpack.c.b16 %v569, %v567
        %v604 = vpack.c.b16 %v570, %v568
        %v605 = vpack.c.b16 %v573, %v571
        %v606 = vpack.c.b16 %v574, %v572
        %v607 = vpack.c.b16 %v577, %v575
        %v608 = vpack.c.b16 %v578, %v576
        %v609 = vpack.c.b16 %v581, %v579
        %v610 = vpack.c.b16 %v582, %v580
        %v611 = vpack.c.b16 %v585, %v583
        %v612 = vpack.c.b16 %v586, %v584
        %v613 = vpack.c.b16 %v589, %v587
        %v614 = vpack.c.b16 %v590, %v588
        %v615 = vpack.c.b16 %v593, %v591
        %v616 = vpack.c.b16 %v594, %v592
        %v617 = vpack.c.b16 %v597, %v595
        %v618 = vpack.c.b16 %v598, %v596
        %v619 = vpack.c.b16 %v601, %v599
        %v620 = vpack.c.b16 %v602, %v600
        %vm639 = vcmask 130048
        %v641 = vsel %vm639, %v547, 0
        %643 = vmatpush.bf16.msra.mxu0 %v617
        %644 = vmatpush.bf16.msra.mxu0 %v615
        %645 = vmatpush.bf16.msra.mxu0 %v613
        %646 = vmatpush.bf16.msra.mxu0 %v611
        %647 = vmatpush.bf16.msra.mxu0 %v609
        %648 = vmatpush.bf16.msra.mxu0 %v607
        %649 = vmatpush.bf16.msra.mxu0 %v605
        %650 = vmatpush.bf16.msra.mxu0 %v603
        %651 = vmatmul.bf16.gmra.mxu0 %v546
        %v652 = vpop.f32.mrf.mxu0
        %v653 = vadd.f32 0.0, %v652
        %v654 = vpop.f32.mrf.mxu0
        %v655 = vadd.f32 0.0, %v654
        %656 = vdwg.mxu0
        %657 = vmatpush.bf16.msra.mxu0 0
        %658 = vmatpush.bf16.msra.mxu0 0
        %659 = vmatpush.bf16.msra.mxu0 0
        %660 = vmatpush.bf16.msra.mxu0 0
        %661 = vmatpush.bf16.msra.mxu0 0
        %662 = vmatpush.bf16.msra.mxu0 0
        %663 = vmatpush.bf16.msra.mxu0 0
        %664 = vmatpush.bf16.msra.mxu0 %v619
        %665 = vmatmul.bf16.gmra.mxu0 %v641
        %v666 = vpop.f32.mrf.mxu0
        %v667 = vadd.f32 %v653, %v666
        %v668 = vpop.f32.mrf.mxu0
        %v669 = vadd.f32 %v655, %v668
        %670 = vdwg.mxu0
        %671 = vmatpush.bf16.msra.mxu0 %v618
        %672 = vmatpush.bf16.msra.mxu0 %v616
        %673 = vmatpush.bf16.msra.mxu0 %v614
        %674 = vmatpush.bf16.msra.mxu0 %v612
        %675 = vmatpush.bf16.msra.mxu0 %v610
        %676 = vmatpush.bf16.msra.mxu0 %v608
        %677 = vmatpush.bf16.msra.mxu0 %v606
        %678 = vmatpush.bf16.msra.mxu0 %v604
        %679 = vmatmul.bf16.gmra.mxu0 %v546
        %v680 = vpop.f32.mrf.mxu0
        %v681 = vadd.f32 0.0, %v680
        %v682 = vpop.f32.mrf.mxu0
        %v683 = vadd.f32 0.0, %v682
        %684 = vdwg.mxu0
        %685 = vmatpush.bf16.msra.mxu0 0
        %686 = vmatpush.bf16.msra.mxu0 0
        %687 = vmatpush.bf16.msra.mxu0 0
        %688 = vmatpush.bf16.msra.mxu0 0
        %689 = vmatpush.bf16.msra.mxu0 0
        %690 = vmatpush.bf16.msra.mxu0 0
        %691 = vmatpush.bf16.msra.mxu0 0
        %692 = vmatpush.bf16.msra.mxu0 %v620
        %693 = vmatmul.bf16.gmra.mxu0 %v641
        %v694 = vpop.f32.mrf.mxu0
        %v695 = vadd.f32 %v681, %v694
        %v696 = vpop.f32.mrf.mxu0
        %v697 = vadd.f32 %v683, %v696
        %698 = vdwg.mxu0
        %v699 = vld [vmem:[%s493] sm:$0xff]
        %v700 = vld [vmem:[%s499] sm:$0xff]
        %v701 = vadd.f32 %v699, %v700
        %v702 = vld [vmem:[%s505] sm:$0xff]
        %v703 = vadd.f32 %v701, %v702
        %v704 = vld [vmem:[%s5] sm:$0xf]
        %706 = vst [vmem:[#allocation1] ss:$2 sm:$0xff] %v703
        %v707 = vld.sshfl [vmem:[#allocation1] sm:$0xff pattern:$0x75316420]
        %v708 = vld.sshfl [vmem:[#allocation1 + $0x8] sm:$0xff pattern:$0x75316420]
        %v711 = vpack.c.bf16 %v707, %v707
        %v712 = vpack.c.bf16 %v708, %v708
        %vm713 = vcmask 31744
        %v715 = vsel %vm713, %v704, 0
        %vm717 = vcmask 1041408
        %v719 = vsel %vm717, %v711, 0
        %v722 = vsel %vm717, %v712, 0
        %724 = vmatpush.bf16.msra.mxu0 0
        %725 = vmatpush.bf16.msra.mxu0 0
        %726 = vmatpush.bf16.msra.mxu0 0
        %727 = vmatpush.bf16.msra.mxu0 0
        %728 = vmatpush.bf16.msra.mxu0 0
        %729 = vmatpush.bf16.msra.mxu0 0
        %730 = vmatpush.bf16.msra.mxu0 0
        %731 = vmatpush.bf16.msra.mxu0 %v719
        %732 = vmatmul.bf16.gmra.mxu0 %v715
        %v733 = vpop.f32.mrf.mxu0
        %v734 = vadd.f32 0.0, %v733
        %v735 = vpop.f32.mrf.mxu0
        %736 = vdwg.mxu0
        %737 = vmatpush.bf16.msra.mxu0 0
        %738 = vmatpush.bf16.msra.mxu0 0
        %739 = vmatpush.bf16.msra.mxu0 0
        %740 = vmatpush.bf16.msra.mxu0 0
        %741 = vmatpush.bf16.msra.mxu0 0
        %742 = vmatpush.bf16.msra.mxu0 0
        %743 = vmatpush.bf16.msra.mxu0 0
        %744 = vmatpush.bf16.msra.mxu0 %v722
        %745 = vmatmul.bf16.gmra.mxu0 %v715
        %v746 = vpop.f32.mrf.mxu0
        %v747 = vadd.f32 0.0, %v746
        %v748 = vpop.f32.mrf.mxu0
        %749 = vdwg.mxu0
        %v750 = vld [vmem:[%s6] sm:$0xff]
        %752 = vset.pattern.permute.xlu0 0
        %753 = vperm.xlu0 %752, %v750
        %v754 = vpop.permute.xlu0 %753
        %v756 = vadd.f32 %v667, %v754
        %v757 = vadd.f32 %v695, %v754
        %v758 = vadd.f32 %v669, %v734
        %v759 = vadd.f32 %v697, %v747
        %v760 = vld [vmem:[%s7] sm:$0xff]
        %762 = vset.pattern.permute.xlu0 0
        %763 = vperm.xlu0 %762, %v760
        %v764 = vpop.permute.xlu0 %763
        %v766 = vadd.f32 %v758, %v764
        %v767 = vadd.f32 %v759, %v764
        %v768 = vmax.f32 %v756, 0.0
        %v769 = vmax.f32 %v757, 0.0
        %770 = vst [vmem:[%s511] sm:$0xff] %v768
        %771 = vst [vmem:[%s511 + $0x8] sm:$0xff] %v769
        %v772 = vmax.f32 %v766, 0.0
        %v773 = vmax.f32 %v767, 0.0
        %774 = vst [vmem:[%s517] sm:$0xff] %v772
        %775 = vst [vmem:[%s517 + $0x8] sm:$0xff] %v773
        %s776 = smul.u32 2, %s21
        %p777 = scmp.lt.s32.totalorder %s776, 3
        %s778 = scalar_select %p777, %s776, 3
        %s779 = smul.addr %s778, 8
        %s780 = scalar_lea.vmem %s8, %s779
        %s781 = smul.u32 2, %s21
        %p782 = scmp.lt.s32.totalorder %s781, 3
        %s783 = scalar_select %p782, %s781, 3
        %s784 = smul.addr %s783, 8
        %s785 = scalar_lea.vmem %s9, %s784
        // Predicated region
        $region91: #{_lambda_.11} parent=85 // pred_check
          %p786 = pneg %p227
        $region92: #{_lambda_.11} parent=85 // pred_check_branch
          %788 = sbr.rel (%p786) target = $region94
        $region93: #{_lambda_.11} parent=85 // pred_region
          %s789 = smul.u32 2, %s21
        $region94: #{_lambda_.11} parent=85 // pred_fallthru
          _
        // Predicated region
        $region95: #{_lambda_.11} parent=85 // pred_check
          %p790 = pneg %p253
        $region96: #{_lambda_.11} parent=85 // pred_check_branch
          %792 = sbr.rel (%p790) target = $region98
        $region97: #{_lambda_.11} parent=85 // pred_region
          %s793 = smul.u32 2, %s21
        $region98: #{_lambda_.11} parent=85 // pred_fallthru
          _
      $region86: #{_lambda_.11} parent=5 // pred_fallthru
        _
      %p794 = scmp.le.s32.totalorder 2, %s16
      // Predicated region
      $region99: #{_lambda_.11} parent=5 // pred_check
        %p795 = pneg %p794
      $region100: #{_lambda_.11} parent=5 // pred_check_branch
        %797 = sbr.rel (%p795) target = $region102
      $region101: #{_lambda_.11} parent=5 // pred_region
        %s798 = ssub.s32 %s16, 2
        // Predicated region
        $region103: #{_lambda_.11} parent=101 // pred_check
          %p799 = pneg %p233
        $region104: #{_lambda_.11} parent=101 // pred_check_branch
          %801 = sbr.rel (%p799) target = $region106
        $region105: #{_lambda_.11} parent=101 // pred_region
          %s802 = smul.u32 2, %s22
          %p803 = scmp.lt.s32.totalorder %s802, 3
          %s804 = scalar_select %p803, %s802, 3
          %s805 = smul.addr %s804, 8
          %s806 = scalar_lea.vmem %s8, %s805
        $region106: #{_lambda_.11} parent=101 // pred_fallthru
          _
        // Predicated region
        $region107: #{_lambda_.11} parent=101 // pred_check
          %p807 = pneg %p259
        $region108: #{_lambda_.11} parent=101 // pred_check_branch
          %809 = sbr.rel (%p807) target = $region110
        $region109: #{_lambda_.11} parent=101 // pred_region
          %s810 = smul.u32 2, %s22
          %p811 = scmp.lt.s32.totalorder %s810, 3
          %s812 = scalar_select %p811, %s810, 3
          %s813 = smul.addr %s812, 8
          %s814 = scalar_lea.vmem %s9, %s813
        $region110: #{_lambda_.11} parent=101 // pred_fallthru
          _
      $region102: #{_lambda_.11} parent=5 // pred_fallthru
        _
    $region6: #{_lambda_.11} parent=1 // loop_footer
      %s20 = sadd.s32 1, %s16
    $region7: #{_lambda_.11} parent=1 // loop_footer_branch
      %15 = sbr.rel target = $region3
    $region8: #{_lambda_.11} parent=1 // loop_exit
      _

// kernel: _lambda_.15
$region0: #{_lambda_.15}
  #allocation0 [shape = 'u32[]', space=smem, size = 0x4, offset = 0x4, fixed_abs, tag = 'smem constant byte address 0x4 - core index']
  #allocation1 [shape = 'u32[72,128]{1,0:T(1,128)}', space=vmem, size = 0x9000, scoped, tag = 'internal scratch']
  %s0 = inlined_call_operand.vmem [shape: bf16[144,512], index: 0, kind: input, shape index: {}]
  %s1 = inlined_call_operand.vmem [shape: bf16[16,144], index: 1, kind: input, shape index: {}]
  %s2 = inlined_call_operand.vmem [shape: f32[4,512], index: 2, kind: input, shape index: {}]
  %s3 = inlined_call_operand.vmem [shape: f32[4,512], index: 3, kind: input, shape index: {}]
  %s4 = inlined_call_operand.vmem [shape: f32[4,512], index: 4, kind: input, shape index: {}]
  %s5 = inlined_call_operand.vmem [shape: bf16[8,4], index: 5, kind: input, shape index: {}]
  %s6 = inlined_call_operand.vmem [shape: f32[8,1], index: 6, kind: input, shape index: {}]
  %s7 = inlined_call_operand.vmem [shape: f32[8,1], index: 7, kind: input, shape index: {}]
  %s8 = inlined_call_operand.vmem [shape: f32[8,512], index: 8, kind: input, shape index: {}]
  %s9 = inlined_call_operand.vmem [shape: f32[8,512], index: 9, kind: input, shape index: {}]
  %s10 = inlined_call_operand.vmem [shape: f32[8,512], index: 10, kind: output, shape index: {0}]
  %s11 = inlined_call_operand.vmem [shape: f32[8,512], index: 11, kind: output, shape index: {1}]
  %12 = xla_tuple %s10, %s11
  %s13 = sld [smem:[#allocation0]]
  $region119: #{_lambda_.15} parent=0
    _
  %s15 = ssub.s32 1, %s13
  %s16 = scalar_select 0, %s15, %s13
  $region1: #{_lambda_.15} parent=0
    #allocation2 [shape = 'u8[147456]{0}', space=vmem, size = 0x24000, scoped, tag = 'input window, operand 0']
    loop: start=0, step=1, limit=4
    $region2: #{_lambda_.15} parent=1 // loop_pre_header
      _
    $region3: #{_lambda_.15} parent=1 // loop_header
      %s18 = sphi 0, %s22
      %p19 = scmp.ge.s32.totalorder %s18, 4
      %s28 = sphi 0, %s30
      %s31 = sphi 0, %s28
      %s32 = sphi 0, %s31
      %s48 = sphi 0, %s32
      %s52 = sphi 0, %s52
      %s54 = sphi 0, %s52
      %s55 = sphi 0, %s54
      %s69 = sphi 0, %s55
      %s75 = sphi 0, %s77
      %s78 = sphi 0, %s75
      %s79 = sphi 0, %s78
      %s95 = sphi 0, %s79
      %s101 = sphi 0, %s103
      %s104 = sphi 0, %s101
      %s105 = sphi 0, %s104
      %s121 = sphi 0, %s105
      %s127 = sphi 0, %s129
      %s130 = sphi 0, %s127
      %s131 = sphi 0, %s130
      %s147 = sphi 0, %s131
      %s151 = sphi 0, %s151
      %s153 = sphi 0, %s151
      %s154 = sphi 0, %s153
      %s168 = sphi 0, %s154
      %s172 = sphi 0, %s172
      %s174 = sphi 0, %s172
      %s175 = sphi 0, %s174
      %s189 = sphi 0, %s175
      %s193 = sphi 0, %s193
      %s195 = sphi 0, %s193
      %s196 = sphi 0, %s195
      %s210 = sphi 0, %s196
      %s216 = sphi 0, %s218
      %s219 = sphi 0, %s216
      %s220 = sphi 0, %s219
      %s236 = sphi 0, %s220
      %s242 = sphi 0, %s244
      %s245 = sphi 0, %s242
      %s246 = sphi 0, %s245
      %s262 = sphi 0, %s246
      %s268 = sphi 0, %s270
      %s271 = sphi 0, %s268
      %s272 = sphi 0, %s271
      %s288 = sphi 0, %s272
      %s294 = sphi 0, %s296
      %s297 = sphi 0, %s294
      %s298 = sphi 0, %s297
      %s314 = sphi 0, %s298
    $region4: #{_lambda_.15} parent=1 // loop_header_branch
      %21 = sbr.rel (%p19) target = $region8
    $region5: #{_lambda_.15} parent=1 // loop_body
      %s23 = ssub.s32 %s18, 1
      %s24 = ssub.s32 %s18, 2
      %s25 = sadd.s32 %s18, 1
      %s26 = ssub.s32 %s18, %s25
      %p27 = scmp.eq.s32.totalorder %s26, 0
      %s29 = sadd.s32 %s28, 1
      %s30 = scalar_select %p27, %s28, %s29
      %p33 = pneg %p27
      %p34 = scmp.eq.s32.totalorder %s18, 1
      %p35 = por %p33, %p34
      %p36 = scmp.ne.s32.totalorder %s28, %s31
      %p37 = scmp.eq.s32.totalorder %s18, 0
      %p38 = por %p36, %p37
      %p39 = scmp.ne.s32.totalorder %s28, %s31
      %p40 = scmp.eq.s32.totalorder %s23, 1
      %p41 = por %p39, %p40
      %p42 = scmp.ne.s32.totalorder %s31, %s32
      %p43 = scmp.eq.s32.totalorder %s23, 0
      %p44 = por %p42, %p43
      %p45 = scmp.ne.s32.totalorder %s31, %s32
      %p46 = scmp.eq.s32.totalorder %s24, 1
      %p47 = por %p45, %p46
      %p49 = scmp.ne.s32.totalorder %s32, %s48
      %p50 = scmp.eq.s32.totalorder %s24, 0
      %p51 = por %p49, %p50
      %s53 = sadd.s32 %s52, 1
      %p56 = scmp.eq.s32.totalorder %s18, 1
      %p57 = scmp.ne.s32.totalorder %s52, %s54
      %p58 = scmp.eq.s32.totalorder %s18, 0
      %p59 = por %p57, %p58
      %p60 = scmp.ne.s32.totalorder %s52, %s54
      %p61 = scmp.eq.s32.totalorder %s23, 1
      %p62 = por %p60, %p61
      %p63 = scmp.ne.s32.totalorder %s54, %s55
      %p64 = scmp.eq.s32.totalorder %s23, 0
      %p65 = por %p63, %p64
      %p66 = scmp.ne.s32.totalorder %s54, %s55
      %p67 = scmp.eq.s32.totalorder %s24, 1
      %p68 = por %p66, %p67
      %p70 = scmp.ne.s32.totalorder %s55, %s69
      %p71 = scmp.eq.s32.totalorder %s24, 0
      %p72 = por %p70, %p71
      %s73 = ssub.s32 %s18, %s25
      %p74 = scmp.eq.s32.totalorder %s73, 0
      %s76 = sadd.s32 %s75, 1
      %s77 = scalar_select %p74, %s75, %s76
      %p80 = pneg %p74
      %p81 = scmp.eq.s32.totalorder %s18, 1
      %p82 = por %p80, %p81
      %p83 = scmp.ne.s32.totalorder %s75, %s78
      %p84 = scmp.eq.s32.totalorder %s18, 0
      %p85 = por %p83, %p84
      %p86 = scmp.ne.s32.totalorder %s75, %s78
      %p87 = scmp.eq.s32.totalorder %s23, 1
      %p88 = por %p86, %p87
      %p89 = scmp.ne.s32.totalorder %s78, %s79
      %p90 = scmp.eq.s32.totalorder %s23, 0
      %p91 = por %p89, %p90
      %p92 = scmp.ne.s32.totalorder %s78, %s79
      %p93 = scmp.eq.s32.totalorder %s24, 1
      %p94 = por %p92, %p93
      %p96 = scmp.ne.s32.totalorder %s79, %s95
      %p97 = scmp.eq.s32.totalorder %s24, 0
      %p98 = por %p96, %p97
      %s99 = ssub.s32 %s18, %s25
      %p100 = scmp.eq.s32.totalorder %s99, 0
      %s102 = sadd.s32 %s101, 1
      %s103 = scalar_select %p100, %s101, %s102
      %p106 = pneg %p100
      %p107 = scmp.eq.s32.totalorder %s18, 1
      %p108 = por %p106, %p107
      %p109 = scmp.ne.s32.totalorder %s101, %s104
      %p110 = scmp.eq.s32.totalorder %s18, 0
      %p111 = por %p109, %p110
      %p112 = scmp.ne.s32.totalorder %s101, %s104
      %p113 = scmp.eq.s32.totalorder %s23, 1
      %p114 = por %p112, %p113
      %p115 = scmp.ne.s32.totalorder %s104, %s105
      %p116 = scmp.eq.s32.totalorder %s23, 0
      %p117 = por %p115, %p116
      %p118 = scmp.ne.s32.totalorder %s104, %s105
      %p119 = scmp.eq.s32.totalorder %s24, 1
      %p120 = por %p118, %p119
      %p122 = scmp.ne.s32.totalorder %s105, %s121
      %p123 = scmp.eq.s32.totalorder %s24, 0
      %p124 = por %p122, %p123
      %s125 = ssub.s32 %s18, %s25
      %p126 = scmp.eq.s32.totalorder %s125, 0
      %s128 = sadd.s32 %s127, 1
      %s129 = scalar_select %p126, %s127, %s128
      %p132 = pneg %p126
      %p133 = scmp.eq.s32.totalorder %s18, 1
      %p134 = por %p132, %p133
      %p135 = scmp.ne.s32.totalorder %s127, %s130
      %p136 = scmp.eq.s32.totalorder %s18, 0
      %p137 = por %p135, %p136
      %p138 = scmp.ne.s32.totalorder %s127, %s130
      %p139 = scmp.eq.s32.totalorder %s23, 1
      %p140 = por %p138, %p139
      %p141 = scmp.ne.s32.totalorder %s130, %s131
      %p142 = scmp.eq.s32.totalorder %s23, 0
      %p143 = por %p141, %p142
      %p144 = scmp.ne.s32.totalorder %s130, %s131
      %p145 = scmp.eq.s32.totalorder %s24, 1
      %p146 = por %p144, %p145
      %p148 = scmp.ne.s32.totalorder %s131, %s147
      %p149 = scmp.eq.s32.totalorder %s24, 0
      %p150 = por %p148, %p149
      %s152 = sadd.s32 %s151, 1
      %p155 = scmp.eq.s32.totalorder %s18, 1
      %p156 = scmp.ne.s32.totalorder %s151, %s153
      %p157 = scmp.eq.s32.totalorder %s18, 0
      %p158 = por %p156, %p157
      %p159 = scmp.ne.s32.totalorder %s151, %s153
      %p160 = scmp.eq.s32.totalorder %s23, 1
      %p161 = por %p159, %p160
      %p162 = scmp.ne.s32.totalorder %s153, %s154
      %p163 = scmp.eq.s32.totalorder %s23, 0
      %p164 = por %p162, %p163
      %p165 = scmp.ne.s32.totalorder %s153, %s154
      %p166 = scmp.eq.s32.totalorder %s24, 1
      %p167 = por %p165, %p166
      %p169 = scmp.ne.s32.totalorder %s154, %s168
      %p170 = scmp.eq.s32.totalorder %s24, 0
      %p171 = por %p169, %p170
      %s173 = sadd.s32 %s172, 1
      %p176 = scmp.eq.s32.totalorder %s18, 1
      %p177 = scmp.ne.s32.totalorder %s172, %s174
      %p178 = scmp.eq.s32.totalorder %s18, 0
      %p179 = por %p177, %p178
      %p180 = scmp.ne.s32.totalorder %s172, %s174
      %p181 = scmp.eq.s32.totalorder %s23, 1
      %p182 = por %p180, %p181
      %p183 = scmp.ne.s32.totalorder %s174, %s175
      %p184 = scmp.eq.s32.totalorder %s23, 0
      %p185 = por %p183, %p184
      %p186 = scmp.ne.s32.totalorder %s174, %s175
      %p187 = scmp.eq.s32.totalorder %s24, 1
      %p188 = por %p186, %p187
      %p190 = scmp.ne.s32.totalorder %s175, %s189
      %p191 = scmp.eq.s32.totalorder %s24, 0
      %p192 = por %p190, %p191
      %s194 = sadd.s32 %s193, 1
      %p197 = scmp.eq.s32.totalorder %s18, 1
      %p198 = scmp.ne.s32.totalorder %s193, %s195
      %p199 = scmp.eq.s32.totalorder %s18, 0
      %p200 = por %p198, %p199
      %p201 = scmp.ne.s32.totalorder %s193, %s195
      %p202 = scmp.eq.s32.totalorder %s23, 1
      %p203 = por %p201, %p202
      %p204 = scmp.ne.s32.totalorder %s195, %s196
      %p205 = scmp.eq.s32.totalorder %s23, 0
      %p206 = por %p204, %p205
      %p207 = scmp.ne.s32.totalorder %s195, %s196
      %p208 = scmp.eq.s32.totalorder %s24, 1
      %p209 = por %p207, %p208
      %p211 = scmp.ne.s32.totalorder %s196, %s210
      %p212 = scmp.eq.s32.totalorder %s24, 0
      %p213 = por %p211, %p212
      %s214 = ssub.s32 %s18, %s25
      %p215 = scmp.eq.s32.totalorder %s214, 0
      %s217 = sadd.s32 %s216, 1
      %s218 = scalar_select %p215, %s216, %s217
      %p221 = pneg %p215
      %p222 = scmp.eq.s32.totalorder %s18, 1
      %p223 = por %p221, %p222
      %p224 = scmp.ne.s32.totalorder %s216, %s219
      %p225 = scmp.eq.s32.totalorder %s18, 0
      %p226 = por %p224, %p225
      %p227 = scmp.ne.s32.totalorder %s216, %s219
      %p228 = scmp.eq.s32.totalorder %s23, 1
      %p229 = por %p227, %p228
      %p230 = scmp.ne.s32.totalorder %s219, %s220
      %p231 = scmp.eq.s32.totalorder %s23, 0
      %p232 = por %p230, %p231
      %p233 = scmp.ne.s32.totalorder %s219, %s220
      %p234 = scmp.eq.s32.totalorder %s24, 1
      %p235 = por %p233, %p234
      %p237 = scmp.ne.s32.totalorder %s220, %s236
      %p238 = scmp.eq.s32.totalorder %s24, 0
      %p239 = por %p237, %p238
      %s240 = ssub.s32 %s18, %s25
      %p241 = scmp.eq.s32.totalorder %s240, 0
      %s243 = sadd.s32 %s242, 1
      %s244 = scalar_select %p241, %s242, %s243
      %p247 = pneg %p241
      %p248 = scmp.eq.s32.totalorder %s18, 1
      %p249 = por %p247, %p248
      %p250 = scmp.ne.s32.totalorder %s242, %s245
      %p251 = scmp.eq.s32.totalorder %s18, 0
      %p252 = por %p250, %p251
      %p253 = scmp.ne.s32.totalorder %s242, %s245
      %p254 = scmp.eq.s32.totalorder %s23, 1
      %p255 = por %p253, %p254
      %p256 = scmp.ne.s32.totalorder %s245, %s246
      %p257 = scmp.eq.s32.totalorder %s23, 0
      %p258 = por %p256, %p257
      %p259 = scmp.ne.s32.totalorder %s245, %s246
      %p260 = scmp.eq.s32.totalorder %s24, 1
      %p261 = por %p259, %p260
      %p263 = scmp.ne.s32.totalorder %s246, %s262
      %p264 = scmp.eq.s32.totalorder %s24, 0
      %p265 = por %p263, %p264
      %s266 = ssub.s32 %s18, %s25
      %p267 = scmp.eq.s32.totalorder %s266, 0
      %s269 = sadd.s32 %s268, 1
      %s270 = scalar_select %p267, %s268, %s269
      %p273 = pneg %p267
      %p274 = scmp.eq.s32.totalorder %s18, 1
      %p275 = por %p273, %p274
      %p276 = scmp.ne.s32.totalorder %s268, %s271
      %p277 = scmp.eq.s32.totalorder %s18, 0
      %p278 = por %p276, %p277
      %p279 = scmp.ne.s32.totalorder %s268, %s271
      %p280 = scmp.eq.s32.totalorder %s23, 1
      %p281 = por %p279, %p280
      %p282 = scmp.ne.s32.totalorder %s271, %s272
      %p283 = scmp.eq.s32.totalorder %s23, 0
      %p284 = por %p282, %p283
      %p285 = scmp.ne.s32.totalorder %s271, %s272
      %p286 = scmp.eq.s32.totalorder %s24, 1
      %p287 = por %p285, %p286
      %p289 = scmp.ne.s32.totalorder %s272, %s288
      %p290 = scmp.eq.s32.totalorder %s24, 0
      %p291 = por %p289, %p290
      %s292 = ssub.s32 %s18, %s25
      %p293 = scmp.eq.s32.totalorder %s292, 0
      %s295 = sadd.s32 %s294, 1
      %s296 = scalar_select %p293, %s294, %s295
      %p299 = pneg %p293
      %p300 = scmp.eq.s32.totalorder %s18, 1
      %p301 = por %p299, %p300
      %p302 = scmp.ne.s32.totalorder %s294, %s297
      %p303 = scmp.eq.s32.totalorder %s18, 0
      %p304 = por %p302, %p303
      %p305 = scmp.ne.s32.totalorder %s294, %s297
      %p306 = scmp.eq.s32.totalorder %s23, 1
      %p307 = por %p305, %p306
      %p308 = scmp.ne.s32.totalorder %s297, %s298
      %p309 = scmp.eq.s32.totalorder %s23, 0
      %p310 = por %p308, %p309
      %p311 = scmp.ne.s32.totalorder %s297, %s298
      %p312 = scmp.eq.s32.totalorder %s24, 1
      %p313 = por %p311, %p312
      %p315 = scmp.ne.s32.totalorder %s298, %s314
      %p316 = scmp.eq.s32.totalorder %s24, 0
      %p317 = por %p315, %p316
      %p318 = scmp.le.s32.totalorder 1, %s18
      %p319 = scmp.lt.s32.totalorder %s18, 3
      %p320 = pnand %p318, %p319
      %p321 = pneg %p320
      // Predicated region
      $region9: #{_lambda_.15} parent=5 // pred_check
        _
      $region10: #{_lambda_.15} parent=5 // pred_check_branch
        %323 = sbr.rel (%p320) target = $region12
      $region11: #{_lambda_.15} parent=5 // pred_region
        %s324 = ssub.s32 %s18, 1
        // Predicated region
        $region13: #{_lambda_.15} parent=11 // pred_check
          %p325 = pneg %p65
        $region14: #{_lambda_.15} parent=11 // pred_check_branch
          %327 = sbr.rel (%p325) target = $region16
        $region15: #{_lambda_.15} parent=11 // pred_region
          _
        $region16: #{_lambda_.15} parent=11 // pred_fallthru
          _
        // Predicated region
        $region17: #{_lambda_.15} parent=11 // pred_check
          %p328 = pneg %p164
        $region18: #{_lambda_.15} parent=11 // pred_check_branch
          %330 = sbr.rel (%p328) target = $region20
        $region19: #{_lambda_.15} parent=11 // pred_region
          _
        $region20: #{_lambda_.15} parent=11 // pred_fallthru
          _
        // Predicated region
        $region21: #{_lambda_.15} parent=11 // pred_check
          %p331 = pneg %p185
        $region22: #{_lambda_.15} parent=11 // pred_check_branch
          %333 = sbr.rel (%p331) target = $region24
        $region23: #{_lambda_.15} parent=11 // pred_region
          _
        $region24: #{_lambda_.15} parent=11 // pred_fallthru
          _
        // Predicated region
        $region25: #{_lambda_.15} parent=11 // pred_check
          %p334 = pneg %p206
        $region26: #{_lambda_.15} parent=11 // pred_check_branch
          %336 = sbr.rel (%p334) target = $region28
        $region27: #{_lambda_.15} parent=11 // pred_region
          _
        $region28: #{_lambda_.15} parent=11 // pred_fallthru
          _
      $region12: #{_lambda_.15} parent=5 // pred_fallthru
        _
      %p337 = scmp.lt.s32.totalorder %s18, 2
      // Predicated region
      $region29: #{_lambda_.15} parent=5 // pred_check
        %p338 = pneg %p337
      $region30: #{_lambda_.15} parent=5 // pred_check_branch
        %340 = sbr.rel (%p338) target = $region32
      $region31: #{_lambda_.15} parent=5 // pred_region
        // Predicated region
        $region33: #{_lambda_.15} parent=31 // pred_check
          %p341 = pneg %p38
        $region34: #{_lambda_.15} parent=31 // pred_check_branch
          %343 = sbr.rel (%p341) target = $region36
        $region35: #{_lambda_.15} parent=31 // pred_region
          %s344 = sand.u32 %s28, 1
          %s345 = sand.u32 %s28, 1
          %s346 = smul.addr %s345, 144
          %s347 = scalar_lea.vmem [#allocation2], %s346
          %s348 = smul.u32 2, %s18
          %s349 = smul.addr %s348, 4
          %s350 = scalar_lea.vmem %s0, %s349
          // Predicated region
          $region37: #{_lambda_.15} parent=35 // pred_check
            _
          $region38: #{_lambda_.15} parent=35 // pred_check_branch
            %352 = sbr.rel (0) target = $region40
          $region39: #{_lambda_.15} parent=35 // pred_region
            // Predicated region
            $region41: #{_lambda_.15} parent=39 // pred_check
              _
            $region42: #{_lambda_.15} parent=39 // pred_check_branch
              %354 = sbr.rel (0) target = $region44
            $region43: #{_lambda_.15} parent=39 // pred_region
              // Predicated region
              $region56: #{_lambda_.15} parent=43 // pred_check
                _
              $region57: #{_lambda_.15} parent=43 // pred_check_branch
                %404 = sbr.rel (0) target = $region59
              $region58: #{_lambda_.15} parent=43 // pred_region
                loop: start=0, step=1, limit=1
                $region60: #{_lambda_.15} parent=58 // loop_pre_header
                  _
                $region61: #{_lambda_.15} parent=58 // loop_header
                  %s406 = sphi 0, %s410
                  %p407 = scmp.ge.s32.totalorder %s406, 1
                  %s411 = sphi %s350, %s350
                  %s412 = sphi %s347, %s347
                $region62: #{_lambda_.15} parent=58 // loop_header_branch
                  %409 = sbr.rel (%p407) target = $region66
                $region63: #{_lambda_.15} parent=58 // loop_body
                  %v413 = vld [vmem:[%s411] sm:$0xff]
                  %414 = vst [vmem:[%s412] sm:$0xff] %v413
                  %v415 = vld [vmem:[%s411 + $0x10] sm:$0xff]
                  %416 = vst [vmem:[%s412 + $0x8] sm:$0xff] %v415
                  %v417 = vld [vmem:[%s411 + $0x20] sm:$0xff]
                  %418 = vst [vmem:[%s412 + $0x10] sm:$0xff] %v417
                  %v419 = vld [vmem:[%s411 + $0x30] sm:$0xff]
                  %420 = vst [vmem:[%s412 + $0x18] sm:$0xff] %v419
                  %v421 = vld [vmem:[%s411 + $0x40] sm:$0xff]
                  %422 = vst [vmem:[%s412 + $0x20] sm:$0xff] %v421
                  %v423 = vld [vmem:[%s411 + $0x50] sm:$0xff]
                  %424 = vst [vmem:[%s412 + $0x28] sm:$0xff] %v423
                  %v425 = vld [vmem:[%s411 + $0x60] sm:$0xff]
                  %426 = vst [vmem:[%s412 + $0x30] sm:$0xff] %v425
                  %v427 = vld [vmem:[%s411 + $0x70] sm:$0xff]
                  %428 = vst [vmem:[%s412 + $0x38] sm:$0xff] %v427
                  %v429 = vld [vmem:[%s411 + $0x80] sm:$0xff]
                  %430 = vst [vmem:[%s412 + $0x40] sm:$0xff] %v429
                  %v431 = vld [vmem:[%s411 + $0x90] sm:$0xff]
                  %432 = vst [vmem:[%s412 + $0x48] sm:$0xff] %v431
                  %v433 = vld [vmem:[%s411 + $0xa0] sm:$0xff]
                  %434 = vst [vmem:[%s412 + $0x50] sm:$0xff] %v433
                  %v435 = vld [vmem:[%s411 + $0xb0] sm:$0xff]
                  %436 = vst [vmem:[%s412 + $0x58] sm:$0xff] %v435
                  %v437 = vld [vmem:[%s411 + $0xc0] sm:$0xff]
                  %438 = vst [vmem:[%s412 + $0x60] sm:$0xff] %v437
                  %v439 = vld [vmem:[%s411 + $0xd0] sm:$0xff]
                  %440 = vst [vmem:[%s412 + $0x68] sm:$0xff] %v439
                  %v441 = vld [vmem:[%s411 + $0xe0] sm:$0xff]
                  %442 = vst [vmem:[%s412 + $0x70] sm:$0xff] %v441
                  %v443 = vld [vmem:[%s411 + $0xf0] sm:$0xff]
                  %444 = vst [vmem:[%s412 + $0x78] sm:$0xff] %v443
                  %v445 = vld [vmem:[%s411 + $0x100] sm:$0xff]
                  %446 = vst [vmem:[%s412 + $0x80] sm:$0xff] %v445
                  %v447 = vld [vmem:[%s411 + $0x110] sm:$0xff]
                  %448 = vst [vmem:[%s412 + $0x88] sm:$0xff] %v447
                $region64: #{_lambda_.15} parent=58 // loop_footer
                  %s410 = sadd.s32 1, %s406
                $region65: #{_lambda_.15} parent=58 // loop_footer_branch
                  %405 = sbr.rel target = $region61
                $region66: #{_lambda_.15} parent=58 // loop_exit
                  _
              $region59: #{_lambda_.15} parent=43 // pred_fallthru
                _
              // Predicated region
              $region67: #{_lambda_.15} parent=43 // pred_check
                _
              $region68: #{_lambda_.15} parent=43 // pred_check_branch
                %450 = sbr.rel target = $region70
              $region69: #{_lambda_.15} parent=43 // pred_region
                _
              $region70: #{_lambda_.15} parent=43 // pred_fallthru
                _
            $region44: #{_lambda_.15} parent=39 // pred_fallthru
              _
            // Predicated region
            $region45: #{_lambda_.15} parent=39 // pred_check
              _
            $region46: #{_lambda_.15} parent=39 // pred_check_branch
              %356 = sbr.rel target = $region48
            $region47: #{_lambda_.15} parent=39 // pred_region
              %s358 = ssub.s32 256, 1
              loop: start=0, step=1, limit=1
              $region49: #{_lambda_.15} parent=47 // loop_pre_header
                _
              $region50: #{_lambda_.15} parent=47 // loop_header
                %s360 = sphi 0, %s364
                %p361 = scmp.ge.s32.totalorder %s360, 1
                %s365 = sphi %s350, %s350
                %s366 = sphi %s347, %s347
              $region51: #{_lambda_.15} parent=47 // loop_header_branch
                %363 = sbr.rel (%p361) target = $region55
              $region52: #{_lambda_.15} parent=47 // loop_body
                %v367 = vld [vmem:[%s365] sm:%s358]
                %368 = vst [vmem:[%s366] sm:%s358] %v367
                %v369 = vld [vmem:[%s365 + $0x10] sm:%s358]
                %370 = vst [vmem:[%s366 + $0x8] sm:%s358] %v369
                %v371 = vld [vmem:[%s365 + $0x20] sm:%s358]
                %372 = vst [vmem:[%s366 + $0x10] sm:%s358] %v371
                %v373 = vld [vmem:[%s365 + $0x30] sm:%s358]
                %374 = vst [vmem:[%s366 + $0x18] sm:%s358] %v373
                %v375 = vld [vmem:[%s365 + $0x40] sm:%s358]
                %376 = vst [vmem:[%s366 + $0x20] sm:%s358] %v375
                %v377 = vld [vmem:[%s365 + $0x50] sm:%s358]
                %378 = vst [vmem:[%s366 + $0x28] sm:%s358] %v377
                %v379 = vld [vmem:[%s365 + $0x60] sm:%s358]
                %380 = vst [vmem:[%s366 + $0x30] sm:%s358] %v379
                %v381 = vld [vmem:[%s365 + $0x70] sm:%s358]
                %382 = vst [vmem:[%s366 + $0x38] sm:%s358] %v381
                %v383 = vld [vmem:[%s365 + $0x80] sm:%s358]
                %384 = vst [vmem:[%s366 + $0x40] sm:%s358] %v383
                %v385 = vld [vmem:[%s365 + $0x90] sm:%s358]
                %386 = vst [vmem:[%s366 + $0x48] sm:%s358] %v385
                %v387 = vld [vmem:[%s365 + $0xa0] sm:%s358]
                %388 = vst [vmem:[%s366 + $0x50] sm:%s358] %v387
                %v389 = vld [vmem:[%s365 + $0xb0] sm:%s358]
                %390 = vst [vmem:[%s366 + $0x58] sm:%s358] %v389
                %v391 = vld [vmem:[%s365 + $0xc0] sm:%s358]
                %392 = vst [vmem:[%s366 + $0x60] sm:%s358] %v391
                %v393 = vld [vmem:[%s365 + $0xd0] sm:%s358]
                %394 = vst [vmem:[%s366 + $0x68] sm:%s358] %v393
                %v395 = vld [vmem:[%s365 + $0xe0] sm:%s358]
                %396 = vst [vmem:[%s366 + $0x70] sm:%s358] %v395
                %v397 = vld [vmem:[%s365 + $0xf0] sm:%s358]
                %398 = vst [vmem:[%s366 + $0x78] sm:%s358] %v397
                %v399 = vld [vmem:[%s365 + $0x100] sm:%s358]
                %400 = vst [vmem:[%s366 + $0x80] sm:%s358] %v399
                %v401 = vld [vmem:[%s365 + $0x110] sm:%s358]
                %402 = vst [vmem:[%s366 + $0x88] sm:%s358] %v401
              $region53: #{_lambda_.15} parent=47 // loop_footer
                %s364 = sadd.s32 1, %s360
              $region54: #{_lambda_.15} parent=47 // loop_footer_branch
                %359 = sbr.rel target = $region50
              $region55: #{_lambda_.15} parent=47 // loop_exit
                _
            $region48: #{_lambda_.15} parent=39 // pred_fallthru
              _
          $region40: #{_lambda_.15} parent=35 // pred_fallthru
            _
          %451 = vnop
        $region36: #{_lambda_.15} parent=31 // pred_fallthru
          _
        // Predicated region
        $region71: #{_lambda_.15} parent=31 // pred_check
          %p452 = pneg %p85
        $region72: #{_lambda_.15} parent=31 // pred_check_branch
          %454 = sbr.rel (%p452) target = $region74
        $region73: #{_lambda_.15} parent=31 // pred_region
          %s455 = smul.u32 2, %s18
          %p456 = scmp.lt.s32.totalorder %s455, 3
          %s457 = scalar_select %p456, %s455, 3
          %s458 = smul.addr %s457, 4
          %s459 = scalar_lea.vmem %s2, %s458
          %s460 = smul.u32 2, %s18
        $region74: #{_lambda_.15} parent=31 // pred_fallthru
          _
        // Predicated region
        $region75: #{_lambda_.15} parent=31 // pred_check
          %p461 = pneg %p111
        $region76: #{_lambda_.15} parent=31 // pred_check_branch
          %463 = sbr.rel (%p461) target = $region78
        $region77: #{_lambda_.15} parent=31 // pred_region
          %s464 = smul.u32 2, %s18
          %p465 = scmp.lt.s32.totalorder %s464, 3
          %s466 = scalar_select %p465, %s464, 3
          %s467 = smul.addr %s466, 4
          %s468 = scalar_lea.vmem %s3, %s467
          %s469 = smul.u32 2, %s18
        $region78: #{_lambda_.15} parent=31 // pred_fallthru
          _
        // Predicated region
        $region79: #{_lambda_.15} parent=31 // pred_check
          %p470 = pneg %p137
        $region80: #{_lambda_.15} parent=31 // pred_check_branch
          %472 = sbr.rel (%p470) target = $region82
        $region81: #{_lambda_.15} parent=31 // pred_region
          %s473 = smul.u32 2, %s18
          %p474 = scmp.lt.s32.totalorder %s473, 3
          %s475 = scalar_select %p474, %s473, 3
          %s476 = smul.addr %s475, 4
          %s477 = scalar_lea.vmem %s4, %s476
          %s478 = smul.u32 2, %s18
        $region82: #{_lambda_.15} parent=31 // pred_fallthru
          _
        // Predicated region
        $region83: #{_lambda_.15} parent=31 // pred_check
          %p479 = pneg %p226
        $region84: #{_lambda_.15} parent=31 // pred_check_branch
          %481 = sbr.rel (%p479) target = $region86
        $region85: #{_lambda_.15} parent=31 // pred_region
          %s482 = smul.u32 2, %s18
          %p483 = scmp.lt.s32.totalorder %s482, 3
          %s484 = scalar_select %p483, %s482, 3
          %s485 = smul.addr %s484, 8
          %s486 = scalar_lea.vmem %s8, %s485
          %s487 = smul.u32 2, %s18
        $region86: #{_lambda_.15} parent=31 // pred_fallthru
          _
        // Predicated region
        $region87: #{_lambda_.15} parent=31 // pred_check
          %p488 = pneg %p252
        $region88: #{_lambda_.15} parent=31 // pred_check_branch
          %490 = sbr.rel (%p488) target = $region90
        $region89: #{_lambda_.15} parent=31 // pred_region
          %s491 = smul.u32 2, %s18
          %p492 = scmp.lt.s32.totalorder %s491, 3
          %s493 = scalar_select %p492, %s491, 3
          %s494 = smul.addr %s493, 8
          %s495 = scalar_lea.vmem %s9, %s494
          %s496 = smul.u32 2, %s18
        $region90: #{_lambda_.15} parent=31 // pred_fallthru
          _
      $region32: #{_lambda_.15} parent=5 // pred_fallthru
        _
      %p497 = scmp.le.s32.totalorder 1, %s18
      %p498 = scmp.lt.s32.totalorder %s18, 3
      %p499 = pnand %p497, %p498
      %p500 = pneg %p499
      // Predicated region
      $region91: #{_lambda_.15} parent=5 // pred_check
        _
      $region92: #{_lambda_.15} parent=5 // pred_check_branch
        %502 = sbr.rel (%p499) target = $region94
      $region93: #{_lambda_.15} parent=5 // pred_region
        %s503 = ssub.s32 %s18, 1
        %s504 = sand.u32 %s31, 1
        %s505 = sand.u32 %s31, 1
        %s506 = smul.addr %s505, 144
        %s507 = scalar_lea.vmem [#allocation2], %s506
        // Predicated region
        $region95: #{_lambda_.15} parent=93 // pred_check
          %p508 = pneg %p44
        $region96: #{_lambda_.15} parent=93 // pred_check_branch
          %510 = sbr.rel (%p508) target = $region98
        $region97: #{_lambda_.15} parent=93 // pred_region
          _
        $region98: #{_lambda_.15} parent=93 // pred_fallthru
          _
        %s511 = sand.u32 %s31, 1
        %s512 = sand.u32 %s31, 1
        %s513 = smul.addr %s512, 144
        %s514 = scalar_lea.vmem [#allocation2], %s513
        %p515 = pneg %p44
        %p516 = pneg %p41
        %p517 = pneg %p65
        %p518 = pneg %p62
        %s519 = smul.u32 2, %s23
        %p520 = scmp.lt.s32.totalorder %s519, 3
        %s521 = scalar_select %p520, %s519, 3
        %s522 = smul.addr %s521, 4
        %s523 = scalar_lea.vmem %s2, %s522
        %p524 = pneg %p91
        %p525 = pneg %p88
        %s526 = smul.u32 2, %s23
        %p527 = scmp.lt.s32.totalorder %s526, 3
        %s528 = scalar_select %p527, %s526, 3
        %s529 = smul.addr %s528, 4
        %s530 = scalar_lea.vmem %s3, %s529
        %p531 = pneg %p117
        %p532 = pneg %p114
        %s533 = smul.u32 2, %s23
        %p534 = scmp.lt.s32.totalorder %s533, 3
        %s535 = scalar_select %p534, %s533, 3
        %s536 = smul.addr %s535, 4
        %s537 = scalar_lea.vmem %s4, %s536
        %p538 = pneg %p143
        %p539 = pneg %p140
        %p540 = pneg %p164
        %p541 = pneg %p161
        %p542 = pneg %p185
        %p543 = pneg %p182
        %p544 = pneg %p206
        %p545 = pneg %p203
        %s546 = smul.u32 2, %s23
        %p547 = scmp.lt.s32.totalorder %s546, 3
        %s548 = scalar_select %p547, %s546, 3
        %s549 = smul.addr %s548, 8
        %s550 = scalar_lea.vmem %s8, %s549
        %p551 = pneg %p232
        %p552 = pneg %p229
        %s553 = smul.u32 2, %s23
        %p554 = scmp.lt.s32.totalorder %s553, 3
        %s555 = scalar_select %p554, %s553, 3
        %s556 = smul.addr %s555, 8
        %s557 = scalar_lea.vmem %s9, %s556
        %p558 = pneg %p258
        %p559 = pneg %p255
        %p560 = pneg %p284
        %p561 = pneg %p281
        %s562 = smul.u32 2, %s23
        %p563 = scmp.lt.s32.totalorder %s562, 3
        %s564 = scalar_select %p563, %s562, 3
        %s565 = smul.addr %s564, 8
        %s566 = scalar_lea.vmem %s10, %s565
        %p567 = pneg %p310
        %p568 = pneg %p307
        %s569 = smul.u32 2, %s23
        %p570 = scmp.lt.s32.totalorder %s569, 3
        %s571 = scalar_select %p570, %s569, 3
        %s572 = smul.addr %s571, 8
        %s573 = scalar_lea.vmem %s11, %s572
        %s574 = smul.u32 2, %s23
        %s575 = smul.u32 2, %s23
        %p576 = scmp.lt.s32.totalorder %s575, 3
        %s577 = scalar_select %p576, %s575, 3
        %s578 = smul.addr %s577, 4
        %s579 = scalar_lea.vmem %s2, %s578
        %s580 = smul.u32 2, %s23
        %s581 = smul.u32 2, %s23
        %p582 = scmp.lt.s32.totalorder %s581, 3
        %s583 = scalar_select %p582, %s581, 3
        %s584 = smul.addr %s583, 4
        %s585 = scalar_lea.vmem %s3, %s584
        %s586 = smul.u32 2, %s23
        %s587 = smul.u32 2, %s23
        %p588 = scmp.lt.s32.totalorder %s587, 3
        %s589 = scalar_select %p588, %s587, 3
        %s590 = smul.addr %s589, 4
        %s591 = scalar_lea.vmem %s4, %s590
        %s592 = smul.u32 2, %s23
        %s593 = smul.u32 2, %s23
        %p594 = scmp.lt.s32.totalorder %s593, 3
        %s595 = scalar_select %p594, %s593, 3
        %s596 = smul.addr %s595, 8
        %s597 = scalar_lea.vmem %s8, %s596
        %s598 = smul.u32 2, %s23
        %s599 = smul.u32 2, %s23
        %p600 = scmp.lt.s32.totalorder %s599, 3
        %s601 = scalar_select %p600, %s599, 3
        %s602 = smul.addr %s601, 8
        %s603 = scalar_lea.vmem %s9, %s602
        %s604 = smul.u32 2, %s23
        %s605 = smul.u32 2, %s23
        %p606 = scmp.lt.s32.totalorder %s605, 3
        %s607 = scalar_select %p606, %s605, 3
        %s608 = smul.addr %s607, 8
        %s609 = scalar_lea.vmem %s10, %s608
        %s610 = smul.u32 2, %s23
        %s611 = smul.u32 2, %s23
        %p612 = scmp.lt.s32.totalorder %s611, 3
        %s613 = scalar_select %p612, %s611, 3
        %s614 = smul.addr %s613, 8
        %s615 = scalar_lea.vmem %s11, %s614
        %s616 = smul.u32 2, %s23
        %v618 = vld [vmem:[%s1] sm:$0xff]
        %v619 = vld [vmem:[%s1 + $0x8] sm:$0xff]
        %v620 = vld [vmem:[%s507] sm:$0xff]
        %v621 = vld [vmem:[%s507 + $0x8] sm:$0xff]
        %v622 = vld [vmem:[%s507 + $0x10] sm:$0xff]
        %v623 = vld [vmem:[%s507 + $0x18] sm:$0xff]
        %v624 = vld [vmem:[%s507 + $0x20] sm:$0xff]
        %v625 = vld [vmem:[%s507 + $0x28] sm:$0xff]
        %v626 = vld [vmem:[%s507 + $0x30] sm:$0xff]
        %v627 = vld [vmem:[%s507 + $0x38] sm:$0xff]
        %v628 = vld [vmem:[%s507 + $0x40] sm:$0xff]
        %v629 = vld [vmem:[%s507 + $0x48] sm:$0xff]
        %v630 = vld [vmem:[%s507 + $0x50] sm:$0xff]
        %v631 = vld [vmem:[%s507 + $0x58] sm:$0xff]
        %v632 = vld [vmem:[%s507 + $0x60] sm:$0xff]
        %v633 = vld [vmem:[%s507 + $0x68] sm:$0xff]
        %v634 = vld [vmem:[%s507 + $0x70] sm:$0xff]
        %v635 = vld [vmem:[%s507 + $0x78] sm:$0xff]
        %v636 = vld [vmem:[%s507 + $0x80] sm:$0xff]
        %v637 = vld [vmem:[%s507 + $0x88] sm:$0xff]
        %v640 = vunpack.c.l.b16 %v618
        %v641 = vunpack.c.h.b16 %v618
        %v642 = vunpack.c.l.b16 %v619
        %v643 = vunpack.c.h.b16 %v619
        %v644 = vpack.c.b16 %v642, %v640
        %v645 = vpack.c.b16 %v643, %v641
        %v665 = vunpack.c.l.b16 %v620
        %v666 = vunpack.c.h.b16 %v620
        %v667 = vunpack.c.l.b16 %v621
        %v668 = vunpack.c.h.b16 %v621
        %v669 = vunpack.c.l.b16 %v622
        %v670 = vunpack.c.h.b16 %v622
        %v671 = vunpack.c.l.b16 %v623
        %v672 = vunpack.c.h.b16 %v623
        %v673 = vunpack.c.l.b16 %v624
        %v674 = vunpack.c.h.b16 %v624
        %v675 = vunpack.c.l.b16 %v625
        %v676 = vunpack.c.h.b16 %v625
        %v677 = vunpack.c.l.b16 %v626
        %v678 = vunpack.c.h.b16 %v626
        %v679 = vunpack.c.l.b16 %v627
        %v680 = vunpack.c.h.b16 %v627
        %v681 = vunpack.c.l.b16 %v628
        %v682 = vunpack.c.h.b16 %v628
        %v683 = vunpack.c.l.b16 %v629
        %v684 = vunpack.c.h.b16 %v629
        %v685 = vunpack.c.l.b16 %v630
        %v686 = vunpack.c.h.b16 %v630
        %v687 = vunpack.c.l.b16 %v631
        %v688 = vunpack.c.h.b16 %v631
        %v689 = vunpack.c.l.b16 %v632
        %v690 = vunpack.c.h.b16 %v632
        %v691 = vunpack.c.l.b16 %v633
        %v692 = vunpack.c.h.b16 %v633
        %v693 = vunpack.c.l.b16 %v634
        %v694 = vunpack.c.h.b16 %v634
        %v695 = vunpack.c.l.b16 %v635
        %v696 = vunpack.c.h.b16 %v635
        %v697 = vunpack.c.l.b16 %v636
        %v698 = vunpack.c.h.b16 %v636
        %v699 = vunpack.c.l.b16 %v637
        %v700 = vunpack.c.h.b16 %v637
        %v701 = vpack.c.b16 %v667, %v665
        %v702 = vpack.c.b16 %v668, %v666
        %v703 = vpack.c.b16 %v671, %v669
        %v704 = vpack.c.b16 %v672, %v670
        %v705 = vpack.c.b16 %v675, %v673
        %v706 = vpack.c.b16 %v676, %v674
        %v707 = vpack.c.b16 %v679, %v677
        %v708 = vpack.c.b16 %v680, %v678
        %v709 = vpack.c.b16 %v683, %v681
        %v710 = vpack.c.b16 %v684, %v682
        %v711 = vpack.c.b16 %v687, %v685
        %v712 = vpack.c.b16 %v688, %v686
        %v713 = vpack.c.b16 %v691, %v689
        %v714 = vpack.c.b16 %v692, %v690
        %v715 = vpack.c.b16 %v695, %v693
        %v716 = vpack.c.b16 %v696, %v694
        %v717 = vpack.c.b16 %v699, %v697
        %v718 = vpack.c.b16 %v700, %v698
        %vm737 = vcmask 130048
        %v739 = vsel %vm737, %v645, 0
        %741 = vmatpush.bf16.msra.mxu0 %v715
        %742 = vmatpush.bf16.msra.mxu0 %v713
        %743 = vmatpush.bf16.msra.mxu0 %v711
        %744 = vmatpush.bf16.msra.mxu0 %v709
        %745 = vmatpush.bf16.msra.mxu0 %v707
        %746 = vmatpush.bf16.msra.mxu0 %v705
        %747 = vmatpush.bf16.msra.mxu0 %v703
        %748 = vmatpush.bf16.msra.mxu0 %v701
        %749 = vmatmul.bf16.gmra.mxu0 %v644
        %v750 = vpop.f32.mrf.mxu0
        %v751 = vadd.f32 0.0, %v750
        %v752 = vpop.f32.mrf.mxu0
        %v753 = vadd.f32 0.0, %v752
        %754 = vdwg.mxu0
        %755 = vmatpush.bf16.msra.mxu0 0
        %756 = vmatpush.bf16.msra.mxu0 0
        %757 = vmatpush.bf16.msra.mxu0 0
        %758 = vmatpush.bf16.msra.mxu0 0
        %759 = vmatpush.bf16.msra.mxu0 0
        %760 = vmatpush.bf16.msra.mxu0 0
        %761 = vmatpush.bf16.msra.mxu0 0
        %762 = vmatpush.bf16.msra.mxu0 %v717
        %763 = vmatmul.bf16.gmra.mxu0 %v739
        %v764 = vpop.f32.mrf.mxu0
        %v765 = vadd.f32 %v751, %v764
        %v766 = vpop.f32.mrf.mxu0
        %v767 = vadd.f32 %v753, %v766
        %768 = vdwg.mxu0
        %769 = vmatpush.bf16.msra.mxu0 %v716
        %770 = vmatpush.bf16.msra.mxu0 %v714
        %771 = vmatpush.bf16.msra.mxu0 %v712
        %772 = vmatpush.bf16.msra.mxu0 %v710
        %773 = vmatpush.bf16.msra.mxu0 %v708
        %774 = vmatpush.bf16.msra.mxu0 %v706
        %775 = vmatpush.bf16.msra.mxu0 %v704
        %776 = vmatpush.bf16.msra.mxu0 %v702
        %777 = vmatmul.bf16.gmra.mxu0 %v644
        %v778 = vpop.f32.mrf.mxu0
        %v779 = vadd.f32 0.0, %v778
        %v780 = vpop.f32.mrf.mxu0
        %v781 = vadd.f32 0.0, %v780
        %782 = vdwg.mxu0
        %783 = vmatpush.bf16.msra.mxu0 0
        %784 = vmatpush.bf16.msra.mxu0 0
        %785 = vmatpush.bf16.msra.mxu0 0
        %786 = vmatpush.bf16.msra.mxu0 0
        %787 = vmatpush.bf16.msra.mxu0 0
        %788 = vmatpush.bf16.msra.mxu0 0
        %789 = vmatpush.bf16.msra.mxu0 0
        %790 = vmatpush.bf16.msra.mxu0 %v718
        %791 = vmatmul.bf16.gmra.mxu0 %v739
        %v792 = vpop.f32.mrf.mxu0
        %v793 = vadd.f32 %v779, %v792
        %v794 = vpop.f32.mrf.mxu0
        %v795 = vadd.f32 %v781, %v794
        %796 = vdwg.mxu0
        %v797 = vld [vmem:[%s579] sm:$0xff]
        %v798 = vld [vmem:[%s585] sm:$0xff]
        %v799 = vadd.f32 %v797, %v798
        %v800 = vld [vmem:[%s591] sm:$0xff]
        %v801 = vadd.f32 %v799, %v800
        %v802 = vld [vmem:[%s5] sm:$0xf]
        %804 = vst [vmem:[#allocation1] ss:$2 sm:$0xff] %v801
        %v805 = vld.sshfl [vmem:[#allocation1] sm:$0xff pattern:$0x75316420]
        %v806 = vld.sshfl [vmem:[#allocation1 + $0x8] sm:$0xff pattern:$0x75316420]
        %v809 = vpack.c.bf16 %v805, %v805
        %v810 = vpack.c.bf16 %v806, %v806
        %vm811 = vcmask 31744
        %v813 = vsel %vm811, %v802, 0
        %vm815 = vcmask 1041408
        %v817 = vsel %vm815, %v809, 0
        %v820 = vsel %vm815, %v810, 0
        %822 = vmatpush.bf16.msra.mxu0 0
        %823 = vmatpush.bf16.msra.mxu0 0
        %824 = vmatpush.bf16.msra.mxu0 0
        %825 = vmatpush.bf16.msra.mxu0 0
        %826 = vmatpush.bf16.msra.mxu0 0
        %827 = vmatpush.bf16.msra.mxu0 0
        %828 = vmatpush.bf16.msra.mxu0 0
        %829 = vmatpush.bf16.msra.mxu0 %v817
        %830 = vmatmul.bf16.gmra.mxu0 %v813
        %v831 = vpop.f32.mrf.mxu0
        %v832 = vadd.f32 0.0, %v831
        %v833 = vpop.f32.mrf.mxu0
        %834 = vdwg.mxu0
        %835 = vmatpush.bf16.msra.mxu0 0
        %836 = vmatpush.bf16.msra.mxu0 0
        %837 = vmatpush.bf16.msra.mxu0 0
        %838 = vmatpush.bf16.msra.mxu0 0
        %839 = vmatpush.bf16.msra.mxu0 0
        %840 = vmatpush.bf16.msra.mxu0 0
        %841 = vmatpush.bf16.msra.mxu0 0
        %842 = vmatpush.bf16.msra.mxu0 %v820
        %843 = vmatmul.bf16.gmra.mxu0 %v813
        %v844 = vpop.f32.mrf.mxu0
        %v845 = vadd.f32 0.0, %v844
        %v846 = vpop.f32.mrf.mxu0
        %847 = vdwg.mxu0
        %v848 = vld [vmem:[%s6] sm:$0xff]
        %850 = vset.pattern.permute.xlu0 0
        %851 = vperm.xlu0 %850, %v848
        %v852 = vpop.permute.xlu0 %851
        %v854 = vadd.f32 %v765, %v852
        %v855 = vadd.f32 %v793, %v852
        %v856 = vadd.f32 %v767, %v832
        %v857 = vadd.f32 %v795, %v845
        %v858 = vld [vmem:[%s7] sm:$0xff]
        %860 = vset.pattern.permute.xlu0 0
        %861 = vperm.xlu0 %860, %v858
        %v862 = vpop.permute.xlu0 %861
        %v864 = vadd.f32 %v856, %v862
        %v865 = vadd.f32 %v857, %v862
        %v866 = vld [vmem:[%s597] sm:$0xff]
        %v867 = vld [vmem:[%s597 + $0x8] sm:$0xff]
        %v868 = vadd.f32 %v854, %v866
        %v869 = vadd.f32 %v855, %v867
        %v870 = vld [vmem:[%s603] sm:$0xff]
        %v871 = vld [vmem:[%s603 + $0x8] sm:$0xff]
        %v872 = vadd.f32 %v864, %v870
        %v873 = vadd.f32 %v865, %v871
        %v874 = vmax.f32 %v868, 0.0
        %v875 = vmax.f32 %v869, 0.0
        %876 = vst [vmem:[%s609] sm:$0xff] %v874
        %877 = vst [vmem:[%s609 + $0x8] sm:$0xff] %v875
        %v878 = vmax.f32 %v872, 0.0
        %v879 = vmax.f32 %v873, 0.0
        %880 = vst [vmem:[%s615] sm:$0xff] %v878
        %881 = vst [vmem:[%s615 + $0x8] sm:$0xff] %v879
        %s882 = smul.u32 2, %s23
        %p883 = scmp.lt.s32.totalorder %s882, 3
        %s884 = scalar_select %p883, %s882, 3
        %s885 = smul.addr %s884, 8
        %s886 = scalar_lea.vmem %s10, %s885
        %s887 = smul.u32 2, %s23
        %p888 = scmp.lt.s32.totalorder %s887, 3
        %s889 = scalar_select %p888, %s887, 3
        %s890 = smul.addr %s889, 8
        %s891 = scalar_lea.vmem %s11, %s890
        // Predicated region
        $region99: #{_lambda_.15} parent=93 // pred_check
          %p892 = pneg %p281
        $region100: #{_lambda_.15} parent=93 // pred_check_branch
          %894 = sbr.rel (%p892) target = $region102
        $region101: #{_lambda_.15} parent=93 // pred_region
          %s895 = smul.u32 2, %s23
        $region102: #{_lambda_.15} parent=93 // pred_fallthru
          _
        // Predicated region
        $region103: #{_lambda_.15} parent=93 // pred_check
          %p896 = pneg %p307
        $region104: #{_lambda_.15} parent=93 // pred_check_branch
          %898 = sbr.rel (%p896) target = $region106
        $region105: #{_lambda_.15} parent=93 // pred_region
          %s899 = smul.u32 2, %s23
        $region106: #{_lambda_.15} parent=93 // pred_fallthru
          _
      $region94: #{_lambda_.15} parent=5 // pred_fallthru
        _
      %p900 = scmp.le.s32.totalorder 2, %s18
      // Predicated region
      $region107: #{_lambda_.15} parent=5 // pred_check
        %p901 = pneg %p900
      $region108: #{_lambda_.15} parent=5 // pred_check_branch
        %903 = sbr.rel (%p901) target = $region110
      $region109: #{_lambda_.15} parent=5 // pred_region
        %s904 = ssub.s32 %s18, 2
        // Predicated region
        $region111: #{_lambda_.15} parent=109 // pred_check
          %p905 = pneg %p287
        $region112: #{_lambda_.15} parent=109 // pred_check_branch
          %907 = sbr.rel (%p905) target = $region114
        $region113: #{_lambda_.15} parent=109 // pred_region
          %s908 = smul.u32 2, %s24
          %p909 = scmp.lt.s32.totalorder %s908, 3
          %s910 = scalar_select %p909, %s908, 3
          %s911 = smul.addr %s910, 8
          %s912 = scalar_lea.vmem %s10, %s911
        $region114: #{_lambda_.15} parent=109 // pred_fallthru
          _
        // Predicated region
        $region115: #{_lambda_.15} parent=109 // pred_check
          %p913 = pneg %p313
        $region116: #{_lambda_.15} parent=109 // pred_check_branch
          %915 = sbr.rel (%p913) target = $region118
        $region117: #{_lambda_.15} parent=109 // pred_region
          %s916 = smul.u32 2, %s24
          %p917 = scmp.lt.s32.totalorder %s916, 3
          %s918 = scalar_select %p917, %s916, 3
          %s919 = smul.addr %s918, 8
          %s920 = scalar_lea.vmem %s11, %s919
        $region118: #{_lambda_.15} parent=109 // pred_fallthru
          _
      $region110: #{_lambda_.15} parent=5 // pred_fallthru
        _
    $region6: #{_lambda_.15} parent=1 // loop_footer
      %s22 = sadd.s32 1, %s18
    $region7: #{_lambda_.15} parent=1 // loop_footer_branch
      %17 = sbr.rel target = $region3
    $region8: #{_lambda_.15} parent=1 // loop_exit
      _

</llo_original>
